<compile_context>
chip_gen: v7x
topology: tpu7x:2x2x1
jax: 0.10.0
libtpu: 0.0.40
codegen_flags: <defaults>
</compile_context>

<pallas_src>
import jax
import jax.numpy as jnp
from jax.experimental import pallas as pl
from jax.experimental.pallas import tpu as pltpu


def lstm_kernel(x_ref, len_ref, h0_ref, c0_ref, wih_ref, whh_ref, b_ref,
                wout_ref, bout_ref, out_ref):
    """LSTM recurrence + output head + log_softmax for one batch tile.

    x_ref:    (S, Bt, E)  f32   embedded tokens (time-major)
    len_ref:  (Bt, 1)     i32   sequence lengths
    h0/c0:    (Bt, H)     f32   initial hidden / cell state
    wih_ref:  (4, E, H)   bf16  input->gate weights, gate order i, f, g, o
    whh_ref:  (4, H, H)   bf16  hidden->gate weights
    b_ref:    (4, 1, H)   f32   combined bias (b_ih + b_hh)
    wout_ref: (H, Op)     bf16  output projection, lane-padded to Op=128
    bout_ref: (1, Op)     f32   output bias (-1e30 in the padded lanes)
    out_ref:  (Bt, Op)    f32   log-probabilities (lane-dense store)
    """
    S, Bt, E = x_ref.shape
    H = h0_ref.shape[1]

    # ---- Hoisted input projection (no sequential dependence) --------------
    # Collapsing (S, Bt, E) -> (S*Bt, E) keeps the (sublane, lane) layout
    # identical (Bt == one sublane tile), so the reshape is layout-free.
    x2d = x_ref[...].reshape(S * Bt, E).astype(jnp.bfloat16)
    xg = [
        jnp.dot(x2d, wih_ref[k], preferred_element_type=jnp.float32) + b_ref[k]
        for k in range(4)
    ]  # 4 x (S*Bt, H) f32, gate order i, f, g, o

    whh = [whh_ref[k] for k in range(4)]   # 4 x (H, H) bf16, loaded once
    lens = len_ref[...]                    # (Bt, 1) int32, loaded once

    h = h0_ref[...]                        # (Bt, H) f32
    c = c0_ref[...]                        # (Bt, H) f32

    # ---- Serial recurrence, fully unrolled (S is small & static) ----------
    for t in range(S):
        hb = h.astype(jnp.bfloat16)
        lo, hi = t * Bt, (t + 1) * Bt      # sublane-aligned static slice
        i_g = jax.nn.sigmoid(
            xg[0][lo:hi] + jnp.dot(hb, whh[0], preferred_element_type=jnp.float32))
        f_g = jax.nn.sigmoid(
            xg[1][lo:hi] + jnp.dot(hb, whh[1], preferred_element_type=jnp.float32))
        g_g = jnp.tanh(
            xg[2][lo:hi] + jnp.dot(hb, whh[2], preferred_element_type=jnp.float32))
        o_g = jax.nn.sigmoid(
            xg[3][lo:hi] + jnp.dot(hb, whh[3], preferred_element_type=jnp.float32))

        c_new = f_g * c + i_g * g_g
        h_new = o_g * jnp.tanh(c_new)

        # pack_padded_sequence semantics: freeze h/c once t >= lengths[b],
        # so the final h is the state at each sequence's own last valid step.
        live = lens > t                    # (Bt, 1) bool
        h = jnp.where(live, h_new, h)
        c = jnp.where(live, c_new, c)

    # Dropout(p=0.2) is identity at inference time.
    # TODO(synk): training-mode dropout (stochastic mask) not implemented.

    # ---- Output projection + log_softmax (lane-dense, Op = 128) -----------
    logits = (jnp.dot(h.astype(jnp.bfloat16), wout_ref[...],
                      preferred_element_type=jnp.float32) + bout_ref[...])
    m = jnp.max(logits, axis=1, keepdims=True)
    lse = m + jnp.log(jnp.sum(jnp.exp(logits - m), axis=1, keepdims=True))
    out_ref[...] = logits - lse


_B_TILE = 8      # one f32 sublane group per batch tile
_O_PAD = 128     # lane-dense output width


@jax.jit
def basic_lstm_forward(tokens, lengths, h0, c0, params):
    """tokens: (S, B) int32, lengths: (B,) int32 (descending, as required by
    pack_padded_sequence), h0/c0: (B, H) f32. Returns (B, output_size) f32."""
    S, B = tokens.shape
    E = params["embedding"].shape[1]
    H = params["w_hh"].shape[-1]
    O = params["w_out"].shape[1]

    B_pad = pl.cdiv(B, _B_TILE) * _B_TILE
    O_pad = pl.cdiv(O, _O_PAD) * _O_PAD

    # Embedding lookup (gather) kept as glue in plain JAX.
    emb = jnp.take(params["embedding"], tokens, axis=0)          # (S, B, E)
    emb = jnp.pad(emb, ((0, 0), (0, B_pad - B), (0, 0)))
    h0p = jnp.pad(h0, ((0, B_pad - B), (0, 0)))
    c0p = jnp.pad(c0, ((0, B_pad - B), (0, 0)))
    len2d = jnp.pad(lengths.astype(jnp.int32),
                    (0, B_pad - B)).reshape(B_pad, 1)

    # bf16 MXU operands (accumulation stays f32 inside the kernel).
    w_ih = params["w_ih"].astype(jnp.bfloat16)                   # (4, E, H)
    w_hh = params["w_hh"].astype(jnp.bfloat16)                   # (4, H, H)
    b = params["b"]                                              # (4, 1, H) f32

    # Lane-dense output head: pad columns to 128; padded columns get a -1e30
    # bias so they contribute nothing to log_softmax and are sliced off below.
    w_out = jnp.pad(params["w_out"],
                    ((0, 0), (0, O_pad - O))).astype(jnp.bfloat16)
    b_out = jnp.pad(params["b_out"], ((0, 0), (0, O_pad - O)))
    b_out = jnp.where(jnp.arange(O_pad)[None, :] < O, b_out, -1e30)

    grid = (B_pad // _B_TILE,)   # independent batch tiles -> "parallel"

    out = pl.pallas_call(
        lstm_kernel,
        out_shape=jax.ShapeDtypeStruct((B_pad, O_pad), jnp.float32),
        grid=grid,
        in_specs=[
            pl.BlockSpec((S, _B_TILE, E), lambda i: (0, i, 0)),   # emb
            pl.BlockSpec((_B_TILE, 1), lambda i: (i, 0)),         # lengths
            pl.BlockSpec((_B_TILE, H), lambda i: (i, 0)),         # h0
            pl.BlockSpec((_B_TILE, H), lambda i: (i, 0)),         # c0
            pl.BlockSpec((4, E, H), lambda i: (0, 0, 0)),         # W_ih
            pl.BlockSpec((4, H, H), lambda i: (0, 0, 0)),         # W_hh
            pl.BlockSpec((4, 1, H), lambda i: (0, 0, 0)),         # b
            pl.BlockSpec((H, O_pad), lambda i: (0, 0)),           # W_out
            pl.BlockSpec((1, O_pad), lambda i: (0, 0)),           # b_out
        ],
        out_specs=pl.BlockSpec((_B_TILE, O_pad), lambda i: (i, 0)),
        compiler_params=pltpu.CompilerParams(
            dimension_semantics=("parallel",)),
    )(emb, len2d, h0p, c0p, w_ih, w_hh, b, w_out, b_out)

    return out[:B, :O]


def init_params(key, vocab_size, embedding_size, hidden_size, output_size):
    """Weights stored directly in kernel layout:
       w_ih (4, E, H), w_hh (4, H, H), b (4, 1, H), w_out (H, O), b_out (1, O)
       — gate order i, f, g, o (i.e. PyTorch weight_ih_l0 reshaped (4,H,E) and
       transposed to (4,E,H))."""
    ks = jax.random.split(key, 7)
    scale = 1.0 / jnp.sqrt(hidden_size)
    params = {
        # nn.Embedding: N(0, 1)
        "embedding": jax.random.normal(
            ks[0], (vocab_size, embedding_size), jnp.float32),
        # nn.LSTM weights: U(-1/sqrt(H), 1/sqrt(H))
        "w_ih": jax.random.uniform(
            ks[1], (4, embedding_size, hidden_size), jnp.float32,
            -scale, scale),
        "w_hh": jax.random.uniform(
            ks[2], (4, hidden_size, hidden_size), jnp.float32,
            -scale, scale),
        # combined bias b_ih + b_hh
        "b": jax.random.uniform(
            ks[3], (4, 1, hidden_size), jnp.float32, -2 * scale, 2 * scale),
        # nn.Linear(hidden_size, output_size)
        "w_out": jax.random.uniform(
            ks[4], (hidden_size, output_size), jnp.float32, -scale, scale),
        "b_out": jax.random.uniform(
            ks[5], (1, output_size), jnp.float32, -scale, scale),
    }
    return params, ks[6]


if __name__ == "__main__":
    vocab_size = 50
    embedding_size = 128
    hidden_size = 32
    output_size = 10
    seq_len = 8
    batch = 4

    key = jax.random.PRNGKey(0)
    params, key = init_params(
        key, vocab_size, embedding_size, hidden_size, output_size)

    k_tok, k_h, k_c = jax.random.split(key, 3)
    tokens = jax.random.randint(
        k_tok, (seq_len, batch), 0, vocab_size, dtype=jnp.int32)
    # pack_padded_sequence default requires sorted (descending) lengths.
    lengths = jnp.array([8, 7, 5, 3], dtype=jnp.int32)
    # init_hidden uses torch.randn; deterministic randn from the JAX key here.
    h0 = jax.random.normal(k_h, (batch, hidden_size), jnp.float32)
    c0 = jax.random.normal(k_c, (batch, hidden_size), jnp.float32)

    out = basic_lstm_forward(tokens, lengths, h0, c0, params)
    out = jax.block_until_ready(out)

    assert out.shape == (batch, output_size)
    assert bool(jnp.all(jnp.isfinite(out)))
    # log_softmax rows should sum (in prob space) to 1
    assert bool(jnp.allclose(jnp.sum(jnp.exp(out), axis=1), 1.0, atol=1e-4))
    print("KERNEL_OK")
</pallas_src>

<mosaic_0001>
module attributes {stable_mosaic.version = 11 : i64} {
  func.func @lstm_kernel(%arg0: i32, %arg1: memref<8x8x128xf32, #tpu.memory_space<vmem>>, %arg2: memref<8x1xi32, #tpu.memory_space<vmem>>, %arg3: memref<8x32xf32, #tpu.memory_space<vmem>>, %arg4: memref<8x32xf32, #tpu.memory_space<vmem>>, %arg5: memref<4x128x32xbf16, #tpu.memory_space<vmem>>, %arg6: memref<4x32x32xbf16, #tpu.memory_space<vmem>>, %arg7: memref<4x1x32xf32, #tpu.memory_space<vmem>>, %arg8: memref<32x128xbf16, #tpu.memory_space<vmem>>, %arg9: memref<1x128xf32, #tpu.memory_space<vmem>>, %arg10: memref<8x128xf32, #tpu.memory_space<vmem>>) attributes {dimension_semantics = [#tpu.dimension_semantics<parallel>], iteration_bounds = array<i64: 1>, scalar_prefetch = 0 : i64, scratch_operands = 0 : i64, tpu.core_type = #tpu.core_type<tc>, window_params = [{transform_indices = @transform_0, window_bounds = array<i64: 8, 8, 128>}, {transform_indices = @transform_1, window_bounds = array<i64: 8, 1>}, {transform_indices = @transform_2, window_bounds = array<i64: 8, 32>}, {transform_indices = @transform_3, window_bounds = array<i64: 8, 32>}, {pipeline_mode = #tpu.pipeline_mode<synchronous>, transform_indices = @transform_4, window_bounds = array<i64: 4, 128, 32>}, {pipeline_mode = #tpu.pipeline_mode<synchronous>, transform_indices = @transform_5, window_bounds = array<i64: 4, 32, 32>}, {pipeline_mode = #tpu.pipeline_mode<synchronous>, transform_indices = @transform_6, window_bounds = array<i64: 4, 1, 32>}, {pipeline_mode = #tpu.pipeline_mode<synchronous>, transform_indices = @transform_7, window_bounds = array<i64: 32, 128>}, {pipeline_mode = #tpu.pipeline_mode<synchronous>, transform_indices = @transform_8, window_bounds = array<i64: 1, 128>}, {transform_indices = @transform_9, window_bounds = array<i64: 8, 128>}]} {
    %c0 = arith.constant 0 : index
    %c0_0 = arith.constant 0 : index
    %c0_1 = arith.constant 0 : index
    %0 = vector.load %arg1[%c0, %c0_0, %c0_1] : memref<8x8x128xf32, #tpu.memory_space<vmem>>, vector<8x8x128xf32>
    %1 = vector.shape_cast %0 : vector<8x8x128xf32> to vector<64x128xf32>
    %2 = arith.truncf %1 : vector<64x128xf32> to vector<64x128xbf16>
    %c0_2 = arith.constant 0 : index
    %c0_3 = arith.constant 0 : index
    %c0_4 = arith.constant 0 : index
    %3 = vector.load %arg5[%c0_2, %c0_3, %c0_4] : memref<4x128x32xbf16, #tpu.memory_space<vmem>>, vector<1x128x32xbf16>
    %4 = vector.shape_cast %3 : vector<1x128x32xbf16> to vector<128x32xbf16>
    %cst = arith.constant dense<0.000000e+00> : vector<64x32xf32>
    %5 = tpu.matmul %2, %4, %cst {dimension_numbers = #tpu.dot_dimension_numbers<[1], [0], [0], [1], [0, 0, 1, 1], [], []>} : vector<64x128xbf16>, vector<128x32xbf16>, vector<64x32xf32> -> vector<64x32xf32>
    %c0_5 = arith.constant 0 : index
    %c0_6 = arith.constant 0 : index
    %c0_7 = arith.constant 0 : index
    %6 = vector.load %arg7[%c0_5, %c0_6, %c0_7] : memref<4x1x32xf32, #tpu.memory_space<vmem>>, vector<1x1x32xf32>
    %7 = vector.shape_cast %6 : vector<1x1x32xf32> to vector<1x32xf32>
    %8 = vector.broadcast %7 : vector<1x32xf32> to vector<64x32xf32>
    %9 = arith.addf %5, %8 : vector<64x32xf32>
    %c1 = arith.constant 1 : index
    %c0_8 = arith.constant 0 : index
    %c0_9 = arith.constant 0 : index
    %10 = vector.load %arg5[%c1, %c0_8, %c0_9] : memref<4x128x32xbf16, #tpu.memory_space<vmem>>, vector<1x128x32xbf16>
    %11 = vector.shape_cast %10 : vector<1x128x32xbf16> to vector<128x32xbf16>
    %cst_10 = arith.constant dense<0.000000e+00> : vector<64x32xf32>
    %12 = tpu.matmul %2, %11, %cst_10 {dimension_numbers = #tpu.dot_dimension_numbers<[1], [0], [0], [1], [0, 0, 1, 1], [], []>} : vector<64x128xbf16>, vector<128x32xbf16>, vector<64x32xf32> -> vector<64x32xf32>
    %c1_11 = arith.constant 1 : index
    %c0_12 = arith.constant 0 : index
    %c0_13 = arith.constant 0 : index
    %13 = vector.load %arg7[%c1_11, %c0_12, %c0_13] : memref<4x1x32xf32, #tpu.memory_space<vmem>>, vector<1x1x32xf32>
    %14 = vector.shape_cast %13 : vector<1x1x32xf32> to vector<1x32xf32>
    %15 = vector.broadcast %14 : vector<1x32xf32> to vector<64x32xf32>
    %16 = arith.addf %12, %15 : vector<64x32xf32>
    %c2 = arith.constant 2 : index
    %c0_14 = arith.constant 0 : index
    %c0_15 = arith.constant 0 : index
    %17 = vector.load %arg5[%c2, %c0_14, %c0_15] : memref<4x128x32xbf16, #tpu.memory_space<vmem>>, vector<1x128x32xbf16>
    %18 = vector.shape_cast %17 : vector<1x128x32xbf16> to vector<128x32xbf16>
    %cst_16 = arith.constant dense<0.000000e+00> : vector<64x32xf32>
    %19 = tpu.matmul %2, %18, %cst_16 {dimension_numbers = #tpu.dot_dimension_numbers<[1], [0], [0], [1], [0, 0, 1, 1], [], []>} : vector<64x128xbf16>, vector<128x32xbf16>, vector<64x32xf32> -> vector<64x32xf32>
    %c2_17 = arith.constant 2 : index
    %c0_18 = arith.constant 0 : index
    %c0_19 = arith.constant 0 : index
    %20 = vector.load %arg7[%c2_17, %c0_18, %c0_19] : memref<4x1x32xf32, #tpu.memory_space<vmem>>, vector<1x1x32xf32>
    %21 = vector.shape_cast %20 : vector<1x1x32xf32> to vector<1x32xf32>
    %22 = vector.broadcast %21 : vector<1x32xf32> to vector<64x32xf32>
    %23 = arith.addf %19, %22 : vector<64x32xf32>
    %c3 = arith.constant 3 : index
    %c0_20 = arith.constant 0 : index
    %c0_21 = arith.constant 0 : index
    %24 = vector.load %arg5[%c3, %c0_20, %c0_21] : memref<4x128x32xbf16, #tpu.memory_space<vmem>>, vector<1x128x32xbf16>
    %25 = vector.shape_cast %24 : vector<1x128x32xbf16> to vector<128x32xbf16>
    %cst_22 = arith.constant dense<0.000000e+00> : vector<64x32xf32>
    %26 = tpu.matmul %2, %25, %cst_22 {dimension_numbers = #tpu.dot_dimension_numbers<[1], [0], [0], [1], [0, 0, 1, 1], [], []>} : vector<64x128xbf16>, vector<128x32xbf16>, vector<64x32xf32> -> vector<64x32xf32>
    %c3_23 = arith.constant 3 : index
    %c0_24 = arith.constant 0 : index
    %c0_25 = arith.constant 0 : index
    %27 = vector.load %arg7[%c3_23, %c0_24, %c0_25] : memref<4x1x32xf32, #tpu.memory_space<vmem>>, vector<1x1x32xf32>
    %28 = vector.shape_cast %27 : vector<1x1x32xf32> to vector<1x32xf32>
    %29 = vector.broadcast %28 : vector<1x32xf32> to vector<64x32xf32>
    %30 = arith.addf %26, %29 : vector<64x32xf32>
    %c0_26 = arith.constant 0 : index
    %c0_27 = arith.constant 0 : index
    %c0_28 = arith.constant 0 : index
    %31 = vector.load %arg6[%c0_26, %c0_27, %c0_28] : memref<4x32x32xbf16, #tpu.memory_space<vmem>>, vector<1x32x32xbf16>
    %32 = vector.shape_cast %31 : vector<1x32x32xbf16> to vector<32x32xbf16>
    %c1_29 = arith.constant 1 : index
    %c0_30 = arith.constant 0 : index
    %c0_31 = arith.constant 0 : index
    %33 = vector.load %arg6[%c1_29, %c0_30, %c0_31] : memref<4x32x32xbf16, #tpu.memory_space<vmem>>, vector<1x32x32xbf16>
    %34 = vector.shape_cast %33 : vector<1x32x32xbf16> to vector<32x32xbf16>
    %c2_32 = arith.constant 2 : index
    %c0_33 = arith.constant 0 : index
    %c0_34 = arith.constant 0 : index
    %35 = vector.load %arg6[%c2_32, %c0_33, %c0_34] : memref<4x32x32xbf16, #tpu.memory_space<vmem>>, vector<1x32x32xbf16>
    %36 = vector.shape_cast %35 : vector<1x32x32xbf16> to vector<32x32xbf16>
    %c3_35 = arith.constant 3 : index
    %c0_36 = arith.constant 0 : index
    %c0_37 = arith.constant 0 : index
    %37 = vector.load %arg6[%c3_35, %c0_36, %c0_37] : memref<4x32x32xbf16, #tpu.memory_space<vmem>>, vector<1x32x32xbf16>
    %38 = vector.shape_cast %37 : vector<1x32x32xbf16> to vector<32x32xbf16>
    %c0_38 = arith.constant 0 : index
    %c0_39 = arith.constant 0 : index
    %39 = vector.load %arg2[%c0_38, %c0_39] : memref<8x1xi32, #tpu.memory_space<vmem>>, vector<8x1xi32>
    %c0_40 = arith.constant 0 : index
    %c0_41 = arith.constant 0 : index
    %40 = vector.load %arg3[%c0_40, %c0_41] : memref<8x32xf32, #tpu.memory_space<vmem>>, vector<8x32xf32>
    %c0_42 = arith.constant 0 : index
    %c0_43 = arith.constant 0 : index
    %41 = vector.load %arg4[%c0_42, %c0_43] : memref<8x32xf32, #tpu.memory_space<vmem>>, vector<8x32xf32>
    %42 = arith.truncf %40 : vector<8x32xf32> to vector<8x32xbf16>
    %43 = vector.extract_strided_slice %9 {offsets = [0, 0], sizes = [8, 32], strides = [1, 1]} : vector<64x32xf32> to vector<8x32xf32>
    %cst_44 = arith.constant dense<0.000000e+00> : vector<8x32xf32>
    %44 = tpu.matmul %42, %32, %cst_44 {dimension_numbers = #tpu.dot_dimension_numbers<[1], [0], [0], [1], [0, 0, 1, 1], [], []>} : vector<8x32xbf16>, vector<32x32xbf16>, vector<8x32xf32> -> vector<8x32xf32>
    %45 = arith.addf %43, %44 : vector<8x32xf32>
    %46 = arith.negf %45 : vector<8x32xf32>
    %47 = math.exp %46 : vector<8x32xf32>
    %cst_45 = arith.constant 1.000000e+00 : f32
    %48 = vector.broadcast %cst_45 : f32 to vector<8x32xf32>
    %49 = arith.addf %48, %47 : vector<8x32xf32>
    %50 = arith.divf %48, %49 : vector<8x32xf32>
    %51 = vector.extract_strided_slice %16 {offsets = [0, 0], sizes = [8, 32], strides = [1, 1]} : vector<64x32xf32> to vector<8x32xf32>
    %cst_46 = arith.constant dense<0.000000e+00> : vector<8x32xf32>
    %52 = tpu.matmul %42, %34, %cst_46 {dimension_numbers = #tpu.dot_dimension_numbers<[1], [0], [0], [1], [0, 0, 1, 1], [], []>} : vector<8x32xbf16>, vector<32x32xbf16>, vector<8x32xf32> -> vector<8x32xf32>
    %53 = arith.addf %51, %52 : vector<8x32xf32>
    %54 = arith.negf %53 : vector<8x32xf32>
    %55 = math.exp %54 : vector<8x32xf32>
    %cst_47 = arith.constant 1.000000e+00 : f32
    %56 = vector.broadcast %cst_47 : f32 to vector<8x32xf32>
    %57 = arith.addf %56, %55 : vector<8x32xf32>
    %58 = arith.divf %56, %57 : vector<8x32xf32>
    %59 = vector.extract_strided_slice %23 {offsets = [0, 0], sizes = [8, 32], strides = [1, 1]} : vector<64x32xf32> to vector<8x32xf32>
    %cst_48 = arith.constant dense<0.000000e+00> : vector<8x32xf32>
    %60 = tpu.matmul %42, %36, %cst_48 {dimension_numbers = #tpu.dot_dimension_numbers<[1], [0], [0], [1], [0, 0, 1, 1], [], []>} : vector<8x32xbf16>, vector<32x32xbf16>, vector<8x32xf32> -> vector<8x32xf32>
    %61 = arith.addf %59, %60 : vector<8x32xf32>
    %62 = math.tanh %61 : vector<8x32xf32>
    %63 = vector.extract_strided_slice %30 {offsets = [0, 0], sizes = [8, 32], strides = [1, 1]} : vector<64x32xf32> to vector<8x32xf32>
    %cst_49 = arith.constant dense<0.000000e+00> : vector<8x32xf32>
    %64 = tpu.matmul %42, %38, %cst_49 {dimension_numbers = #tpu.dot_dimension_numbers<[1], [0], [0], [1], [0, 0, 1, 1], [], []>} : vector<8x32xbf16>, vector<32x32xbf16>, vector<8x32xf32> -> vector<8x32xf32>
    %65 = arith.addf %63, %64 : vector<8x32xf32>
    %66 = arith.negf %65 : vector<8x32xf32>
    %67 = math.exp %66 : vector<8x32xf32>
    %cst_50 = arith.constant 1.000000e+00 : f32
    %68 = vector.broadcast %cst_50 : f32 to vector<8x32xf32>
    %69 = arith.addf %68, %67 : vector<8x32xf32>
    %70 = arith.divf %68, %69 : vector<8x32xf32>
    %71 = arith.mulf %58, %41 : vector<8x32xf32>
    %72 = arith.mulf %50, %62 : vector<8x32xf32>
    %73 = arith.addf %71, %72 : vector<8x32xf32>
    %74 = math.tanh %73 : vector<8x32xf32>
    %75 = arith.mulf %70, %74 : vector<8x32xf32>
    %c0_i32 = arith.constant 0 : i32
    %76 = vector.broadcast %c0_i32 : i32 to vector<8x1xi32>
    %77 = arith.cmpi sgt, %39, %76 : vector<8x1xi32>
    %78 = vector.shape_cast %77 : vector<8x1xi1> to vector<8x1xi1>
    %79 = vector.broadcast %78 : vector<8x1xi1> to vector<8x32xi1>
    %80 = arith.select %79, %75, %40 : vector<8x32xi1>, vector<8x32xf32>
    %81 = vector.shape_cast %77 : vector<8x1xi1> to vector<8x1xi1>
    %82 = vector.broadcast %81 : vector<8x1xi1> to vector<8x32xi1>
    %83 = arith.select %82, %73, %41 : vector<8x32xi1>, vector<8x32xf32>
    %84 = arith.truncf %80 : vector<8x32xf32> to vector<8x32xbf16>
    %85 = vector.extract_strided_slice %9 {offsets = [8, 0], sizes = [8, 32], strides = [1, 1]} : vector<64x32xf32> to vector<8x32xf32>
    %cst_51 = arith.constant dense<0.000000e+00> : vector<8x32xf32>
    %86 = tpu.matmul %84, %32, %cst_51 {dimension_numbers = #tpu.dot_dimension_numbers<[1], [0], [0], [1], [0, 0, 1, 1], [], []>} : vector<8x32xbf16>, vector<32x32xbf16>, vector<8x32xf32> -> vector<8x32xf32>
    %87 = arith.addf %85, %86 : vector<8x32xf32>
    %88 = arith.negf %87 : vector<8x32xf32>
    %89 = math.exp %88 : vector<8x32xf32>
    %cst_52 = arith.constant 1.000000e+00 : f32
    %90 = vector.broadcast %cst_52 : f32 to vector<8x32xf32>
    %91 = arith.addf %90, %89 : vector<8x32xf32>
    %92 = arith.divf %90, %91 : vector<8x32xf32>
    %93 = vector.extract_strided_slice %16 {offsets = [8, 0], sizes = [8, 32], strides = [1, 1]} : vector<64x32xf32> to vector<8x32xf32>
    %cst_53 = arith.constant dense<0.000000e+00> : vector<8x32xf32>
    %94 = tpu.matmul %84, %34, %cst_53 {dimension_numbers = #tpu.dot_dimension_numbers<[1], [0], [0], [1], [0, 0, 1, 1], [], []>} : vector<8x32xbf16>, vector<32x32xbf16>, vector<8x32xf32> -> vector<8x32xf32>
    %95 = arith.addf %93, %94 : vector<8x32xf32>
    %96 = arith.negf %95 : vector<8x32xf32>
    %97 = math.exp %96 : vector<8x32xf32>
    %cst_54 = arith.constant 1.000000e+00 : f32
    %98 = vector.broadcast %cst_54 : f32 to vector<8x32xf32>
    %99 = arith.addf %98, %97 : vector<8x32xf32>
    %100 = arith.divf %98, %99 : vector<8x32xf32>
    %101 = vector.extract_strided_slice %23 {offsets = [8, 0], sizes = [8, 32], strides = [1, 1]} : vector<64x32xf32> to vector<8x32xf32>
    %cst_55 = arith.constant dense<0.000000e+00> : vector<8x32xf32>
    %102 = tpu.matmul %84, %36, %cst_55 {dimension_numbers = #tpu.dot_dimension_numbers<[1], [0], [0], [1], [0, 0, 1, 1], [], []>} : vector<8x32xbf16>, vector<32x32xbf16>, vector<8x32xf32> -> vector<8x32xf32>
    %103 = arith.addf %101, %102 : vector<8x32xf32>
    %104 = math.tanh %103 : vector<8x32xf32>
    %105 = vector.extract_strided_slice %30 {offsets = [8, 0], sizes = [8, 32], strides = [1, 1]} : vector<64x32xf32> to vector<8x32xf32>
    %cst_56 = arith.constant dense<0.000000e+00> : vector<8x32xf32>
    %106 = tpu.matmul %84, %38, %cst_56 {dimension_numbers = #tpu.dot_dimension_numbers<[1], [0], [0], [1], [0, 0, 1, 1], [], []>} : vector<8x32xbf16>, vector<32x32xbf16>, vector<8x32xf32> -> vector<8x32xf32>
    %107 = arith.addf %105, %106 : vector<8x32xf32>
    %108 = arith.negf %107 : vector<8x32xf32>
    %109 = math.exp %108 : vector<8x32xf32>
    %cst_57 = arith.constant 1.000000e+00 : f32
    %110 = vector.broadcast %cst_57 : f32 to vector<8x32xf32>
    %111 = arith.addf %110, %109 : vector<8x32xf32>
    %112 = arith.divf %110, %111 : vector<8x32xf32>
    %113 = arith.mulf %100, %83 : vector<8x32xf32>
    %114 = arith.mulf %92, %104 : vector<8x32xf32>
    %115 = arith.addf %113, %114 : vector<8x32xf32>
    %116 = math.tanh %115 : vector<8x32xf32>
    %117 = arith.mulf %112, %116 : vector<8x32xf32>
    %c1_i32 = arith.constant 1 : i32
    %118 = vector.broadcast %c1_i32 : i32 to vector<8x1xi32>
    %119 = arith.cmpi sgt, %39, %118 : vector<8x1xi32>
    %120 = vector.shape_cast %119 : vector<8x1xi1> to vector<8x1xi1>
    %121 = vector.broadcast %120 : vector<8x1xi1> to vector<8x32xi1>
    %122 = arith.select %121, %117, %80 : vector<8x32xi1>, vector<8x32xf32>
    %123 = vector.shape_cast %119 : vector<8x1xi1> to vector<8x1xi1>
    %124 = vector.broadcast %123 : vector<8x1xi1> to vector<8x32xi1>
    %125 = arith.select %124, %115, %83 : vector<8x32xi1>, vector<8x32xf32>
    %126 = arith.truncf %122 : vector<8x32xf32> to vector<8x32xbf16>
    %127 = vector.extract_strided_slice %9 {offsets = [16, 0], sizes = [8, 32], strides = [1, 1]} : vector<64x32xf32> to vector<8x32xf32>
    %cst_58 = arith.constant dense<0.000000e+00> : vector<8x32xf32>
    %128 = tpu.matmul %126, %32, %cst_58 {dimension_numbers = #tpu.dot_dimension_numbers<[1], [0], [0], [1], [0, 0, 1, 1], [], []>} : vector<8x32xbf16>, vector<32x32xbf16>, vector<8x32xf32> -> vector<8x32xf32>
    %129 = arith.addf %127, %128 : vector<8x32xf32>
    %130 = arith.negf %129 : vector<8x32xf32>
    %131 = math.exp %130 : vector<8x32xf32>
    %cst_59 = arith.constant 1.000000e+00 : f32
    %132 = vector.broadcast %cst_59 : f32 to vector<8x32xf32>
    %133 = arith.addf %132, %131 : vector<8x32xf32>
    %134 = arith.divf %132, %133 : vector<8x32xf32>
    %135 = vector.extract_strided_slice %16 {offsets = [16, 0], sizes = [8, 32], strides = [1, 1]} : vector<64x32xf32> to vector<8x32xf32>
    %cst_60 = arith.constant dense<0.000000e+00> : vector<8x32xf32>
    %136 = tpu.matmul %126, %34, %cst_60 {dimension_numbers = #tpu.dot_dimension_numbers<[1], [0], [0], [1], [0, 0, 1, 1], [], []>} : vector<8x32xbf16>, vector<32x32xbf16>, vector<8x32xf32> -> vector<8x32xf32>
    %137 = arith.addf %135, %136 : vector<8x32xf32>
    %138 = arith.negf %137 : vector<8x32xf32>
    %139 = math.exp %138 : vector<8x32xf32>
    %cst_61 = arith.constant 1.000000e+00 : f32
    %140 = vector.broadcast %cst_61 : f32 to vector<8x32xf32>
    %141 = arith.addf %140, %139 : vector<8x32xf32>
    %142 = arith.divf %140, %141 : vector<8x32xf32>
    %143 = vector.extract_strided_slice %23 {offsets = [16, 0], sizes = [8, 32], strides = [1, 1]} : vector<64x32xf32> to vector<8x32xf32>
    %cst_62 = arith.constant dense<0.000000e+00> : vector<8x32xf32>
    %144 = tpu.matmul %126, %36, %cst_62 {dimension_numbers = #tpu.dot_dimension_numbers<[1], [0], [0], [1], [0, 0, 1, 1], [], []>} : vector<8x32xbf16>, vector<32x32xbf16>, vector<8x32xf32> -> vector<8x32xf32>
    %145 = arith.addf %143, %144 : vector<8x32xf32>
    %146 = math.tanh %145 : vector<8x32xf32>
    %147 = vector.extract_strided_slice %30 {offsets = [16, 0], sizes = [8, 32], strides = [1, 1]} : vector<64x32xf32> to vector<8x32xf32>
    %cst_63 = arith.constant dense<0.000000e+00> : vector<8x32xf32>
    %148 = tpu.matmul %126, %38, %cst_63 {dimension_numbers = #tpu.dot_dimension_numbers<[1], [0], [0], [1], [0, 0, 1, 1], [], []>} : vector<8x32xbf16>, vector<32x32xbf16>, vector<8x32xf32> -> vector<8x32xf32>
    %149 = arith.addf %147, %148 : vector<8x32xf32>
    %150 = arith.negf %149 : vector<8x32xf32>
    %151 = math.exp %150 : vector<8x32xf32>
    %cst_64 = arith.constant 1.000000e+00 : f32
    %152 = vector.broadcast %cst_64 : f32 to vector<8x32xf32>
    %153 = arith.addf %152, %151 : vector<8x32xf32>
    %154 = arith.divf %152, %153 : vector<8x32xf32>
    %155 = arith.mulf %142, %125 : vector<8x32xf32>
    %156 = arith.mulf %134, %146 : vector<8x32xf32>
    %157 = arith.addf %155, %156 : vector<8x32xf32>
    %158 = math.tanh %157 : vector<8x32xf32>
    %159 = arith.mulf %154, %158 : vector<8x32xf32>
    %c2_i32 = arith.constant 2 : i32
    %160 = vector.broadcast %c2_i32 : i32 to vector<8x1xi32>
    %161 = arith.cmpi sgt, %39, %160 : vector<8x1xi32>
    %162 = vector.shape_cast %161 : vector<8x1xi1> to vector<8x1xi1>
    %163 = vector.broadcast %162 : vector<8x1xi1> to vector<8x32xi1>
    %164 = arith.select %163, %159, %122 : vector<8x32xi1>, vector<8x32xf32>
    %165 = vector.shape_cast %161 : vector<8x1xi1> to vector<8x1xi1>
    %166 = vector.broadcast %165 : vector<8x1xi1> to vector<8x32xi1>
    %167 = arith.select %166, %157, %125 : vector<8x32xi1>, vector<8x32xf32>
    %168 = arith.truncf %164 : vector<8x32xf32> to vector<8x32xbf16>
    %169 = vector.extract_strided_slice %9 {offsets = [24, 0], sizes = [8, 32], strides = [1, 1]} : vector<64x32xf32> to vector<8x32xf32>
    %cst_65 = arith.constant dense<0.000000e+00> : vector<8x32xf32>
    %170 = tpu.matmul %168, %32, %cst_65 {dimension_numbers = #tpu.dot_dimension_numbers<[1], [0], [0], [1], [0, 0, 1, 1], [], []>} : vector<8x32xbf16>, vector<32x32xbf16>, vector<8x32xf32> -> vector<8x32xf32>
    %171 = arith.addf %169, %170 : vector<8x32xf32>
    %172 = arith.negf %171 : vector<8x32xf32>
    %173 = math.exp %172 : vector<8x32xf32>
    %cst_66 = arith.constant 1.000000e+00 : f32
    %174 = vector.broadcast %cst_66 : f32 to vector<8x32xf32>
    %175 = arith.addf %174, %173 : vector<8x32xf32>
    %176 = arith.divf %174, %175 : vector<8x32xf32>
    %177 = vector.extract_strided_slice %16 {offsets = [24, 0], sizes = [8, 32], strides = [1, 1]} : vector<64x32xf32> to vector<8x32xf32>
    %cst_67 = arith.constant dense<0.000000e+00> : vector<8x32xf32>
    %178 = tpu.matmul %168, %34, %cst_67 {dimension_numbers = #tpu.dot_dimension_numbers<[1], [0], [0], [1], [0, 0, 1, 1], [], []>} : vector<8x32xbf16>, vector<32x32xbf16>, vector<8x32xf32> -> vector<8x32xf32>
    %179 = arith.addf %177, %178 : vector<8x32xf32>
    %180 = arith.negf %179 : vector<8x32xf32>
    %181 = math.exp %180 : vector<8x32xf32>
    %cst_68 = arith.constant 1.000000e+00 : f32
    %182 = vector.broadcast %cst_68 : f32 to vector<8x32xf32>
    %183 = arith.addf %182, %181 : vector<8x32xf32>
    %184 = arith.divf %182, %183 : vector<8x32xf32>
    %185 = vector.extract_strided_slice %23 {offsets = [24, 0], sizes = [8, 32], strides = [1, 1]} : vector<64x32xf32> to vector<8x32xf32>
    %cst_69 = arith.constant dense<0.000000e+00> : vector<8x32xf32>
    %186 = tpu.matmul %168, %36, %cst_69 {dimension_numbers = #tpu.dot_dimension_numbers<[1], [0], [0], [1], [0, 0, 1, 1], [], []>} : vector<8x32xbf16>, vector<32x32xbf16>, vector<8x32xf32> -> vector<8x32xf32>
    %187 = arith.addf %185, %186 : vector<8x32xf32>
    %188 = math.tanh %187 : vector<8x32xf32>
    %189 = vector.extract_strided_slice %30 {offsets = [24, 0], sizes = [8, 32], strides = [1, 1]} : vector<64x32xf32> to vector<8x32xf32>
    %cst_70 = arith.constant dense<0.000000e+00> : vector<8x32xf32>
    %190 = tpu.matmul %168, %38, %cst_70 {dimension_numbers = #tpu.dot_dimension_numbers<[1], [0], [0], [1], [0, 0, 1, 1], [], []>} : vector<8x32xbf16>, vector<32x32xbf16>, vector<8x32xf32> -> vector<8x32xf32>
    %191 = arith.addf %189, %190 : vector<8x32xf32>
    %192 = arith.negf %191 : vector<8x32xf32>
    %193 = math.exp %192 : vector<8x32xf32>
    %cst_71 = arith.constant 1.000000e+00 : f32
    %194 = vector.broadcast %cst_71 : f32 to vector<8x32xf32>
    %195 = arith.addf %194, %193 : vector<8x32xf32>
    %196 = arith.divf %194, %195 : vector<8x32xf32>
    %197 = arith.mulf %184, %167 : vector<8x32xf32>
    %198 = arith.mulf %176, %188 : vector<8x32xf32>
    %199 = arith.addf %197, %198 : vector<8x32xf32>
    %200 = math.tanh %199 : vector<8x32xf32>
    %201 = arith.mulf %196, %200 : vector<8x32xf32>
    %c3_i32 = arith.constant 3 : i32
    %202 = vector.broadcast %c3_i32 : i32 to vector<8x1xi32>
    %203 = arith.cmpi sgt, %39, %202 : vector<8x1xi32>
    %204 = vector.shape_cast %203 : vector<8x1xi1> to vector<8x1xi1>
    %205 = vector.broadcast %204 : vector<8x1xi1> to vector<8x32xi1>
    %206 = arith.select %205, %201, %164 : vector<8x32xi1>, vector<8x32xf32>
    %207 = vector.shape_cast %203 : vector<8x1xi1> to vector<8x1xi1>
    %208 = vector.broadcast %207 : vector<8x1xi1> to vector<8x32xi1>
    %209 = arith.select %208, %199, %167 : vector<8x32xi1>, vector<8x32xf32>
    %210 = arith.truncf %206 : vector<8x32xf32> to vector<8x32xbf16>
    %211 = vector.extract_strided_slice %9 {offsets = [32, 0], sizes = [8, 32], strides = [1, 1]} : vector<64x32xf32> to vector<8x32xf32>
    %cst_72 = arith.constant dense<0.000000e+00> : vector<8x32xf32>
    %212 = tpu.matmul %210, %32, %cst_72 {dimension_numbers = #tpu.dot_dimension_numbers<[1], [0], [0], [1], [0, 0, 1, 1], [], []>} : vector<8x32xbf16>, vector<32x32xbf16>, vector<8x32xf32> -> vector<8x32xf32>
    %213 = arith.addf %211, %212 : vector<8x32xf32>
    %214 = arith.negf %213 : vector<8x32xf32>
    %215 = math.exp %214 : vector<8x32xf32>
    %cst_73 = arith.constant 1.000000e+00 : f32
    %216 = vector.broadcast %cst_73 : f32 to vector<8x32xf32>
    %217 = arith.addf %216, %215 : vector<8x32xf32>
    %218 = arith.divf %216, %217 : vector<8x32xf32>
    %219 = vector.extract_strided_slice %16 {offsets = [32, 0], sizes = [8, 32], strides = [1, 1]} : vector<64x32xf32> to vector<8x32xf32>
    %cst_74 = arith.constant dense<0.000000e+00> : vector<8x32xf32>
    %220 = tpu.matmul %210, %34, %cst_74 {dimension_numbers = #tpu.dot_dimension_numbers<[1], [0], [0], [1], [0, 0, 1, 1], [], []>} : vector<8x32xbf16>, vector<32x32xbf16>, vector<8x32xf32> -> vector<8x32xf32>
    %221 = arith.addf %219, %220 : vector<8x32xf32>
    %222 = arith.negf %221 : vector<8x32xf32>
    %223 = math.exp %222 : vector<8x32xf32>
    %cst_75 = arith.constant 1.000000e+00 : f32
    %224 = vector.broadcast %cst_75 : f32 to vector<8x32xf32>
    %225 = arith.addf %224, %223 : vector<8x32xf32>
    %226 = arith.divf %224, %225 : vector<8x32xf32>
    %227 = vector.extract_strided_slice %23 {offsets = [32, 0], sizes = [8, 32], strides = [1, 1]} : vector<64x32xf32> to vector<8x32xf32>
    %cst_76 = arith.constant dense<0.000000e+00> : vector<8x32xf32>
    %228 = tpu.matmul %210, %36, %cst_76 {dimension_numbers = #tpu.dot_dimension_numbers<[1], [0], [0], [1], [0, 0, 1, 1], [], []>} : vector<8x32xbf16>, vector<32x32xbf16>, vector<8x32xf32> -> vector<8x32xf32>
    %229 = arith.addf %227, %228 : vector<8x32xf32>
    %230 = math.tanh %229 : vector<8x32xf32>
    %231 = vector.extract_strided_slice %30 {offsets = [32, 0], sizes = [8, 32], strides = [1, 1]} : vector<64x32xf32> to vector<8x32xf32>
    %cst_77 = arith.constant dense<0.000000e+00> : vector<8x32xf32>
    %232 = tpu.matmul %210, %38, %cst_77 {dimension_numbers = #tpu.dot_dimension_numbers<[1], [0], [0], [1], [0, 0, 1, 1], [], []>} : vector<8x32xbf16>, vector<32x32xbf16>, vector<8x32xf32> -> vector<8x32xf32>
    %233 = arith.addf %231, %232 : vector<8x32xf32>
    %234 = arith.negf %233 : vector<8x32xf32>
    %235 = math.exp %234 : vector<8x32xf32>
    %cst_78 = arith.constant 1.000000e+00 : f32
    %236 = vector.broadcast %cst_78 : f32 to vector<8x32xf32>
    %237 = arith.addf %236, %235 : vector<8x32xf32>
    %238 = arith.divf %236, %237 : vector<8x32xf32>
    %239 = arith.mulf %226, %209 : vector<8x32xf32>
    %240 = arith.mulf %218, %230 : vector<8x32xf32>
    %241 = arith.addf %239, %240 : vector<8x32xf32>
    %242 = math.tanh %241 : vector<8x32xf32>
    %243 = arith.mulf %238, %242 : vector<8x32xf32>
    %c4_i32 = arith.constant 4 : i32
    %244 = vector.broadcast %c4_i32 : i32 to vector<8x1xi32>
    %245 = arith.cmpi sgt, %39, %244 : vector<8x1xi32>
    %246 = vector.shape_cast %245 : vector<8x1xi1> to vector<8x1xi1>
    %247 = vector.broadcast %246 : vector<8x1xi1> to vector<8x32xi1>
    %248 = arith.select %247, %243, %206 : vector<8x32xi1>, vector<8x32xf32>
    %249 = vector.shape_cast %245 : vector<8x1xi1> to vector<8x1xi1>
    %250 = vector.broadcast %249 : vector<8x1xi1> to vector<8x32xi1>
    %251 = arith.select %250, %241, %209 : vector<8x32xi1>, vector<8x32xf32>
    %252 = arith.truncf %248 : vector<8x32xf32> to vector<8x32xbf16>
    %253 = vector.extract_strided_slice %9 {offsets = [40, 0], sizes = [8, 32], strides = [1, 1]} : vector<64x32xf32> to vector<8x32xf32>
    %cst_79 = arith.constant dense<0.000000e+00> : vector<8x32xf32>
    %254 = tpu.matmul %252, %32, %cst_79 {dimension_numbers = #tpu.dot_dimension_numbers<[1], [0], [0], [1], [0, 0, 1, 1], [], []>} : vector<8x32xbf16>, vector<32x32xbf16>, vector<8x32xf32> -> vector<8x32xf32>
    %255 = arith.addf %253, %254 : vector<8x32xf32>
    %256 = arith.negf %255 : vector<8x32xf32>
    %257 = math.exp %256 : vector<8x32xf32>
    %cst_80 = arith.constant 1.000000e+00 : f32
    %258 = vector.broadcast %cst_80 : f32 to vector<8x32xf32>
    %259 = arith.addf %258, %257 : vector<8x32xf32>
    %260 = arith.divf %258, %259 : vector<8x32xf32>
    %261 = vector.extract_strided_slice %16 {offsets = [40, 0], sizes = [8, 32], strides = [1, 1]} : vector<64x32xf32> to vector<8x32xf32>
    %cst_81 = arith.constant dense<0.000000e+00> : vector<8x32xf32>
    %262 = tpu.matmul %252, %34, %cst_81 {dimension_numbers = #tpu.dot_dimension_numbers<[1], [0], [0], [1], [0, 0, 1, 1], [], []>} : vector<8x32xbf16>, vector<32x32xbf16>, vector<8x32xf32> -> vector<8x32xf32>
    %263 = arith.addf %261, %262 : vector<8x32xf32>
    %264 = arith.negf %263 : vector<8x32xf32>
    %265 = math.exp %264 : vector<8x32xf32>
    %cst_82 = arith.constant 1.000000e+00 : f32
    %266 = vector.broadcast %cst_82 : f32 to vector<8x32xf32>
    %267 = arith.addf %266, %265 : vector<8x32xf32>
    %268 = arith.divf %266, %267 : vector<8x32xf32>
    %269 = vector.extract_strided_slice %23 {offsets = [40, 0], sizes = [8, 32], strides = [1, 1]} : vector<64x32xf32> to vector<8x32xf32>
    %cst_83 = arith.constant dense<0.000000e+00> : vector<8x32xf32>
    %270 = tpu.matmul %252, %36, %cst_83 {dimension_numbers = #tpu.dot_dimension_numbers<[1], [0], [0], [1], [0, 0, 1, 1], [], []>} : vector<8x32xbf16>, vector<32x32xbf16>, vector<8x32xf32> -> vector<8x32xf32>
    %271 = arith.addf %269, %270 : vector<8x32xf32>
    %272 = math.tanh %271 : vector<8x32xf32>
    %273 = vector.extract_strided_slice %30 {offsets = [40, 0], sizes = [8, 32], strides = [1, 1]} : vector<64x32xf32> to vector<8x32xf32>
    %cst_84 = arith.constant dense<0.000000e+00> : vector<8x32xf32>
    %274 = tpu.matmul %252, %38, %cst_84 {dimension_numbers = #tpu.dot_dimension_numbers<[1], [0], [0], [1], [0, 0, 1, 1], [], []>} : vector<8x32xbf16>, vector<32x32xbf16>, vector<8x32xf32> -> vector<8x32xf32>
    %275 = arith.addf %273, %274 : vector<8x32xf32>
    %276 = arith.negf %275 : vector<8x32xf32>
    %277 = math.exp %276 : vector<8x32xf32>
    %cst_85 = arith.constant 1.000000e+00 : f32
    %278 = vector.broadcast %cst_85 : f32 to vector<8x32xf32>
    %279 = arith.addf %278, %277 : vector<8x32xf32>
    %280 = arith.divf %278, %279 : vector<8x32xf32>
    %281 = arith.mulf %268, %251 : vector<8x32xf32>
    %282 = arith.mulf %260, %272 : vector<8x32xf32>
    %283 = arith.addf %281, %282 : vector<8x32xf32>
    %284 = math.tanh %283 : vector<8x32xf32>
    %285 = arith.mulf %280, %284 : vector<8x32xf32>
    %c5_i32 = arith.constant 5 : i32
    %286 = vector.broadcast %c5_i32 : i32 to vector<8x1xi32>
    %287 = arith.cmpi sgt, %39, %286 : vector<8x1xi32>
    %288 = vector.shape_cast %287 : vector<8x1xi1> to vector<8x1xi1>
    %289 = vector.broadcast %288 : vector<8x1xi1> to vector<8x32xi1>
    %290 = arith.select %289, %285, %248 : vector<8x32xi1>, vector<8x32xf32>
    %291 = vector.shape_cast %287 : vector<8x1xi1> to vector<8x1xi1>
    %292 = vector.broadcast %291 : vector<8x1xi1> to vector<8x32xi1>
    %293 = arith.select %292, %283, %251 : vector<8x32xi1>, vector<8x32xf32>
    %294 = arith.truncf %290 : vector<8x32xf32> to vector<8x32xbf16>
    %295 = vector.extract_strided_slice %9 {offsets = [48, 0], sizes = [8, 32], strides = [1, 1]} : vector<64x32xf32> to vector<8x32xf32>
    %cst_86 = arith.constant dense<0.000000e+00> : vector<8x32xf32>
    %296 = tpu.matmul %294, %32, %cst_86 {dimension_numbers = #tpu.dot_dimension_numbers<[1], [0], [0], [1], [0, 0, 1, 1], [], []>} : vector<8x32xbf16>, vector<32x32xbf16>, vector<8x32xf32> -> vector<8x32xf32>
    %297 = arith.addf %295, %296 : vector<8x32xf32>
    %298 = arith.negf %297 : vector<8x32xf32>
    %299 = math.exp %298 : vector<8x32xf32>
    %cst_87 = arith.constant 1.000000e+00 : f32
    %300 = vector.broadcast %cst_87 : f32 to vector<8x32xf32>
    %301 = arith.addf %300, %299 : vector<8x32xf32>
    %302 = arith.divf %300, %301 : vector<8x32xf32>
    %303 = vector.extract_strided_slice %16 {offsets = [48, 0], sizes = [8, 32], strides = [1, 1]} : vector<64x32xf32> to vector<8x32xf32>
    %cst_88 = arith.constant dense<0.000000e+00> : vector<8x32xf32>
    %304 = tpu.matmul %294, %34, %cst_88 {dimension_numbers = #tpu.dot_dimension_numbers<[1], [0], [0], [1], [0, 0, 1, 1], [], []>} : vector<8x32xbf16>, vector<32x32xbf16>, vector<8x32xf32> -> vector<8x32xf32>
    %305 = arith.addf %303, %304 : vector<8x32xf32>
    %306 = arith.negf %305 : vector<8x32xf32>
    %307 = math.exp %306 : vector<8x32xf32>
    %cst_89 = arith.constant 1.000000e+00 : f32
    %308 = vector.broadcast %cst_89 : f32 to vector<8x32xf32>
    %309 = arith.addf %308, %307 : vector<8x32xf32>
    %310 = arith.divf %308, %309 : vector<8x32xf32>
    %311 = vector.extract_strided_slice %23 {offsets = [48, 0], sizes = [8, 32], strides = [1, 1]} : vector<64x32xf32> to vector<8x32xf32>
    %cst_90 = arith.constant dense<0.000000e+00> : vector<8x32xf32>
    %312 = tpu.matmul %294, %36, %cst_90 {dimension_numbers = #tpu.dot_dimension_numbers<[1], [0], [0], [1], [0, 0, 1, 1], [], []>} : vector<8x32xbf16>, vector<32x32xbf16>, vector<8x32xf32> -> vector<8x32xf32>
    %313 = arith.addf %311, %312 : vector<8x32xf32>
    %314 = math.tanh %313 : vector<8x32xf32>
    %315 = vector.extract_strided_slice %30 {offsets = [48, 0], sizes = [8, 32], strides = [1, 1]} : vector<64x32xf32> to vector<8x32xf32>
    %cst_91 = arith.constant dense<0.000000e+00> : vector<8x32xf32>
    %316 = tpu.matmul %294, %38, %cst_91 {dimension_numbers = #tpu.dot_dimension_numbers<[1], [0], [0], [1], [0, 0, 1, 1], [], []>} : vector<8x32xbf16>, vector<32x32xbf16>, vector<8x32xf32> -> vector<8x32xf32>
    %317 = arith.addf %315, %316 : vector<8x32xf32>
    %318 = arith.negf %317 : vector<8x32xf32>
    %319 = math.exp %318 : vector<8x32xf32>
    %cst_92 = arith.constant 1.000000e+00 : f32
    %320 = vector.broadcast %cst_92 : f32 to vector<8x32xf32>
    %321 = arith.addf %320, %319 : vector<8x32xf32>
    %322 = arith.divf %320, %321 : vector<8x32xf32>
    %323 = arith.mulf %310, %293 : vector<8x32xf32>
    %324 = arith.mulf %302, %314 : vector<8x32xf32>
    %325 = arith.addf %323, %324 : vector<8x32xf32>
    %326 = math.tanh %325 : vector<8x32xf32>
    %327 = arith.mulf %322, %326 : vector<8x32xf32>
    %c6_i32 = arith.constant 6 : i32
    %328 = vector.broadcast %c6_i32 : i32 to vector<8x1xi32>
    %329 = arith.cmpi sgt, %39, %328 : vector<8x1xi32>
    %330 = vector.shape_cast %329 : vector<8x1xi1> to vector<8x1xi1>
    %331 = vector.broadcast %330 : vector<8x1xi1> to vector<8x32xi1>
    %332 = arith.select %331, %327, %290 : vector<8x32xi1>, vector<8x32xf32>
    %333 = vector.shape_cast %329 : vector<8x1xi1> to vector<8x1xi1>
    %334 = vector.broadcast %333 : vector<8x1xi1> to vector<8x32xi1>
    %335 = arith.select %334, %325, %293 : vector<8x32xi1>, vector<8x32xf32>
    %336 = arith.truncf %332 : vector<8x32xf32> to vector<8x32xbf16>
    %337 = vector.extract_strided_slice %9 {offsets = [56, 0], sizes = [8, 32], strides = [1, 1]} : vector<64x32xf32> to vector<8x32xf32>
    %cst_93 = arith.constant dense<0.000000e+00> : vector<8x32xf32>
    %338 = tpu.matmul %336, %32, %cst_93 {dimension_numbers = #tpu.dot_dimension_numbers<[1], [0], [0], [1], [0, 0, 1, 1], [], []>} : vector<8x32xbf16>, vector<32x32xbf16>, vector<8x32xf32> -> vector<8x32xf32>
    %339 = arith.addf %337, %338 : vector<8x32xf32>
    %340 = arith.negf %339 : vector<8x32xf32>
    %341 = math.exp %340 : vector<8x32xf32>
    %cst_94 = arith.constant 1.000000e+00 : f32
    %342 = vector.broadcast %cst_94 : f32 to vector<8x32xf32>
    %343 = arith.addf %342, %341 : vector<8x32xf32>
    %344 = arith.divf %342, %343 : vector<8x32xf32>
    %345 = vector.extract_strided_slice %16 {offsets = [56, 0], sizes = [8, 32], strides = [1, 1]} : vector<64x32xf32> to vector<8x32xf32>
    %cst_95 = arith.constant dense<0.000000e+00> : vector<8x32xf32>
    %346 = tpu.matmul %336, %34, %cst_95 {dimension_numbers = #tpu.dot_dimension_numbers<[1], [0], [0], [1], [0, 0, 1, 1], [], []>} : vector<8x32xbf16>, vector<32x32xbf16>, vector<8x32xf32> -> vector<8x32xf32>
    %347 = arith.addf %345, %346 : vector<8x32xf32>
    %348 = arith.negf %347 : vector<8x32xf32>
    %349 = math.exp %348 : vector<8x32xf32>
    %cst_96 = arith.constant 1.000000e+00 : f32
    %350 = vector.broadcast %cst_96 : f32 to vector<8x32xf32>
    %351 = arith.addf %350, %349 : vector<8x32xf32>
    %352 = arith.divf %350, %351 : vector<8x32xf32>
    %353 = vector.extract_strided_slice %23 {offsets = [56, 0], sizes = [8, 32], strides = [1, 1]} : vector<64x32xf32> to vector<8x32xf32>
    %cst_97 = arith.constant dense<0.000000e+00> : vector<8x32xf32>
    %354 = tpu.matmul %336, %36, %cst_97 {dimension_numbers = #tpu.dot_dimension_numbers<[1], [0], [0], [1], [0, 0, 1, 1], [], []>} : vector<8x32xbf16>, vector<32x32xbf16>, vector<8x32xf32> -> vector<8x32xf32>
    %355 = arith.addf %353, %354 : vector<8x32xf32>
    %356 = math.tanh %355 : vector<8x32xf32>
    %357 = vector.extract_strided_slice %30 {offsets = [56, 0], sizes = [8, 32], strides = [1, 1]} : vector<64x32xf32> to vector<8x32xf32>
    %cst_98 = arith.constant dense<0.000000e+00> : vector<8x32xf32>
    %358 = tpu.matmul %336, %38, %cst_98 {dimension_numbers = #tpu.dot_dimension_numbers<[1], [0], [0], [1], [0, 0, 1, 1], [], []>} : vector<8x32xbf16>, vector<32x32xbf16>, vector<8x32xf32> -> vector<8x32xf32>
    %359 = arith.addf %357, %358 : vector<8x32xf32>
    %360 = arith.negf %359 : vector<8x32xf32>
    %361 = math.exp %360 : vector<8x32xf32>
    %cst_99 = arith.constant 1.000000e+00 : f32
    %362 = vector.broadcast %cst_99 : f32 to vector<8x32xf32>
    %363 = arith.addf %362, %361 : vector<8x32xf32>
    %364 = arith.divf %362, %363 : vector<8x32xf32>
    %365 = arith.mulf %352, %335 : vector<8x32xf32>
    %366 = arith.mulf %344, %356 : vector<8x32xf32>
    %367 = arith.addf %365, %366 : vector<8x32xf32>
    %368 = math.tanh %367 : vector<8x32xf32>
    %369 = arith.mulf %364, %368 : vector<8x32xf32>
    %c7_i32 = arith.constant 7 : i32
    %370 = vector.broadcast %c7_i32 : i32 to vector<8x1xi32>
    %371 = arith.cmpi sgt, %39, %370 : vector<8x1xi32>
    %372 = vector.shape_cast %371 : vector<8x1xi1> to vector<8x1xi1>
    %373 = vector.broadcast %372 : vector<8x1xi1> to vector<8x32xi1>
    %374 = arith.select %373, %369, %332 : vector<8x32xi1>, vector<8x32xf32>
    %375 = arith.truncf %374 : vector<8x32xf32> to vector<8x32xbf16>
    %c0_100 = arith.constant 0 : index
    %c0_101 = arith.constant 0 : index
    %376 = vector.load %arg8[%c0_100, %c0_101] : memref<32x128xbf16, #tpu.memory_space<vmem>>, vector<32x128xbf16>
    %cst_102 = arith.constant dense<0.000000e+00> : vector<8x128xf32>
    %377 = tpu.matmul %375, %376, %cst_102 {dimension_numbers = #tpu.dot_dimension_numbers<[1], [0], [0], [1], [0, 0, 1, 1], [], []>} : vector<8x32xbf16>, vector<32x128xbf16>, vector<8x128xf32> -> vector<8x128xf32>
    %c0_103 = arith.constant 0 : index
    %c0_104 = arith.constant 0 : index
    %378 = vector.load %arg9[%c0_103, %c0_104] : memref<1x128xf32, #tpu.memory_space<vmem>>, vector<1x128xf32>
    %379 = vector.broadcast %378 : vector<1x128xf32> to vector<8x128xf32>
    %380 = arith.addf %377, %379 : vector<8x128xf32>
    %cst_105 = arith.constant dense<0xFF800000> : vector<8xf32>
    %381 = vector.multi_reduction <maximumf>, %380, %cst_105 [1] : vector<8x128xf32> to vector<8xf32>
    %382 = vector.shape_cast %381 : vector<8xf32> to vector<8x1xf32>
    %383 = vector.broadcast %382 : vector<8x1xf32> to vector<8x128xf32>
    %384 = arith.subf %380, %383 : vector<8x128xf32>
    %385 = math.exp %384 : vector<8x128xf32>
    %cst_106 = arith.constant dense<0.000000e+00> : vector<8xf32>
    %386 = vector.multi_reduction <add>, %385, %cst_106 [1] : vector<8x128xf32> to vector<8xf32>
    %387 = vector.shape_cast %386 : vector<8xf32> to vector<8x1xf32>
    %388 = math.log %387 : vector<8x1xf32>
    %389 = arith.addf %382, %388 : vector<8x1xf32>
    %390 = vector.broadcast %389 : vector<8x1xf32> to vector<8x128xf32>
    %391 = arith.subf %380, %390 : vector<8x128xf32>
    %c0_107 = arith.constant 0 : index
    %c0_108 = arith.constant 0 : index
    %392 = vector.load %arg10[%c0_107, %c0_108] : memref<8x128xf32, #tpu.memory_space<vmem>>, vector<8x128xf32>
    tpu.vector_store %arg10[%c0_107, %c0_108], %391 {strides = array<i32>} : memref<8x128xf32, #tpu.memory_space<vmem>>, vector<8x128xf32>,
    return
  }
  func.func @transform_0(%arg0: i32) -> (i32, i32, i32) {
    %c0_i32 = arith.constant 0 : i32
    %c0_i32_0 = arith.constant 0 : i32
    %c0_i32_1 = arith.constant 0 : i32
    return %c0_i32, %arg0, %c0_i32_0 : i32, i32, i32
  }
  func.func @transform_1(%arg0: i32) -> (i32, i32) {
    %c0_i32 = arith.constant 0 : i32
    %c0_i32_0 = arith.constant 0 : i32
    return %arg0, %c0_i32 : i32, i32
  }
  func.func @transform_2(%arg0: i32) -> (i32, i32) {
    %c0_i32 = arith.constant 0 : i32
    %c0_i32_0 = arith.constant 0 : i32
    return %arg0, %c0_i32 : i32, i32
  }
  func.func @transform_3(%arg0: i32) -> (i32, i32) {
    %c0_i32 = arith.constant 0 : i32
    %c0_i32_0 = arith.constant 0 : i32
    return %arg0, %c0_i32 : i32, i32
  }
  func.func @transform_4(%arg0: i32) -> (i32, i32, i32) {
    %c0_i32 = arith.constant 0 : i32
    %c0_i32_0 = arith.constant 0 : i32
    %c0_i32_1 = arith.constant 0 : i32
    %c0_i32_2 = arith.constant 0 : i32
    return %c0_i32, %c0_i32_0, %c0_i32_1 : i32, i32, i32
  }
  func.func @transform_5(%arg0: i32) -> (i32, i32, i32) {
    %c0_i32 = arith.constant 0 : i32
    %c0_i32_0 = arith.constant 0 : i32
    %c0_i32_1 = arith.constant 0 : i32
    %c0_i32_2 = arith.constant 0 : i32
    return %c0_i32, %c0_i32_0, %c0_i32_1 : i32, i32, i32
  }
  func.func @transform_6(%arg0: i32) -> (i32, i32, i32) {
    %c0_i32 = arith.constant 0 : i32
    %c0_i32_0 = arith.constant 0 : i32
    %c0_i32_1 = arith.constant 0 : i32
    %c0_i32_2 = arith.constant 0 : i32
    return %c0_i32, %c0_i32_0, %c0_i32_1 : i32, i32, i32
  }
  func.func @transform_7(%arg0: i32) -> (i32, i32) {
    %c0_i32 = arith.constant 0 : i32
    %c0_i32_0 = arith.constant 0 : i32
    %c0_i32_1 = arith.constant 0 : i32
    return %c0_i32, %c0_i32_0 : i32, i32
  }
  func.func @transform_8(%arg0: i32) -> (i32, i32) {
    %c0_i32 = arith.constant 0 : i32
    %c0_i32_0 = arith.constant 0 : i32
    %c0_i32_1 = arith.constant 0 : i32
    return %c0_i32, %c0_i32_0 : i32, i32
  }
  func.func @transform_9(%arg0: i32) -> (i32, i32) {
    %c0_i32 = arith.constant 0 : i32
    %c0_i32_0 = arith.constant 0 : i32
    return %arg0, %c0_i32 : i32, i32
  }
}

</mosaic_0001>

<llo_original>
// kernel: basic_lstm_forward.1
$region0: #{basic_lstm_forward.1}
  #allocation0 [shape = 'u32[]', space=smem, size = 0x4, offset = 0x4, fixed_abs, tag = 'smem constant byte address 0x4 - core index']
  #allocation1 [shape = 'u32[144,128]{1,0:T(1,128)}', space=vmem, size = 0x12000, scoped, tag = 'internal scratch']
  %s0 = inlined_call_operand.vmem [shape: f32[8,8,128], index: 0, kind: input, shape index: {}]
  %s1 = inlined_call_operand.vmem [shape: s32[8,1], index: 1, kind: input, shape index: {}]
  %s2 = inlined_call_operand.vmem [shape: f32[8,32], index: 2, kind: input, shape index: {}]
  %s3 = inlined_call_operand.vmem [shape: f32[8,32], index: 3, kind: input, shape index: {}]
  %s4 = inlined_call_operand.vmem [shape: bf16[4,128,32], index: 4, kind: input, shape index: {}]
  %s5 = inlined_call_operand.vmem [shape: bf16[4,32,32], index: 5, kind: input, shape index: {}]
  %s6 = inlined_call_operand.vmem [shape: f32[4,1,32], index: 6, kind: input, shape index: {}]
  %s7 = inlined_call_operand.vmem [shape: bf16[32,128], index: 7, kind: input, shape index: {}]
  %s8 = inlined_call_operand.vmem [shape: f32[1,128], index: 8, kind: input, shape index: {}]
  %s9 = inlined_call_operand.vmem [shape: f32[8,128], index: 9, kind: output, shape index: {}]
  %s10 = sld [smem:[#allocation0]]
  $region46: #{basic_lstm_forward.1} parent=0
    _
  %s12 = ssub.s32 1, %s10
  %s13 = scalar_select 0, %s12, %s10
  // Predicated region
  $region2: #{basic_lstm_forward.1} parent=0 // pred_check
    _
  $region3: #{basic_lstm_forward.1} parent=0 // pred_check_branch
    %15 = sbr.rel (0) target = $region5
  $region4: #{basic_lstm_forward.1} parent=0 // pred_region
    _
  $region5: #{basic_lstm_forward.1} parent=0 // pred_fallthru
    _
  // Predicated region
  $region6: #{basic_lstm_forward.1} parent=0 // pred_check
    _
  $region7: #{basic_lstm_forward.1} parent=0 // pred_check_branch
    %17 = sbr.rel (0) target = $region9
  $region8: #{basic_lstm_forward.1} parent=0 // pred_region
    _
  $region9: #{basic_lstm_forward.1} parent=0 // pred_fallthru
    _
  // Predicated region
  $region10: #{basic_lstm_forward.1} parent=0 // pred_check
    _
  $region11: #{basic_lstm_forward.1} parent=0 // pred_check_branch
    %19 = sbr.rel (0) target = $region13
  $region12: #{basic_lstm_forward.1} parent=0 // pred_region
    _
  $region13: #{basic_lstm_forward.1} parent=0 // pred_fallthru
    _
  // Predicated region
  $region14: #{basic_lstm_forward.1} parent=0 // pred_check
    _
  $region15: #{basic_lstm_forward.1} parent=0 // pred_check_branch
    %21 = sbr.rel (0) target = $region17
  $region16: #{basic_lstm_forward.1} parent=0 // pred_region
    _
  $region17: #{basic_lstm_forward.1} parent=0 // pred_fallthru
    _
  // Predicated region
  $region18: #{basic_lstm_forward.1} parent=0 // pred_check
    _
  $region19: #{basic_lstm_forward.1} parent=0 // pred_check_branch
    %23 = sbr.rel (0) target = $region21
  $region20: #{basic_lstm_forward.1} parent=0 // pred_region
    _
  $region21: #{basic_lstm_forward.1} parent=0 // pred_fallthru
    _
  // Predicated region
  $region22: #{basic_lstm_forward.1} parent=0 // pred_check
    _
  $region23: #{basic_lstm_forward.1} parent=0 // pred_check_branch
    %25 = sbr.rel (0) target = $region25
  $region24: #{basic_lstm_forward.1} parent=0 // pred_region
    _
  $region25: #{basic_lstm_forward.1} parent=0 // pred_fallthru
    _
  // Predicated region
  $region26: #{basic_lstm_forward.1} parent=0 // pred_check
    _
  $region27: #{basic_lstm_forward.1} parent=0 // pred_check_branch
    %27 = sbr.rel (0) target = $region29
  $region28: #{basic_lstm_forward.1} parent=0 // pred_region
    _
  $region29: #{basic_lstm_forward.1} parent=0 // pred_fallthru
    _
  // Predicated region
  $region30: #{basic_lstm_forward.1} parent=0 // pred_check
    _
  $region31: #{basic_lstm_forward.1} parent=0 // pred_check_branch
    %29 = sbr.rel (0) target = $region33
  $region32: #{basic_lstm_forward.1} parent=0 // pred_region
    _
  $region33: #{basic_lstm_forward.1} parent=0 // pred_fallthru
    _
  // Predicated region
  $region34: #{basic_lstm_forward.1} parent=0 // pred_check
    _
  $region35: #{basic_lstm_forward.1} parent=0 // pred_check_branch
    %31 = sbr.rel (0) target = $region37
  $region36: #{basic_lstm_forward.1} parent=0 // pred_region
    _
  $region37: #{basic_lstm_forward.1} parent=0 // pred_fallthru
    _
  %v33 = vld [vmem:[%s0] sm:$0xff]
  %v34 = vld [vmem:[%s0 + $0x8] sm:$0xff]
  %v35 = vld [vmem:[%s0 + $0x10] sm:$0xff]
  %v36 = vld [vmem:[%s0 + $0x18] sm:$0xff]
  %v37 = vld [vmem:[%s0 + $0x20] sm:$0xff]
  %v38 = vld [vmem:[%s0 + $0x28] sm:$0xff]
  %v39 = vld [vmem:[%s0 + $0x30] sm:$0xff]
  %v40 = vld [vmem:[%s0 + $0x38] sm:$0xff]
  %v41 = vpack.c.bf16 %v34, %v33
  %v42 = vpack.c.bf16 %v36, %v35
  %v43 = vpack.c.bf16 %v38, %v37
  %v44 = vpack.c.bf16 %v40, %v39
  %v45 = vld [vmem:[%s4] sm:$0xf]
  %v46 = vld [vmem:[%s4 + $0x4] sm:$0xf]
  %v47 = vld [vmem:[%s4 + $0x8] sm:$0xf]
  %v48 = vld [vmem:[%s4 + $0xc] sm:$0xf]
  %v49 = vld [vmem:[%s4 + $0x10] sm:$0xf]
  %v50 = vld [vmem:[%s4 + $0x14] sm:$0xf]
  %v51 = vld [vmem:[%s4 + $0x18] sm:$0xf]
  %v52 = vld [vmem:[%s4 + $0x1c] sm:$0xf]
  %v53 = vld [vmem:[%s4 + $0x20] sm:$0xf]
  %v54 = vld [vmem:[%s4 + $0x24] sm:$0xf]
  %v55 = vld [vmem:[%s4 + $0x28] sm:$0xf]
  %v56 = vld [vmem:[%s4 + $0x2c] sm:$0xf]
  %v57 = vld [vmem:[%s4 + $0x30] sm:$0xf]
  %v58 = vld [vmem:[%s4 + $0x34] sm:$0xf]
  %v59 = vld [vmem:[%s4 + $0x38] sm:$0xf]
  %v60 = vld [vmem:[%s4 + $0x3c] sm:$0xf]
  %v61 = vld [vmem:[%s6] sm:$0x1]
  %v63 = vlaneseq
  %v64 = vshrl.u32 %v63, 7
  %v65 = vsub.s32 0, %v64
  %v66 = vrot.slane %v61, %v65
  %v84 = vunpack.c.l.b16 %v45
  %v85 = vunpack.c.l.b16 %v46
  %v86 = vunpack.c.l.b16 %v47
  %v87 = vunpack.c.l.b16 %v48
  %v88 = vunpack.c.l.b16 %v49
  %v89 = vunpack.c.l.b16 %v50
  %v90 = vunpack.c.l.b16 %v51
  %v91 = vunpack.c.l.b16 %v52
  %v92 = vunpack.c.l.b16 %v53
  %v93 = vunpack.c.l.b16 %v54
  %v94 = vunpack.c.l.b16 %v55
  %v95 = vunpack.c.l.b16 %v56
  %v96 = vunpack.c.l.b16 %v57
  %v97 = vunpack.c.l.b16 %v58
  %v98 = vunpack.c.l.b16 %v59
  %v99 = vunpack.c.l.b16 %v60
  %v100 = vpack.c.b16 %v85, %v84
  %v101 = vpack.c.b16 %v87, %v86
  %v102 = vpack.c.b16 %v89, %v88
  %v103 = vpack.c.b16 %v91, %v90
  %v104 = vpack.c.b16 %v93, %v92
  %v105 = vpack.c.b16 %v95, %v94
  %v106 = vpack.c.b16 %v97, %v96
  %v107 = vpack.c.b16 %v99, %v98
  %116 = vmatprep.subr.bf16.mxu0 0
  %117 = vmatpush1.bf16.msra.mxu0 %v100
  %118 = vmatprep.subr.bf16.mxu0 0
  %119 = vmatpush1.bf16.msra.mxu0 %v101
  %120 = vmatprep.subr.bf16.mxu0 0
  %121 = vmatpush1.bf16.msra.mxu0 %v102
  %122 = vmatprep.subr.bf16.mxu0 0
  %123 = vmatpush1.bf16.msra.mxu0 %v103
  %124 = vmatprep.subr.bf16.mxu0 0
  %125 = vmatpush1.bf16.msra.mxu0 %v104
  %126 = vmatprep.subr.bf16.mxu0 0
  %127 = vmatpush1.bf16.msra.mxu0 %v105
  %128 = vmatprep.subr.bf16.mxu0 0
  %129 = vmatpush1.bf16.msra.mxu0 %v106
  %130 = vmatprep.subr.bf16.mxu0 0
  %131 = vmatpush1.bf16.msra.mxu0 %v107
  %132 = vmatprep.subr.bf16.mxu0 0
  %133 = vmatpush1.bf16.msra.mxu0 0
  %134 = vmatprep.subr.bf16.mxu0 0
  %135 = vmatpush1.bf16.msra.mxu0 0
  %136 = vmatprep.subr.bf16.mxu0 0
  %137 = vmatpush1.bf16.msra.mxu0 0
  %138 = vmatprep.subr.bf16.mxu0 0
  %139 = vmatpush1.bf16.msra.mxu0 0
  %140 = vmatprep.subr.bf16.mxu0 0
  %141 = vmatpush1.bf16.msra.mxu0 0
  %142 = vmatprep.subr.bf16.mxu0 0
  %143 = vmatpush1.bf16.msra.mxu0 0
  %144 = vmatprep.subr.bf16.mxu0 0
  %145 = vmatpush1.bf16.msra.mxu0 0
  %146 = vmatprep.subr.bf16.mxu0 0
  %147 = vmatpush1.bf16.msra.mxu0 0
  %148 = vmatprep.mubr.bf16.mxu0 0
  %149 = vmatmul.mubr.bf16.gmra.mrb[0].mxu0 %v41
  %v150 = vpop.f32.mrb[0].mxu0
  %v151 = vadd.f32 %v66, %v150
  %v152 = vpop.f32.mrb[0].mxu0
  %v153 = vpop.f32.mrb[0].mxu0
  %v154 = vadd.f32 %v66, %v153
  %v155 = vpop.f32.mrb[0].mxu0
  %156 = vmatprep.mubr.bf16.mxu0 0
  %157 = vmatmul.mubr.bf16.gmra.mrb[0].mxu0 %v42
  %v158 = vpop.f32.mrb[0].mxu0
  %v159 = vadd.f32 %v66, %v158
  %v160 = vpop.f32.mrb[0].mxu0
  %v161 = vpop.f32.mrb[0].mxu0
  %v162 = vadd.f32 %v66, %v161
  %v163 = vpop.f32.mrb[0].mxu0
  %164 = vmatprep.mubr.bf16.mxu0 0
  %165 = vmatmul.mubr.bf16.gmra.mrb[0].mxu0 %v43
  %v166 = vpop.f32.mrb[0].mxu0
  %v167 = vadd.f32 %v66, %v166
  %v168 = vpop.f32.mrb[0].mxu0
  %v169 = vpop.f32.mrb[0].mxu0
  %v170 = vadd.f32 %v66, %v169
  %v171 = vpop.f32.mrb[0].mxu0
  %172 = vmatprep.mubr.bf16.mxu0 0
  %173 = vmatmul.mubr.bf16.gmra.mrb[0].mxu0 %v44
  %v174 = vpop.f32.mrb[0].mxu0
  %v175 = vadd.f32 %v66, %v174
  %v176 = vpop.f32.mrb[0].mxu0
  %v177 = vpop.f32.mrb[0].mxu0
  %v178 = vadd.f32 %v66, %v177
  %v179 = vpop.f32.mrb[0].mxu0
  %180 = vdwg.mxu0
  %s181 = scalar_lea.vmem %s4, 64
  %v182 = vld [vmem:[%s181] sm:$0xf]
  %v183 = vld [vmem:[%s181 + $0x4] sm:$0xf]
  %v184 = vld [vmem:[%s181 + $0x8] sm:$0xf]
  %v185 = vld [vmem:[%s181 + $0xc] sm:$0xf]
  %v186 = vld [vmem:[%s181 + $0x10] sm:$0xf]
  %v187 = vld [vmem:[%s181 + $0x14] sm:$0xf]
  %v188 = vld [vmem:[%s181 + $0x18] sm:$0xf]
  %v189 = vld [vmem:[%s181 + $0x1c] sm:$0xf]
  %v190 = vld [vmem:[%s181 + $0x20] sm:$0xf]
  %v191 = vld [vmem:[%s181 + $0x24] sm:$0xf]
  %v192 = vld [vmem:[%s181 + $0x28] sm:$0xf]
  %v193 = vld [vmem:[%s181 + $0x2c] sm:$0xf]
  %v194 = vld [vmem:[%s181 + $0x30] sm:$0xf]
  %v195 = vld [vmem:[%s181 + $0x34] sm:$0xf]
  %v196 = vld [vmem:[%s181 + $0x38] sm:$0xf]
  %v197 = vld [vmem:[%s181 + $0x3c] sm:$0xf]
  %s198 = scalar_lea.vmem %s6, 1
  %v199 = vld [vmem:[%s198] sm:$0x1]
  %v201 = vlaneseq
  %v202 = vshrl.u32 %v201, 7
  %v203 = vsub.s32 0, %v202
  %v204 = vrot.slane %v199, %v203
  %v222 = vunpack.c.l.b16 %v182
  %v223 = vunpack.c.l.b16 %v183
  %v224 = vunpack.c.l.b16 %v184
  %v225 = vunpack.c.l.b16 %v185
  %v226 = vunpack.c.l.b16 %v186
  %v227 = vunpack.c.l.b16 %v187
  %v228 = vunpack.c.l.b16 %v188
  %v229 = vunpack.c.l.b16 %v189
  %v230 = vunpack.c.l.b16 %v190
  %v231 = vunpack.c.l.b16 %v191
  %v232 = vunpack.c.l.b16 %v192
  %v233 = vunpack.c.l.b16 %v193
  %v234 = vunpack.c.l.b16 %v194
  %v235 = vunpack.c.l.b16 %v195
  %v236 = vunpack.c.l.b16 %v196
  %v237 = vunpack.c.l.b16 %v197
  %v238 = vpack.c.b16 %v223, %v222
  %v239 = vpack.c.b16 %v225, %v224
  %v240 = vpack.c.b16 %v227, %v226
  %v241 = vpack.c.b16 %v229, %v228
  %v242 = vpack.c.b16 %v231, %v230
  %v243 = vpack.c.b16 %v233, %v232
  %v244 = vpack.c.b16 %v235, %v234
  %v245 = vpack.c.b16 %v237, %v236
  %254 = vmatprep.subr.bf16.mxu0 0
  %255 = vmatpush1.bf16.msra.mxu0 %v238
  %256 = vmatprep.subr.bf16.mxu0 0
  %257 = vmatpush1.bf16.msra.mxu0 %v239
  %258 = vmatprep.subr.bf16.mxu0 0
  %259 = vmatpush1.bf16.msra.mxu0 %v240
  %260 = vmatprep.subr.bf16.mxu0 0
  %261 = vmatpush1.bf16.msra.mxu0 %v241
  %262 = vmatprep.subr.bf16.mxu0 0
  %263 = vmatpush1.bf16.msra.mxu0 %v242
  %264 = vmatprep.subr.bf16.mxu0 0
  %265 = vmatpush1.bf16.msra.mxu0 %v243
  %266 = vmatprep.subr.bf16.mxu0 0
  %267 = vmatpush1.bf16.msra.mxu0 %v244
  %268 = vmatprep.subr.bf16.mxu0 0
  %269 = vmatpush1.bf16.msra.mxu0 %v245
  %270 = vmatprep.subr.bf16.mxu0 0
  %271 = vmatpush1.bf16.msra.mxu0 0
  %272 = vmatprep.subr.bf16.mxu0 0
  %273 = vmatpush1.bf16.msra.mxu0 0
  %274 = vmatprep.subr.bf16.mxu0 0
  %275 = vmatpush1.bf16.msra.mxu0 0
  %276 = vmatprep.subr.bf16.mxu0 0
  %277 = vmatpush1.bf16.msra.mxu0 0
  %278 = vmatprep.subr.bf16.mxu0 0
  %279 = vmatpush1.bf16.msra.mxu0 0
  %280 = vmatprep.subr.bf16.mxu0 0
  %281 = vmatpush1.bf16.msra.mxu0 0
  %282 = vmatprep.subr.bf16.mxu0 0
  %283 = vmatpush1.bf16.msra.mxu0 0
  %284 = vmatprep.subr.bf16.mxu0 0
  %285 = vmatpush1.bf16.msra.mxu0 0
  %286 = vmatprep.mubr.bf16.mxu0 0
  %287 = vmatmul.mubr.bf16.gmra.mrb[0].mxu0 %v41
  %v288 = vpop.f32.mrb[0].mxu0
  %v289 = vadd.f32 %v204, %v288
  %v290 = vpop.f32.mrb[0].mxu0
  %v291 = vpop.f32.mrb[0].mxu0
  %v292 = vadd.f32 %v204, %v291
  %v293 = vpop.f32.mrb[0].mxu0
  %294 = vmatprep.mubr.bf16.mxu0 0
  %295 = vmatmul.mubr.bf16.gmra.mrb[0].mxu0 %v42
  %v296 = vpop.f32.mrb[0].mxu0
  %v297 = vadd.f32 %v204, %v296
  %v298 = vpop.f32.mrb[0].mxu0
  %v299 = vpop.f32.mrb[0].mxu0
  %v300 = vadd.f32 %v204, %v299
  %v301 = vpop.f32.mrb[0].mxu0
  %302 = vmatprep.mubr.bf16.mxu0 0
  %303 = vmatmul.mubr.bf16.gmra.mrb[0].mxu0 %v43
  %v304 = vpop.f32.mrb[0].mxu0
  %v305 = vadd.f32 %v204, %v304
  %v306 = vpop.f32.mrb[0].mxu0
  %v307 = vpop.f32.mrb[0].mxu0
  %v308 = vadd.f32 %v204, %v307
  %v309 = vpop.f32.mrb[0].mxu0
  %310 = vmatprep.mubr.bf16.mxu0 0
  %311 = vmatmul.mubr.bf16.gmra.mrb[0].mxu0 %v44
  %v312 = vpop.f32.mrb[0].mxu0
  %v313 = vadd.f32 %v204, %v312
  %v314 = vpop.f32.mrb[0].mxu0
  %v315 = vpop.f32.mrb[0].mxu0
  %v316 = vadd.f32 %v204, %v315
  %v317 = vpop.f32.mrb[0].mxu0
  %318 = vdwg.mxu0
  %s319 = scalar_lea.vmem %s4, 128
  %v320 = vld [vmem:[%s319] sm:$0xf]
  %v321 = vld [vmem:[%s319 + $0x4] sm:$0xf]
  %v322 = vld [vmem:[%s319 + $0x8] sm:$0xf]
  %v323 = vld [vmem:[%s319 + $0xc] sm:$0xf]
  %v324 = vld [vmem:[%s319 + $0x10] sm:$0xf]
  %v325 = vld [vmem:[%s319 + $0x14] sm:$0xf]
  %v326 = vld [vmem:[%s319 + $0x18] sm:$0xf]
  %v327 = vld [vmem:[%s319 + $0x1c] sm:$0xf]
  %v328 = vld [vmem:[%s319 + $0x20] sm:$0xf]
  %v329 = vld [vmem:[%s319 + $0x24] sm:$0xf]
  %v330 = vld [vmem:[%s319 + $0x28] sm:$0xf]
  %v331 = vld [vmem:[%s319 + $0x2c] sm:$0xf]
  %v332 = vld [vmem:[%s319 + $0x30] sm:$0xf]
  %v333 = vld [vmem:[%s319 + $0x34] sm:$0xf]
  %v334 = vld [vmem:[%s319 + $0x38] sm:$0xf]
  %v335 = vld [vmem:[%s319 + $0x3c] sm:$0xf]
  %s336 = scalar_lea.vmem %s6, 2
  %v337 = vld [vmem:[%s336] sm:$0x1]
  %v339 = vlaneseq
  %v340 = vshrl.u32 %v339, 7
  %v341 = vsub.s32 0, %v340
  %v342 = vrot.slane %v337, %v341
  %v360 = vunpack.c.l.b16 %v320
  %v361 = vunpack.c.l.b16 %v321
  %v362 = vunpack.c.l.b16 %v322
  %v363 = vunpack.c.l.b16 %v323
  %v364 = vunpack.c.l.b16 %v324
  %v365 = vunpack.c.l.b16 %v325
  %v366 = vunpack.c.l.b16 %v326
  %v367 = vunpack.c.l.b16 %v327
  %v368 = vunpack.c.l.b16 %v328
  %v369 = vunpack.c.l.b16 %v329
  %v370 = vunpack.c.l.b16 %v330
  %v371 = vunpack.c.l.b16 %v331
  %v372 = vunpack.c.l.b16 %v332
  %v373 = vunpack.c.l.b16 %v333
  %v374 = vunpack.c.l.b16 %v334
  %v375 = vunpack.c.l.b16 %v335
  %v376 = vpack.c.b16 %v361, %v360
  %v377 = vpack.c.b16 %v363, %v362
  %v378 = vpack.c.b16 %v365, %v364
  %v379 = vpack.c.b16 %v367, %v366
  %v380 = vpack.c.b16 %v369, %v368
  %v381 = vpack.c.b16 %v371, %v370
  %v382 = vpack.c.b16 %v373, %v372
  %v383 = vpack.c.b16 %v375, %v374
  %392 = vmatprep.subr.bf16.mxu0 0
  %393 = vmatpush1.bf16.msra.mxu0 %v376
  %394 = vmatprep.subr.bf16.mxu0 0
  %395 = vmatpush1.bf16.msra.mxu0 %v377
  %396 = vmatprep.subr.bf16.mxu0 0
  %397 = vmatpush1.bf16.msra.mxu0 %v378
  %398 = vmatprep.subr.bf16.mxu0 0
  %399 = vmatpush1.bf16.msra.mxu0 %v379
  %400 = vmatprep.subr.bf16.mxu0 0
  %401 = vmatpush1.bf16.msra.mxu0 %v380
  %402 = vmatprep.subr.bf16.mxu0 0
  %403 = vmatpush1.bf16.msra.mxu0 %v381
  %404 = vmatprep.subr.bf16.mxu0 0
  %405 = vmatpush1.bf16.msra.mxu0 %v382
  %406 = vmatprep.subr.bf16.mxu0 0
  %407 = vmatpush1.bf16.msra.mxu0 %v383
  %408 = vmatprep.subr.bf16.mxu0 0
  %409 = vmatpush1.bf16.msra.mxu0 0
  %410 = vmatprep.subr.bf16.mxu0 0
  %411 = vmatpush1.bf16.msra.mxu0 0
  %412 = vmatprep.subr.bf16.mxu0 0
  %413 = vmatpush1.bf16.msra.mxu0 0
  %414 = vmatprep.subr.bf16.mxu0 0
  %415 = vmatpush1.bf16.msra.mxu0 0
  %416 = vmatprep.subr.bf16.mxu0 0
  %417 = vmatpush1.bf16.msra.mxu0 0
  %418 = vmatprep.subr.bf16.mxu0 0
  %419 = vmatpush1.bf16.msra.mxu0 0
  %420 = vmatprep.subr.bf16.mxu0 0
  %421 = vmatpush1.bf16.msra.mxu0 0
  %422 = vmatprep.subr.bf16.mxu0 0
  %423 = vmatpush1.bf16.msra.mxu0 0
  %424 = vmatprep.mubr.bf16.mxu0 0
  %425 = vmatmul.mubr.bf16.gmra.mrb[0].mxu0 %v41
  %v426 = vpop.f32.mrb[0].mxu0
  %v427 = vadd.f32 %v342, %v426
  %v428 = vpop.f32.mrb[0].mxu0
  %v429 = vpop.f32.mrb[0].mxu0
  %v430 = vadd.f32 %v342, %v429
  %v431 = vpop.f32.mrb[0].mxu0
  %432 = vmatprep.mubr.bf16.mxu0 0
  %433 = vmatmul.mubr.bf16.gmra.mrb[0].mxu0 %v42
  %v434 = vpop.f32.mrb[0].mxu0
  %v435 = vadd.f32 %v342, %v434
  %v436 = vpop.f32.mrb[0].mxu0
  %v437 = vpop.f32.mrb[0].mxu0
  %v438 = vadd.f32 %v342, %v437
  %v439 = vpop.f32.mrb[0].mxu0
  %440 = vmatprep.mubr.bf16.mxu0 0
  %441 = vmatmul.mubr.bf16.gmra.mrb[0].mxu0 %v43
  %v442 = vpop.f32.mrb[0].mxu0
  %v443 = vadd.f32 %v342, %v442
  %v444 = vpop.f32.mrb[0].mxu0
  %v445 = vpop.f32.mrb[0].mxu0
  %v446 = vadd.f32 %v342, %v445
  %v447 = vpop.f32.mrb[0].mxu0
  %448 = vmatprep.mubr.bf16.mxu0 0
  %449 = vmatmul.mubr.bf16.gmra.mrb[0].mxu0 %v44
  %v450 = vpop.f32.mrb[0].mxu0
  %v451 = vadd.f32 %v342, %v450
  %v452 = vpop.f32.mrb[0].mxu0
  %v453 = vpop.f32.mrb[0].mxu0
  %v454 = vadd.f32 %v342, %v453
  %v455 = vpop.f32.mrb[0].mxu0
  %456 = vdwg.mxu0
  %s457 = scalar_lea.vmem %s4, 192
  %v458 = vld [vmem:[%s457] sm:$0xf]
  %v459 = vld [vmem:[%s457 + $0x4] sm:$0xf]
  %v460 = vld [vmem:[%s457 + $0x8] sm:$0xf]
  %v461 = vld [vmem:[%s457 + $0xc] sm:$0xf]
  %v462 = vld [vmem:[%s457 + $0x10] sm:$0xf]
  %v463 = vld [vmem:[%s457 + $0x14] sm:$0xf]
  %v464 = vld [vmem:[%s457 + $0x18] sm:$0xf]
  %v465 = vld [vmem:[%s457 + $0x1c] sm:$0xf]
  %v466 = vld [vmem:[%s457 + $0x20] sm:$0xf]
  %v467 = vld [vmem:[%s457 + $0x24] sm:$0xf]
  %v468 = vld [vmem:[%s457 + $0x28] sm:$0xf]
  %v469 = vld [vmem:[%s457 + $0x2c] sm:$0xf]
  %v470 = vld [vmem:[%s457 + $0x30] sm:$0xf]
  %v471 = vld [vmem:[%s457 + $0x34] sm:$0xf]
  %v472 = vld [vmem:[%s457 + $0x38] sm:$0xf]
  %v473 = vld [vmem:[%s457 + $0x3c] sm:$0xf]
  %s474 = scalar_lea.vmem %s6, 3
  %v475 = vld [vmem:[%s474] sm:$0x1]
  %v477 = vlaneseq
  %v478 = vshrl.u32 %v477, 7
  %v479 = vsub.s32 0, %v478
  %v480 = vrot.slane %v475, %v479
  %v498 = vunpack.c.l.b16 %v458
  %v499 = vunpack.c.l.b16 %v459
  %v500 = vunpack.c.l.b16 %v460
  %v501 = vunpack.c.l.b16 %v461
  %v502 = vunpack.c.l.b16 %v462
  %v503 = vunpack.c.l.b16 %v463
  %v504 = vunpack.c.l.b16 %v464
  %v505 = vunpack.c.l.b16 %v465
  %v506 = vunpack.c.l.b16 %v466
  %v507 = vunpack.c.l.b16 %v467
  %v508 = vunpack.c.l.b16 %v468
  %v509 = vunpack.c.l.b16 %v469
  %v510 = vunpack.c.l.b16 %v470
  %v511 = vunpack.c.l.b16 %v471
  %v512 = vunpack.c.l.b16 %v472
  %v513 = vunpack.c.l.b16 %v473
  %v514 = vpack.c.b16 %v499, %v498
  %v515 = vpack.c.b16 %v501, %v500
  %v516 = vpack.c.b16 %v503, %v502
  %v517 = vpack.c.b16 %v505, %v504
  %v518 = vpack.c.b16 %v507, %v506
  %v519 = vpack.c.b16 %v509, %v508
  %v520 = vpack.c.b16 %v511, %v510
  %v521 = vpack.c.b16 %v513, %v512
  %530 = vmatprep.subr.bf16.mxu0 0
  %531 = vmatpush1.bf16.msra.mxu0 %v514
  %532 = vmatprep.subr.bf16.mxu0 0
  %533 = vmatpush1.bf16.msra.mxu0 %v515
  %534 = vmatprep.subr.bf16.mxu0 0
  %535 = vmatpush1.bf16.msra.mxu0 %v516
  %536 = vmatprep.subr.bf16.mxu0 0
  %537 = vmatpush1.bf16.msra.mxu0 %v517
  %538 = vmatprep.subr.bf16.mxu0 0
  %539 = vmatpush1.bf16.msra.mxu0 %v518
  %540 = vmatprep.subr.bf16.mxu0 0
  %541 = vmatpush1.bf16.msra.mxu0 %v519
  %542 = vmatprep.subr.bf16.mxu0 0
  %543 = vmatpush1.bf16.msra.mxu0 %v520
  %544 = vmatprep.subr.bf16.mxu0 0
  %545 = vmatpush1.bf16.msra.mxu0 %v521
  %546 = vmatprep.subr.bf16.mxu0 0
  %547 = vmatpush1.bf16.msra.mxu0 0
  %548 = vmatprep.subr.bf16.mxu0 0
  %549 = vmatpush1.bf16.msra.mxu0 0
  %550 = vmatprep.subr.bf16.mxu0 0
  %551 = vmatpush1.bf16.msra.mxu0 0
  %552 = vmatprep.subr.bf16.mxu0 0
  %553 = vmatpush1.bf16.msra.mxu0 0
  %554 = vmatprep.subr.bf16.mxu0 0
  %555 = vmatpush1.bf16.msra.mxu0 0
  %556 = vmatprep.subr.bf16.mxu0 0
  %557 = vmatpush1.bf16.msra.mxu0 0
  %558 = vmatprep.subr.bf16.mxu0 0
  %559 = vmatpush1.bf16.msra.mxu0 0
  %560 = vmatprep.subr.bf16.mxu0 0
  %561 = vmatpush1.bf16.msra.mxu0 0
  %562 = vmatprep.mubr.bf16.mxu0 0
  %563 = vmatmul.mubr.bf16.gmra.mrb[0].mxu0 %v41
  %v564 = vpop.f32.mrb[0].mxu0
  %v565 = vadd.f32 %v480, %v564
  %v566 = vpop.f32.mrb[0].mxu0
  %v567 = vpop.f32.mrb[0].mxu0
  %v568 = vadd.f32 %v480, %v567
  %v569 = vpop.f32.mrb[0].mxu0
  %570 = vmatprep.mubr.bf16.mxu0 0
  %571 = vmatmul.mubr.bf16.gmra.mrb[0].mxu0 %v42
  %v572 = vpop.f32.mrb[0].mxu0
  %v573 = vadd.f32 %v480, %v572
  %v574 = vpop.f32.mrb[0].mxu0
  %v575 = vpop.f32.mrb[0].mxu0
  %v576 = vadd.f32 %v480, %v575
  %v577 = vpop.f32.mrb[0].mxu0
  %578 = vmatprep.mubr.bf16.mxu0 0
  %579 = vmatmul.mubr.bf16.gmra.mrb[0].mxu0 %v43
  %v580 = vpop.f32.mrb[0].mxu0
  %v581 = vadd.f32 %v480, %v580
  %v582 = vpop.f32.mrb[0].mxu0
  %v583 = vpop.f32.mrb[0].mxu0
  %v584 = vadd.f32 %v480, %v583
  %v585 = vpop.f32.mrb[0].mxu0
  %586 = vmatprep.mubr.bf16.mxu0 0
  %587 = vmatmul.mubr.bf16.gmra.mrb[0].mxu0 %v44
  %v588 = vpop.f32.mrb[0].mxu0
  %v589 = vadd.f32 %v480, %v588
  %v590 = vpop.f32.mrb[0].mxu0
  %v591 = vpop.f32.mrb[0].mxu0
  %v592 = vadd.f32 %v480, %v591
  %v593 = vpop.f32.mrb[0].mxu0
  %594 = vdwg.mxu0
  %v595 = vld [vmem:[%s5] sm:$0xf]
  %v596 = vld [vmem:[%s5 + $0x4] sm:$0xf]
  %v597 = vld [vmem:[%s5 + $0x8] sm:$0xf]
  %v598 = vld [vmem:[%s5 + $0xc] sm:$0xf]
  %s599 = scalar_lea.vmem %s5, 16
  %v600 = vld [vmem:[%s599] sm:$0xf]
  %v601 = vld [vmem:[%s599 + $0x4] sm:$0xf]
  %v602 = vld [vmem:[%s599 + $0x8] sm:$0xf]
  %v603 = vld [vmem:[%s599 + $0xc] sm:$0xf]
  %s604 = scalar_lea.vmem %s5, 32
  %v605 = vld [vmem:[%s604] sm:$0xf]
  %v606 = vld [vmem:[%s604 + $0x4] sm:$0xf]
  %v607 = vld [vmem:[%s604 + $0x8] sm:$0xf]
  %v608 = vld [vmem:[%s604 + $0xc] sm:$0xf]
  %s609 = scalar_lea.vmem %s5, 48
  %v610 = vld [vmem:[%s609] sm:$0xf]
  %v611 = vld [vmem:[%s609 + $0x4] sm:$0xf]
  %v612 = vld [vmem:[%s609 + $0x8] sm:$0xf]
  %v613 = vld [vmem:[%s609 + $0xc] sm:$0xf]
  %v614 = vld [vmem:[%s1] sm:$0xff]
  %v615 = vld [vmem:[%s2] sm:$0xff]
  %v616 = vld [vmem:[%s3] sm:$0xff]
  %v617 = vpack.c.bf16 %v615, %v615
  %v622 = vunpack.c.l.b16 %v595
  %v623 = vunpack.c.l.b16 %v596
  %v624 = vunpack.c.l.b16 %v597
  %v625 = vunpack.c.l.b16 %v598
  %v626 = vpack.c.b16 %v623, %v622
  %v627 = vpack.c.b16 %v625, %v624
  %vm630 = vcmask 261120
  %v632 = vsel %vm630, %v617, 0
  %634 = vmatprep.subr.bf16.mxu0 0
  %635 = vmatpush1.bf16.msra.mxu0 %v626
  %636 = vmatprep.subr.bf16.mxu0 0
  %637 = vmatpush1.bf16.msra.mxu0 %v627
  %638 = vmatprep.subr.bf16.mxu0 0
  %639 = vmatpush1.bf16.msra.mxu0 0
  %640 = vmatprep.subr.bf16.mxu0 0
  %641 = vmatpush1.bf16.msra.mxu0 0
  %642 = vmatprep.subr.bf16.mxu0 0
  %643 = vmatpush1.bf16.msra.mxu0 0
  %644 = vmatprep.subr.bf16.mxu0 0
  %645 = vmatpush1.bf16.msra.mxu0 0
  %646 = vmatprep.subr.bf16.mxu0 0
  %647 = vmatpush1.bf16.msra.mxu0 0
  %648 = vmatprep.subr.bf16.mxu0 0
  %649 = vmatpush1.bf16.msra.mxu0 0
  %650 = vmatprep.subr.bf16.mxu0 0
  %651 = vmatpush1.bf16.msra.mxu0 0
  %652 = vmatprep.subr.bf16.mxu0 0
  %653 = vmatpush1.bf16.msra.mxu0 0
  %654 = vmatprep.subr.bf16.mxu0 0
  %655 = vmatpush1.bf16.msra.mxu0 0
  %656 = vmatprep.subr.bf16.mxu0 0
  %657 = vmatpush1.bf16.msra.mxu0 0
  %658 = vmatprep.subr.bf16.mxu0 0
  %659 = vmatpush1.bf16.msra.mxu0 0
  %660 = vmatprep.subr.bf16.mxu0 0
  %661 = vmatpush1.bf16.msra.mxu0 0
  %662 = vmatprep.subr.bf16.mxu0 0
  %663 = vmatpush1.bf16.msra.mxu0 0
  %664 = vmatprep.subr.bf16.mxu0 0
  %665 = vmatpush1.bf16.msra.mxu0 0
  %666 = vmatprep.mubr.bf16.mxu0 0
  %667 = vmatmul.mubr.bf16.gmra.mrb[0].mxu0 %v632
  %v668 = vpop.f32.mrb[0].mxu0
  %v669 = vadd.f32 0.0, %v668
  %v670 = vpop.f32.mrb[0].mxu0
  %v671 = vpop.f32.mrb[0].mxu0
  %v672 = vpop.f32.mrb[0].mxu0
  %673 = vdwg.mxu0
  %v674 = vadd.f32 %v151, %v669
  %v675 = vxor.u32 %v674, 2147483648
  %v676 = vmul.f32 %v675, 1.442695
  %v677 = vpow.pop %v676
  %v678 = vadd.f32 %v677, 1.0
  %v679 = vrcp.pop %v678
  %v680 = vmul.f32 1.0, %v679
  %v685 = vunpack.c.l.b16 %v600
  %v686 = vunpack.c.l.b16 %v601
  %v687 = vunpack.c.l.b16 %v602
  %v688 = vunpack.c.l.b16 %v603
  %v689 = vpack.c.b16 %v686, %v685
  %v690 = vpack.c.b16 %v688, %v687
  %693 = vmatprep.subr.bf16.mxu0 0
  %694 = vmatpush1.bf16.msra.mxu0 %v689
  %695 = vmatprep.subr.bf16.mxu0 0
  %696 = vmatpush1.bf16.msra.mxu0 %v690
  %697 = vmatprep.subr.bf16.mxu0 0
  %698 = vmatpush1.bf16.msra.mxu0 0
  %699 = vmatprep.subr.bf16.mxu0 0
  %700 = vmatpush1.bf16.msra.mxu0 0
  %701 = vmatprep.subr.bf16.mxu0 0
  %702 = vmatpush1.bf16.msra.mxu0 0
  %703 = vmatprep.subr.bf16.mxu0 0
  %704 = vmatpush1.bf16.msra.mxu0 0
  %705 = vmatprep.subr.bf16.mxu0 0
  %706 = vmatpush1.bf16.msra.mxu0 0
  %707 = vmatprep.subr.bf16.mxu0 0
  %708 = vmatpush1.bf16.msra.mxu0 0
  %709 = vmatprep.subr.bf16.mxu0 0
  %710 = vmatpush1.bf16.msra.mxu0 0
  %711 = vmatprep.subr.bf16.mxu0 0
  %712 = vmatpush1.bf16.msra.mxu0 0
  %713 = vmatprep.subr.bf16.mxu0 0
  %714 = vmatpush1.bf16.msra.mxu0 0
  %715 = vmatprep.subr.bf16.mxu0 0
  %716 = vmatpush1.bf16.msra.mxu0 0
  %717 = vmatprep.subr.bf16.mxu0 0
  %718 = vmatpush1.bf16.msra.mxu0 0
  %719 = vmatprep.subr.bf16.mxu0 0
  %720 = vmatpush1.bf16.msra.mxu0 0
  %721 = vmatprep.subr.bf16.mxu0 0
  %722 = vmatpush1.bf16.msra.mxu0 0
  %723 = vmatprep.subr.bf16.mxu0 0
  %724 = vmatpush1.bf16.msra.mxu0 0
  %725 = vmatprep.mubr.bf16.mxu0 0
  %726 = vmatmul.mubr.bf16.gmra.mrb[0].mxu0 %v632
  %v727 = vpop.f32.mrb[0].mxu0
  %v728 = vadd.f32 0.0, %v727
  %v729 = vpop.f32.mrb[0].mxu0
  %v730 = vpop.f32.mrb[0].mxu0
  %v731 = vpop.f32.mrb[0].mxu0
  %732 = vdwg.mxu0
  %v733 = vadd.f32 %v289, %v728
  %v734 = vxor.u32 %v733, 2147483648
  %v735 = vmul.f32 %v734, 1.442695
  %v736 = vpow.pop %v735
  %v737 = vadd.f32 %v736, 1.0
  %v738 = vrcp.pop %v737
  %v739 = vmul.f32 1.0, %v738
  %v744 = vunpack.c.l.b16 %v605
  %v745 = vunpack.c.l.b16 %v606
  %v746 = vunpack.c.l.b16 %v607
  %v747 = vunpack.c.l.b16 %v608
  %v748 = vpack.c.b16 %v745, %v744
  %v749 = vpack.c.b16 %v747, %v746
  %752 = vmatprep.subr.bf16.mxu0 0
  %753 = vmatpush1.bf16.msra.mxu0 %v748
  %754 = vmatprep.subr.bf16.mxu0 0
  %755 = vmatpush1.bf16.msra.mxu0 %v749
  %756 = vmatprep.subr.bf16.mxu0 0
  %757 = vmatpush1.bf16.msra.mxu0 0
  %758 = vmatprep.subr.bf16.mxu0 0
  %759 = vmatpush1.bf16.msra.mxu0 0
  %760 = vmatprep.subr.bf16.mxu0 0
  %761 = vmatpush1.bf16.msra.mxu0 0
  %762 = vmatprep.subr.bf16.mxu0 0
  %763 = vmatpush1.bf16.msra.mxu0 0
  %764 = vmatprep.subr.bf16.mxu0 0
  %765 = vmatpush1.bf16.msra.mxu0 0
  %766 = vmatprep.subr.bf16.mxu0 0
  %767 = vmatpush1.bf16.msra.mxu0 0
  %768 = vmatprep.subr.bf16.mxu0 0
  %769 = vmatpush1.bf16.msra.mxu0 0
  %770 = vmatprep.subr.bf16.mxu0 0
  %771 = vmatpush1.bf16.msra.mxu0 0
  %772 = vmatprep.subr.bf16.mxu0 0
  %773 = vmatpush1.bf16.msra.mxu0 0
  %774 = vmatprep.subr.bf16.mxu0 0
  %775 = vmatpush1.bf16.msra.mxu0 0
  %776 = vmatprep.subr.bf16.mxu0 0
  %777 = vmatpush1.bf16.msra.mxu0 0
  %778 = vmatprep.subr.bf16.mxu0 0
  %779 = vmatpush1.bf16.msra.mxu0 0
  %780 = vmatprep.subr.bf16.mxu0 0
  %781 = vmatpush1.bf16.msra.mxu0 0
  %782 = vmatprep.subr.bf16.mxu0 0
  %783 = vmatpush1.bf16.msra.mxu0 0
  %784 = vmatprep.mubr.bf16.mxu0 0
  %785 = vmatmul.mubr.bf16.gmra.mrb[0].mxu0 %v632
  %v786 = vpop.f32.mrb[0].mxu0
  %v787 = vadd.f32 0.0, %v786
  %v788 = vpop.f32.mrb[0].mxu0
  %v789 = vpop.f32.mrb[0].mxu0
  %v790 = vpop.f32.mrb[0].mxu0
  %791 = vdwg.mxu0
  %v792 = vadd.f32 %v427, %v787
  %v793 = vtanh.pop %v792
  %v798 = vunpack.c.l.b16 %v610
  %v799 = vunpack.c.l.b16 %v611
  %v800 = vunpack.c.l.b16 %v612
  %v801 = vunpack.c.l.b16 %v613
  %v802 = vpack.c.b16 %v799, %v798
  %v803 = vpack.c.b16 %v801, %v800
  %806 = vmatprep.subr.bf16.mxu0 0
  %807 = vmatpush1.bf16.msra.mxu0 %v802
  %808 = vmatprep.subr.bf16.mxu0 0
  %809 = vmatpush1.bf16.msra.mxu0 %v803
  %810 = vmatprep.subr.bf16.mxu0 0
  %811 = vmatpush1.bf16.msra.mxu0 0
  %812 = vmatprep.subr.bf16.mxu0 0
  %813 = vmatpush1.bf16.msra.mxu0 0
  %814 = vmatprep.subr.bf16.mxu0 0
  %815 = vmatpush1.bf16.msra.mxu0 0
  %816 = vmatprep.subr.bf16.mxu0 0
  %817 = vmatpush1.bf16.msra.mxu0 0
  %818 = vmatprep.subr.bf16.mxu0 0
  %819 = vmatpush1.bf16.msra.mxu0 0
  %820 = vmatprep.subr.bf16.mxu0 0
  %821 = vmatpush1.bf16.msra.mxu0 0
  %822 = vmatprep.subr.bf16.mxu0 0
  %823 = vmatpush1.bf16.msra.mxu0 0
  %824 = vmatprep.subr.bf16.mxu0 0
  %825 = vmatpush1.bf16.msra.mxu0 0
  %826 = vmatprep.subr.bf16.mxu0 0
  %827 = vmatpush1.bf16.msra.mxu0 0
  %828 = vmatprep.subr.bf16.mxu0 0
  %829 = vmatpush1.bf16.msra.mxu0 0
  %830 = vmatprep.subr.bf16.mxu0 0
  %831 = vmatpush1.bf16.msra.mxu0 0
  %832 = vmatprep.subr.bf16.mxu0 0
  %833 = vmatpush1.bf16.msra.mxu0 0
  %834 = vmatprep.subr.bf16.mxu0 0
  %835 = vmatpush1.bf16.msra.mxu0 0
  %836 = vmatprep.subr.bf16.mxu0 0
  %837 = vmatpush1.bf16.msra.mxu0 0
  %838 = vmatprep.mubr.bf16.mxu0 0
  %839 = vmatmul.mubr.bf16.gmra.mrb[0].mxu0 %v632
  %v840 = vpop.f32.mrb[0].mxu0
  %v841 = vadd.f32 0.0, %v840
  %v842 = vpop.f32.mrb[0].mxu0
  %v843 = vpop.f32.mrb[0].mxu0
  %v844 = vpop.f32.mrb[0].mxu0
  %845 = vdwg.mxu0
  %v846 = vadd.f32 %v565, %v841
  %v847 = vxor.u32 %v846, 2147483648
  %v848 = vmul.f32 %v847, 1.442695
  %v849 = vpow.pop %v848
  %v850 = vadd.f32 %v849, 1.0
  %v851 = vrcp.pop %v850
  %v852 = vmul.f32 1.0, %v851
  %v853 = vmul.f32 %v739, %v616
  %v854 = vmul.f32 %v680, %v793
  %v855 = vadd.f32 %v853, %v854
  %v856 = vtanh.pop %v855
  %v857 = vmul.f32 %v852, %v856
  %vm858 = vcmp.gt.s32.totalorder %v614, 0
  %v859 = vsel %vm858, 1, 0
  %860 = vset.pattern.permute.xlu0 0
  %861 = vperm.xlu0 %860, %v859
  %v862 = vpop.permute.xlu0 %861
  %vm863 = vcmp.eq.s32.totalorder %v862, 1
  %v864 = vsel %vm863, %v857, %v615
  %v865 = vsel %vm863, %v855, %v616
  %v866 = vpack.c.bf16 %v864, %v864
  %v868 = vsel %vm630, %v866, 0
  %870 = vmatprep.subr.bf16.mxu0 0
  %871 = vmatpush1.bf16.msra.mxu0 %v626
  %872 = vmatprep.subr.bf16.mxu0 0
  %873 = vmatpush1.bf16.msra.mxu0 %v627
  %874 = vmatprep.subr.bf16.mxu0 0
  %875 = vmatpush1.bf16.msra.mxu0 0
  %876 = vmatprep.subr.bf16.mxu0 0
  %877 = vmatpush1.bf16.msra.mxu0 0
  %878 = vmatprep.subr.bf16.mxu0 0
  %879 = vmatpush1.bf16.msra.mxu0 0
  %880 = vmatprep.subr.bf16.mxu0 0
  %881 = vmatpush1.bf16.msra.mxu0 0
  %882 = vmatprep.subr.bf16.mxu0 0
  %883 = vmatpush1.bf16.msra.mxu0 0
  %884 = vmatprep.subr.bf16.mxu0 0
  %885 = vmatpush1.bf16.msra.mxu0 0
  %886 = vmatprep.subr.bf16.mxu0 0
  %887 = vmatpush1.bf16.msra.mxu0 0
  %888 = vmatprep.subr.bf16.mxu0 0
  %889 = vmatpush1.bf16.msra.mxu0 0
  %890 = vmatprep.subr.bf16.mxu0 0
  %891 = vmatpush1.bf16.msra.mxu0 0
  %892 = vmatprep.subr.bf16.mxu0 0
  %893 = vmatpush1.bf16.msra.mxu0 0
  %894 = vmatprep.subr.bf16.mxu0 0
  %895 = vmatpush1.bf16.msra.mxu0 0
  %896 = vmatprep.subr.bf16.mxu0 0
  %897 = vmatpush1.bf16.msra.mxu0 0
  %898 = vmatprep.subr.bf16.mxu0 0
  %899 = vmatpush1.bf16.msra.mxu0 0
  %900 = vmatprep.subr.bf16.mxu0 0
  %901 = vmatpush1.bf16.msra.mxu0 0
  %902 = vmatprep.mubr.bf16.mxu0 0
  %903 = vmatmul.mubr.bf16.gmra.mrb[0].mxu0 %v868
  %v904 = vpop.f32.mrb[0].mxu0
  %v905 = vadd.f32 0.0, %v904
  %v906 = vpop.f32.mrb[0].mxu0
  %v907 = vpop.f32.mrb[0].mxu0
  %v908 = vpop.f32.mrb[0].mxu0
  %909 = vdwg.mxu0
  %v910 = vadd.f32 %v154, %v905
  %v911 = vxor.u32 %v910, 2147483648
  %v912 = vmul.f32 %v911, 1.442695
  %v913 = vpow.pop %v912
  %v914 = vadd.f32 %v913, 1.0
  %v915 = vrcp.pop %v914
  %v916 = vmul.f32 1.0, %v915
  %917 = vmatprep.subr.bf16.mxu0 0
  %918 = vmatpush1.bf16.msra.mxu0 %v689
  %919 = vmatprep.subr.bf16.mxu0 0
  %920 = vmatpush1.bf16.msra.mxu0 %v690
  %921 = vmatprep.subr.bf16.mxu0 0
  %922 = vmatpush1.bf16.msra.mxu0 0
  %923 = vmatprep.subr.bf16.mxu0 0
  %924 = vmatpush1.bf16.msra.mxu0 0
  %925 = vmatprep.subr.bf16.mxu0 0
  %926 = vmatpush1.bf16.msra.mxu0 0
  %927 = vmatprep.subr.bf16.mxu0 0
  %928 = vmatpush1.bf16.msra.mxu0 0
  %929 = vmatprep.subr.bf16.mxu0 0
  %930 = vmatpush1.bf16.msra.mxu0 0
  %931 = vmatprep.subr.bf16.mxu0 0
  %932 = vmatpush1.bf16.msra.mxu0 0
  %933 = vmatprep.subr.bf16.mxu0 0
  %934 = vmatpush1.bf16.msra.mxu0 0
  %935 = vmatprep.subr.bf16.mxu0 0
  %936 = vmatpush1.bf16.msra.mxu0 0
  %937 = vmatprep.subr.bf16.mxu0 0
  %938 = vmatpush1.bf16.msra.mxu0 0
  %939 = vmatprep.subr.bf16.mxu0 0
  %940 = vmatpush1.bf16.msra.mxu0 0
  %941 = vmatprep.subr.bf16.mxu0 0
  %942 = vmatpush1.bf16.msra.mxu0 0
  %943 = vmatprep.subr.bf16.mxu0 0
  %944 = vmatpush1.bf16.msra.mxu0 0
  %945 = vmatprep.subr.bf16.mxu0 0
  %946 = vmatpush1.bf16.msra.mxu0 0
  %947 = vmatprep.subr.bf16.mxu0 0
  %948 = vmatpush1.bf16.msra.mxu0 0
  %949 = vmatprep.mubr.bf16.mxu0 0
  %950 = vmatmul.mubr.bf16.gmra.mrb[0].mxu0 %v868
  %v951 = vpop.f32.mrb[0].mxu0
  %v952 = vadd.f32 0.0, %v951
  %v953 = vpop.f32.mrb[0].mxu0
  %v954 = vpop.f32.mrb[0].mxu0
  %v955 = vpop.f32.mrb[0].mxu0
  %956 = vdwg.mxu0
  %v957 = vadd.f32 %v292, %v952
  %v958 = vxor.u32 %v957, 2147483648
  %v959 = vmul.f32 %v958, 1.442695
  %v960 = vpow.pop %v959
  %v961 = vadd.f32 %v960, 1.0
  %v962 = vrcp.pop %v961
  %v963 = vmul.f32 1.0, %v962
  %964 = vmatprep.subr.bf16.mxu0 0
  %965 = vmatpush1.bf16.msra.mxu0 %v748
  %966 = vmatprep.subr.bf16.mxu0 0
  %967 = vmatpush1.bf16.msra.mxu0 %v749
  %968 = vmatprep.subr.bf16.mxu0 0
  %969 = vmatpush1.bf16.msra.mxu0 0
  %970 = vmatprep.subr.bf16.mxu0 0
  %971 = vmatpush1.bf16.msra.mxu0 0
  %972 = vmatprep.subr.bf16.mxu0 0
  %973 = vmatpush1.bf16.msra.mxu0 0
  %974 = vmatprep.subr.bf16.mxu0 0
  %975 = vmatpush1.bf16.msra.mxu0 0
  %976 = vmatprep.subr.bf16.mxu0 0
  %977 = vmatpush1.bf16.msra.mxu0 0
  %978 = vmatprep.subr.bf16.mxu0 0
  %979 = vmatpush1.bf16.msra.mxu0 0
  %980 = vmatprep.subr.bf16.mxu0 0
  %981 = vmatpush1.bf16.msra.mxu0 0
  %982 = vmatprep.subr.bf16.mxu0 0
  %983 = vmatpush1.bf16.msra.mxu0 0
  %984 = vmatprep.subr.bf16.mxu0 0
  %985 = vmatpush1.bf16.msra.mxu0 0
  %986 = vmatprep.subr.bf16.mxu0 0
  %987 = vmatpush1.bf16.msra.mxu0 0
  %988 = vmatprep.subr.bf16.mxu0 0
  %989 = vmatpush1.bf16.msra.mxu0 0
  %990 = vmatprep.subr.bf16.mxu0 0
  %991 = vmatpush1.bf16.msra.mxu0 0
  %992 = vmatprep.subr.bf16.mxu0 0
  %993 = vmatpush1.bf16.msra.mxu0 0
  %994 = vmatprep.subr.bf16.mxu0 0
  %995 = vmatpush1.bf16.msra.mxu0 0
  %996 = vmatprep.mubr.bf16.mxu0 0
  %997 = vmatmul.mubr.bf16.gmra.mrb[0].mxu0 %v868
  %v998 = vpop.f32.mrb[0].mxu0
  %v999 = vadd.f32 0.0, %v998
  %v1000 = vpop.f32.mrb[0].mxu0
  %v1001 = vpop.f32.mrb[0].mxu0
  %v1002 = vpop.f32.mrb[0].mxu0
  %1003 = vdwg.mxu0
  %v1004 = vadd.f32 %v430, %v999
  %v1005 = vtanh.pop %v1004
  %1006 = vmatprep.subr.bf16.mxu0 0
  %1007 = vmatpush1.bf16.msra.mxu0 %v802
  %1008 = vmatprep.subr.bf16.mxu0 0
  %1009 = vmatpush1.bf16.msra.mxu0 %v803
  %1010 = vmatprep.subr.bf16.mxu0 0
  %1011 = vmatpush1.bf16.msra.mxu0 0
  %1012 = vmatprep.subr.bf16.mxu0 0
  %1013 = vmatpush1.bf16.msra.mxu0 0
  %1014 = vmatprep.subr.bf16.mxu0 0
  %1015 = vmatpush1.bf16.msra.mxu0 0
  %1016 = vmatprep.subr.bf16.mxu0 0
  %1017 = vmatpush1.bf16.msra.mxu0 0
  %1018 = vmatprep.subr.bf16.mxu0 0
  %1019 = vmatpush1.bf16.msra.mxu0 0
  %1020 = vmatprep.subr.bf16.mxu0 0
  %1021 = vmatpush1.bf16.msra.mxu0 0
  %1022 = vmatprep.subr.bf16.mxu0 0
  %1023 = vmatpush1.bf16.msra.mxu0 0
  %1024 = vmatprep.subr.bf16.mxu0 0
  %1025 = vmatpush1.bf16.msra.mxu0 0
  %1026 = vmatprep.subr.bf16.mxu0 0
  %1027 = vmatpush1.bf16.msra.mxu0 0
  %1028 = vmatprep.subr.bf16.mxu0 0
  %1029 = vmatpush1.bf16.msra.mxu0 0
  %1030 = vmatprep.subr.bf16.mxu0 0
  %1031 = vmatpush1.bf16.msra.mxu0 0
  %1032 = vmatprep.subr.bf16.mxu0 0
  %1033 = vmatpush1.bf16.msra.mxu0 0
  %1034 = vmatprep.subr.bf16.mxu0 0
  %1035 = vmatpush1.bf16.msra.mxu0 0
  %1036 = vmatprep.subr.bf16.mxu0 0
  %1037 = vmatpush1.bf16.msra.mxu0 0
  %1038 = vmatprep.mubr.bf16.mxu0 0
  %1039 = vmatmul.mubr.bf16.gmra.mrb[0].mxu0 %v868
  %v1040 = vpop.f32.mrb[0].mxu0
  %v1041 = vadd.f32 0.0, %v1040
  %v1042 = vpop.f32.mrb[0].mxu0
  %v1043 = vpop.f32.mrb[0].mxu0
  %v1044 = vpop.f32.mrb[0].mxu0
  %1045 = vdwg.mxu0
  %v1046 = vadd.f32 %v568, %v1041
  %v1047 = vxor.u32 %v1046, 2147483648
  %v1048 = vmul.f32 %v1047, 1.442695
  %v1049 = vpow.pop %v1048
  %v1050 = vadd.f32 %v1049, 1.0
  %v1051 = vrcp.pop %v1050
  %v1052 = vmul.f32 1.0, %v1051
  %v1053 = vmul.f32 %v963, %v865
  %v1054 = vmul.f32 %v916, %v1005
  %v1055 = vadd.f32 %v1053, %v1054
  %v1056 = vtanh.pop %v1055
  %v1057 = vmul.f32 %v1052, %v1056
  %vm1058 = vcmp.gt.s32.totalorder %v614, 1
  %v1059 = vsel %vm1058, 1, 0
  %1060 = vset.pattern.permute.xlu0 0
  %1061 = vperm.xlu0 %1060, %v1059
  %v1062 = vpop.permute.xlu0 %1061
  %vm1063 = vcmp.eq.s32.totalorder %v1062, 1
  %v1064 = vsel %vm1063, %v1057, %v864
  %v1065 = vsel %vm1063, %v1055, %v865
  %v1066 = vpack.c.bf16 %v1064, %v1064
  %v1068 = vsel %vm630, %v1066, 0
  %1070 = vmatprep.subr.bf16.mxu0 0
  %1071 = vmatpush1.bf16.msra.mxu0 %v626
  %1072 = vmatprep.subr.bf16.mxu0 0
  %1073 = vmatpush1.bf16.msra.mxu0 %v627
  %1074 = vmatprep.subr.bf16.mxu0 0
  %1075 = vmatpush1.bf16.msra.mxu0 0
  %1076 = vmatprep.subr.bf16.mxu0 0
  %1077 = vmatpush1.bf16.msra.mxu0 0
  %1078 = vmatprep.subr.bf16.mxu0 0
  %1079 = vmatpush1.bf16.msra.mxu0 0
  %1080 = vmatprep.subr.bf16.mxu0 0
  %1081 = vmatpush1.bf16.msra.mxu0 0
  %1082 = vmatprep.subr.bf16.mxu0 0
  %1083 = vmatpush1.bf16.msra.mxu0 0
  %1084 = vmatprep.subr.bf16.mxu0 0
  %1085 = vmatpush1.bf16.msra.mxu0 0
  %1086 = vmatprep.subr.bf16.mxu0 0
  %1087 = vmatpush1.bf16.msra.mxu0 0
  %1088 = vmatprep.subr.bf16.mxu0 0
  %1089 = vmatpush1.bf16.msra.mxu0 0
  %1090 = vmatprep.subr.bf16.mxu0 0
  %1091 = vmatpush1.bf16.msra.mxu0 0
  %1092 = vmatprep.subr.bf16.mxu0 0
  %1093 = vmatpush1.bf16.msra.mxu0 0
  %1094 = vmatprep.subr.bf16.mxu0 0
  %1095 = vmatpush1.bf16.msra.mxu0 0
  %1096 = vmatprep.subr.bf16.mxu0 0
  %1097 = vmatpush1.bf16.msra.mxu0 0
  %1098 = vmatprep.subr.bf16.mxu0 0
  %1099 = vmatpush1.bf16.msra.mxu0 0
  %1100 = vmatprep.subr.bf16.mxu0 0
  %1101 = vmatpush1.bf16.msra.mxu0 0
  %1102 = vmatprep.mubr.bf16.mxu0 0
  %1103 = vmatmul.mubr.bf16.gmra.mrb[0].mxu0 %v1068
  %v1104 = vpop.f32.mrb[0].mxu0
  %v1105 = vadd.f32 0.0, %v1104
  %v1106 = vpop.f32.mrb[0].mxu0
  %v1107 = vpop.f32.mrb[0].mxu0
  %v1108 = vpop.f32.mrb[0].mxu0
  %1109 = vdwg.mxu0
  %v1110 = vadd.f32 %v159, %v1105
  %v1111 = vxor.u32 %v1110, 2147483648
  %v1112 = vmul.f32 %v1111, 1.442695
  %v1113 = vpow.pop %v1112
  %v1114 = vadd.f32 %v1113, 1.0
  %v1115 = vrcp.pop %v1114
  %v1116 = vmul.f32 1.0, %v1115
  %1117 = vmatprep.subr.bf16.mxu0 0
  %1118 = vmatpush1.bf16.msra.mxu0 %v689
  %1119 = vmatprep.subr.bf16.mxu0 0
  %1120 = vmatpush1.bf16.msra.mxu0 %v690
  %1121 = vmatprep.subr.bf16.mxu0 0
  %1122 = vmatpush1.bf16.msra.mxu0 0
  %1123 = vmatprep.subr.bf16.mxu0 0
  %1124 = vmatpush1.bf16.msra.mxu0 0
  %1125 = vmatprep.subr.bf16.mxu0 0
  %1126 = vmatpush1.bf16.msra.mxu0 0
  %1127 = vmatprep.subr.bf16.mxu0 0
  %1128 = vmatpush1.bf16.msra.mxu0 0
  %1129 = vmatprep.subr.bf16.mxu0 0
  %1130 = vmatpush1.bf16.msra.mxu0 0
  %1131 = vmatprep.subr.bf16.mxu0 0
  %1132 = vmatpush1.bf16.msra.mxu0 0
  %1133 = vmatprep.subr.bf16.mxu0 0
  %1134 = vmatpush1.bf16.msra.mxu0 0
  %1135 = vmatprep.subr.bf16.mxu0 0
  %1136 = vmatpush1.bf16.msra.mxu0 0
  %1137 = vmatprep.subr.bf16.mxu0 0
  %1138 = vmatpush1.bf16.msra.mxu0 0
  %1139 = vmatprep.subr.bf16.mxu0 0
  %1140 = vmatpush1.bf16.msra.mxu0 0
  %1141 = vmatprep.subr.bf16.mxu0 0
  %1142 = vmatpush1.bf16.msra.mxu0 0
  %1143 = vmatprep.subr.bf16.mxu0 0
  %1144 = vmatpush1.bf16.msra.mxu0 0
  %1145 = vmatprep.subr.bf16.mxu0 0
  %1146 = vmatpush1.bf16.msra.mxu0 0
  %1147 = vmatprep.subr.bf16.mxu0 0
  %1148 = vmatpush1.bf16.msra.mxu0 0
  %1149 = vmatprep.mubr.bf16.mxu0 0
  %1150 = vmatmul.mubr.bf16.gmra.mrb[0].mxu0 %v1068
  %v1151 = vpop.f32.mrb[0].mxu0
  %v1152 = vadd.f32 0.0, %v1151
  %v1153 = vpop.f32.mrb[0].mxu0
  %v1154 = vpop.f32.mrb[0].mxu0
  %v1155 = vpop.f32.mrb[0].mxu0
  %1156 = vdwg.mxu0
  %v1157 = vadd.f32 %v297, %v1152
  %v1158 = vxor.u32 %v1157, 2147483648
  %v1159 = vmul.f32 %v1158, 1.442695
  %v1160 = vpow.pop %v1159
  %v1161 = vadd.f32 %v1160, 1.0
  %v1162 = vrcp.pop %v1161
  %v1163 = vmul.f32 1.0, %v1162
  %1164 = vmatprep.subr.bf16.mxu0 0
  %1165 = vmatpush1.bf16.msra.mxu0 %v748
  %1166 = vmatprep.subr.bf16.mxu0 0
  %1167 = vmatpush1.bf16.msra.mxu0 %v749
  %1168 = vmatprep.subr.bf16.mxu0 0
  %1169 = vmatpush1.bf16.msra.mxu0 0
  %1170 = vmatprep.subr.bf16.mxu0 0
  %1171 = vmatpush1.bf16.msra.mxu0 0
  %1172 = vmatprep.subr.bf16.mxu0 0
  %1173 = vmatpush1.bf16.msra.mxu0 0
  %1174 = vmatprep.subr.bf16.mxu0 0
  %1175 = vmatpush1.bf16.msra.mxu0 0
  %1176 = vmatprep.subr.bf16.mxu0 0
  %1177 = vmatpush1.bf16.msra.mxu0 0
  %1178 = vmatprep.subr.bf16.mxu0 0
  %1179 = vmatpush1.bf16.msra.mxu0 0
  %1180 = vmatprep.subr.bf16.mxu0 0
  %1181 = vmatpush1.bf16.msra.mxu0 0
  %1182 = vmatprep.subr.bf16.mxu0 0
  %1183 = vmatpush1.bf16.msra.mxu0 0
  %1184 = vmatprep.subr.bf16.mxu0 0
  %1185 = vmatpush1.bf16.msra.mxu0 0
  %1186 = vmatprep.subr.bf16.mxu0 0
  %1187 = vmatpush1.bf16.msra.mxu0 0
  %1188 = vmatprep.subr.bf16.mxu0 0
  %1189 = vmatpush1.bf16.msra.mxu0 0
  %1190 = vmatprep.subr.bf16.mxu0 0
  %1191 = vmatpush1.bf16.msra.mxu0 0
  %1192 = vmatprep.subr.bf16.mxu0 0
  %1193 = vmatpush1.bf16.msra.mxu0 0
  %1194 = vmatprep.subr.bf16.mxu0 0
  %1195 = vmatpush1.bf16.msra.mxu0 0
  %1196 = vmatprep.mubr.bf16.mxu0 0
  %1197 = vmatmul.mubr.bf16.gmra.mrb[0].mxu0 %v1068
  %v1198 = vpop.f32.mrb[0].mxu0
  %v1199 = vadd.f32 0.0, %v1198
  %v1200 = vpop.f32.mrb[0].mxu0
  %v1201 = vpop.f32.mrb[0].mxu0
  %v1202 = vpop.f32.mrb[0].mxu0
  %1203 = vdwg.mxu0
  %v1204 = vadd.f32 %v435, %v1199
  %v1205 = vtanh.pop %v1204
  %1206 = vmatprep.subr.bf16.mxu0 0
  %1207 = vmatpush1.bf16.msra.mxu0 %v802
  %1208 = vmatprep.subr.bf16.mxu0 0
  %1209 = vmatpush1.bf16.msra.mxu0 %v803
  %1210 = vmatprep.subr.bf16.mxu0 0
  %1211 = vmatpush1.bf16.msra.mxu0 0
  %1212 = vmatprep.subr.bf16.mxu0 0
  %1213 = vmatpush1.bf16.msra.mxu0 0
  %1214 = vmatprep.subr.bf16.mxu0 0
  %1215 = vmatpush1.bf16.msra.mxu0 0
  %1216 = vmatprep.subr.bf16.mxu0 0
  %1217 = vmatpush1.bf16.msra.mxu0 0
  %1218 = vmatprep.subr.bf16.mxu0 0
  %1219 = vmatpush1.bf16.msra.mxu0 0
  %1220 = vmatprep.subr.bf16.mxu0 0
  %1221 = vmatpush1.bf16.msra.mxu0 0
  %1222 = vmatprep.subr.bf16.mxu0 0
  %1223 = vmatpush1.bf16.msra.mxu0 0
  %1224 = vmatprep.subr.bf16.mxu0 0
  %1225 = vmatpush1.bf16.msra.mxu0 0
  %1226 = vmatprep.subr.bf16.mxu0 0
  %1227 = vmatpush1.bf16.msra.mxu0 0
  %1228 = vmatprep.subr.bf16.mxu0 0
  %1229 = vmatpush1.bf16.msra.mxu0 0
  %1230 = vmatprep.subr.bf16.mxu0 0
  %1231 = vmatpush1.bf16.msra.mxu0 0
  %1232 = vmatprep.subr.bf16.mxu0 0
  %1233 = vmatpush1.bf16.msra.mxu0 0
  %1234 = vmatprep.subr.bf16.mxu0 0
  %1235 = vmatpush1.bf16.msra.mxu0 0
  %1236 = vmatprep.subr.bf16.mxu0 0
  %1237 = vmatpush1.bf16.msra.mxu0 0
  %1238 = vmatprep.mubr.bf16.mxu0 0
  %1239 = vmatmul.mubr.bf16.gmra.mrb[0].mxu0 %v1068
  %v1240 = vpop.f32.mrb[0].mxu0
  %v1241 = vadd.f32 0.0, %v1240
  %v1242 = vpop.f32.mrb[0].mxu0
  %v1243 = vpop.f32.mrb[0].mxu0
  %v1244 = vpop.f32.mrb[0].mxu0
  %1245 = vdwg.mxu0
  %v1246 = vadd.f32 %v573, %v1241
  %v1247 = vxor.u32 %v1246, 2147483648
  %v1248 = vmul.f32 %v1247, 1.442695
  %v1249 = vpow.pop %v1248
  %v1250 = vadd.f32 %v1249, 1.0
  %v1251 = vrcp.pop %v1250
  %v1252 = vmul.f32 1.0, %v1251
  %v1253 = vmul.f32 %v1163, %v1065
  %v1254 = vmul.f32 %v1116, %v1205
  %v1255 = vadd.f32 %v1253, %v1254
  %v1256 = vtanh.pop %v1255
  %v1257 = vmul.f32 %v1252, %v1256
  %vm1258 = vcmp.gt.s32.totalorder %v614, 2
  %v1259 = vsel %vm1258, 1, 0
  %1260 = vset.pattern.permute.xlu0 0
  %1261 = vperm.xlu0 %1260, %v1259
  %v1262 = vpop.permute.xlu0 %1261
  %vm1263 = vcmp.eq.s32.totalorder %v1262, 1
  %v1264 = vsel %vm1263, %v1257, %v1064
  %v1265 = vsel %vm1263, %v1255, %v1065
  %v1266 = vpack.c.bf16 %v1264, %v1264
  %v1268 = vsel %vm630, %v1266, 0
  %1270 = vmatprep.subr.bf16.mxu0 0
  %1271 = vmatpush1.bf16.msra.mxu0 %v626
  %1272 = vmatprep.subr.bf16.mxu0 0
  %1273 = vmatpush1.bf16.msra.mxu0 %v627
  %1274 = vmatprep.subr.bf16.mxu0 0
  %1275 = vmatpush1.bf16.msra.mxu0 0
  %1276 = vmatprep.subr.bf16.mxu0 0
  %1277 = vmatpush1.bf16.msra.mxu0 0
  %1278 = vmatprep.subr.bf16.mxu0 0
  %1279 = vmatpush1.bf16.msra.mxu0 0
  %1280 = vmatprep.subr.bf16.mxu0 0
  %1281 = vmatpush1.bf16.msra.mxu0 0
  %1282 = vmatprep.subr.bf16.mxu0 0
  %1283 = vmatpush1.bf16.msra.mxu0 0
  %1284 = vmatprep.subr.bf16.mxu0 0
  %1285 = vmatpush1.bf16.msra.mxu0 0
  %1286 = vmatprep.subr.bf16.mxu0 0
  %1287 = vmatpush1.bf16.msra.mxu0 0
  %1288 = vmatprep.subr.bf16.mxu0 0
  %1289 = vmatpush1.bf16.msra.mxu0 0
  %1290 = vmatprep.subr.bf16.mxu0 0
  %1291 = vmatpush1.bf16.msra.mxu0 0
  %1292 = vmatprep.subr.bf16.mxu0 0
  %1293 = vmatpush1.bf16.msra.mxu0 0
  %1294 = vmatprep.subr.bf16.mxu0 0
  %1295 = vmatpush1.bf16.msra.mxu0 0
  %1296 = vmatprep.subr.bf16.mxu0 0
  %1297 = vmatpush1.bf16.msra.mxu0 0
  %1298 = vmatprep.subr.bf16.mxu0 0
  %1299 = vmatpush1.bf16.msra.mxu0 0
  %1300 = vmatprep.subr.bf16.mxu0 0
  %1301 = vmatpush1.bf16.msra.mxu0 0
  %1302 = vmatprep.mubr.bf16.mxu0 0
  %1303 = vmatmul.mubr.bf16.gmra.mrb[0].mxu0 %v1268
  %v1304 = vpop.f32.mrb[0].mxu0
  %v1305 = vadd.f32 0.0, %v1304
  %v1306 = vpop.f32.mrb[0].mxu0
  %v1307 = vpop.f32.mrb[0].mxu0
  %v1308 = vpop.f32.mrb[0].mxu0
  %1309 = vdwg.mxu0
  %v1310 = vadd.f32 %v162, %v1305
  %v1311 = vxor.u32 %v1310, 2147483648
  %v1312 = vmul.f32 %v1311, 1.442695
  %v1313 = vpow.pop %v1312
  %v1314 = vadd.f32 %v1313, 1.0
  %v1315 = vrcp.pop %v1314
  %v1316 = vmul.f32 1.0, %v1315
  %1317 = vmatprep.subr.bf16.mxu0 0
  %1318 = vmatpush1.bf16.msra.mxu0 %v689
  %1319 = vmatprep.subr.bf16.mxu0 0
  %1320 = vmatpush1.bf16.msra.mxu0 %v690
  %1321 = vmatprep.subr.bf16.mxu0 0
  %1322 = vmatpush1.bf16.msra.mxu0 0
  %1323 = vmatprep.subr.bf16.mxu0 0
  %1324 = vmatpush1.bf16.msra.mxu0 0
  %1325 = vmatprep.subr.bf16.mxu0 0
  %1326 = vmatpush1.bf16.msra.mxu0 0
  %1327 = vmatprep.subr.bf16.mxu0 0
  %1328 = vmatpush1.bf16.msra.mxu0 0
  %1329 = vmatprep.subr.bf16.mxu0 0
  %1330 = vmatpush1.bf16.msra.mxu0 0
  %1331 = vmatprep.subr.bf16.mxu0 0
  %1332 = vmatpush1.bf16.msra.mxu0 0
  %1333 = vmatprep.subr.bf16.mxu0 0
  %1334 = vmatpush1.bf16.msra.mxu0 0
  %1335 = vmatprep.subr.bf16.mxu0 0
  %1336 = vmatpush1.bf16.msra.mxu0 0
  %1337 = vmatprep.subr.bf16.mxu0 0
  %1338 = vmatpush1.bf16.msra.mxu0 0
  %1339 = vmatprep.subr.bf16.mxu0 0
  %1340 = vmatpush1.bf16.msra.mxu0 0
  %1341 = vmatprep.subr.bf16.mxu0 0
  %1342 = vmatpush1.bf16.msra.mxu0 0
  %1343 = vmatprep.subr.bf16.mxu0 0
  %1344 = vmatpush1.bf16.msra.mxu0 0
  %1345 = vmatprep.subr.bf16.mxu0 0
  %1346 = vmatpush1.bf16.msra.mxu0 0
  %1347 = vmatprep.subr.bf16.mxu0 0
  %1348 = vmatpush1.bf16.msra.mxu0 0
  %1349 = vmatprep.mubr.bf16.mxu0 0
  %1350 = vmatmul.mubr.bf16.gmra.mrb[0].mxu0 %v1268
  %v1351 = vpop.f32.mrb[0].mxu0
  %v1352 = vadd.f32 0.0, %v1351
  %v1353 = vpop.f32.mrb[0].mxu0
  %v1354 = vpop.f32.mrb[0].mxu0
  %v1355 = vpop.f32.mrb[0].mxu0
  %1356 = vdwg.mxu0
  %v1357 = vadd.f32 %v300, %v1352
  %v1358 = vxor.u32 %v1357, 2147483648
  %v1359 = vmul.f32 %v1358, 1.442695
  %v1360 = vpow.pop %v1359
  %v1361 = vadd.f32 %v1360, 1.0
  %v1362 = vrcp.pop %v1361
  %v1363 = vmul.f32 1.0, %v1362
  %1364 = vmatprep.subr.bf16.mxu0 0
  %1365 = vmatpush1.bf16.msra.mxu0 %v748
  %1366 = vmatprep.subr.bf16.mxu0 0
  %1367 = vmatpush1.bf16.msra.mxu0 %v749
  %1368 = vmatprep.subr.bf16.mxu0 0
  %1369 = vmatpush1.bf16.msra.mxu0 0
  %1370 = vmatprep.subr.bf16.mxu0 0
  %1371 = vmatpush1.bf16.msra.mxu0 0
  %1372 = vmatprep.subr.bf16.mxu0 0
  %1373 = vmatpush1.bf16.msra.mxu0 0
  %1374 = vmatprep.subr.bf16.mxu0 0
  %1375 = vmatpush1.bf16.msra.mxu0 0
  %1376 = vmatprep.subr.bf16.mxu0 0
  %1377 = vmatpush1.bf16.msra.mxu0 0
  %1378 = vmatprep.subr.bf16.mxu0 0
  %1379 = vmatpush1.bf16.msra.mxu0 0
  %1380 = vmatprep.subr.bf16.mxu0 0
  %1381 = vmatpush1.bf16.msra.mxu0 0
  %1382 = vmatprep.subr.bf16.mxu0 0
  %1383 = vmatpush1.bf16.msra.mxu0 0
  %1384 = vmatprep.subr.bf16.mxu0 0
  %1385 = vmatpush1.bf16.msra.mxu0 0
  %1386 = vmatprep.subr.bf16.mxu0 0
  %1387 = vmatpush1.bf16.msra.mxu0 0
  %1388 = vmatprep.subr.bf16.mxu0 0
  %1389 = vmatpush1.bf16.msra.mxu0 0
  %1390 = vmatprep.subr.bf16.mxu0 0
  %1391 = vmatpush1.bf16.msra.mxu0 0
  %1392 = vmatprep.subr.bf16.mxu0 0
  %1393 = vmatpush1.bf16.msra.mxu0 0
  %1394 = vmatprep.subr.bf16.mxu0 0
  %1395 = vmatpush1.bf16.msra.mxu0 0
  %1396 = vmatprep.mubr.bf16.mxu0 0
  %1397 = vmatmul.mubr.bf16.gmra.mrb[0].mxu0 %v1268
  %v1398 = vpop.f32.mrb[0].mxu0
  %v1399 = vadd.f32 0.0, %v1398
  %v1400 = vpop.f32.mrb[0].mxu0
  %v1401 = vpop.f32.mrb[0].mxu0
  %v1402 = vpop.f32.mrb[0].mxu0
  %1403 = vdwg.mxu0
  %v1404 = vadd.f32 %v438, %v1399
  %v1405 = vtanh.pop %v1404
  %1406 = vmatprep.subr.bf16.mxu0 0
  %1407 = vmatpush1.bf16.msra.mxu0 %v802
  %1408 = vmatprep.subr.bf16.mxu0 0
  %1409 = vmatpush1.bf16.msra.mxu0 %v803
  %1410 = vmatprep.subr.bf16.mxu0 0
  %1411 = vmatpush1.bf16.msra.mxu0 0
  %1412 = vmatprep.subr.bf16.mxu0 0
  %1413 = vmatpush1.bf16.msra.mxu0 0
  %1414 = vmatprep.subr.bf16.mxu0 0
  %1415 = vmatpush1.bf16.msra.mxu0 0
  %1416 = vmatprep.subr.bf16.mxu0 0
  %1417 = vmatpush1.bf16.msra.mxu0 0
  %1418 = vmatprep.subr.bf16.mxu0 0
  %1419 = vmatpush1.bf16.msra.mxu0 0
  %1420 = vmatprep.subr.bf16.mxu0 0
  %1421 = vmatpush1.bf16.msra.mxu0 0
  %1422 = vmatprep.subr.bf16.mxu0 0
  %1423 = vmatpush1.bf16.msra.mxu0 0
  %1424 = vmatprep.subr.bf16.mxu0 0
  %1425 = vmatpush1.bf16.msra.mxu0 0
  %1426 = vmatprep.subr.bf16.mxu0 0
  %1427 = vmatpush1.bf16.msra.mxu0 0
  %1428 = vmatprep.subr.bf16.mxu0 0
  %1429 = vmatpush1.bf16.msra.mxu0 0
  %1430 = vmatprep.subr.bf16.mxu0 0
  %1431 = vmatpush1.bf16.msra.mxu0 0
  %1432 = vmatprep.subr.bf16.mxu0 0
  %1433 = vmatpush1.bf16.msra.mxu0 0
  %1434 = vmatprep.subr.bf16.mxu0 0
  %1435 = vmatpush1.bf16.msra.mxu0 0
  %1436 = vmatprep.subr.bf16.mxu0 0
  %1437 = vmatpush1.bf16.msra.mxu0 0
  %1438 = vmatprep.mubr.bf16.mxu0 0
  %1439 = vmatmul.mubr.bf16.gmra.mrb[0].mxu0 %v1268
  %v1440 = vpop.f32.mrb[0].mxu0
  %v1441 = vadd.f32 0.0, %v1440
  %v1442 = vpop.f32.mrb[0].mxu0
  %v1443 = vpop.f32.mrb[0].mxu0
  %v1444 = vpop.f32.mrb[0].mxu0
  %1445 = vdwg.mxu0
  %v1446 = vadd.f32 %v576, %v1441
  %v1447 = vxor.u32 %v1446, 2147483648
  %v1448 = vmul.f32 %v1447, 1.442695
  %v1449 = vpow.pop %v1448
  %v1450 = vadd.f32 %v1449, 1.0
  %v1451 = vrcp.pop %v1450
  %v1452 = vmul.f32 1.0, %v1451
  %v1453 = vmul.f32 %v1363, %v1265
  %v1454 = vmul.f32 %v1316, %v1405
  %v1455 = vadd.f32 %v1453, %v1454
  %v1456 = vtanh.pop %v1455
  %v1457 = vmul.f32 %v1452, %v1456
  %vm1458 = vcmp.gt.s32.totalorder %v614, 3
  %v1459 = vsel %vm1458, 1, 0
  %1460 = vset.pattern.permute.xlu0 0
  %1461 = vperm.xlu0 %1460, %v1459
  %v1462 = vpop.permute.xlu0 %1461
  %vm1463 = vcmp.eq.s32.totalorder %v1462, 1
  %v1464 = vsel %vm1463, %v1457, %v1264
  %v1465 = vsel %vm1463, %v1455, %v1265
  %v1466 = vpack.c.bf16 %v1464, %v1464
  %v1468 = vsel %vm630, %v1466, 0
  %1470 = vmatprep.subr.bf16.mxu0 0
  %1471 = vmatpush1.bf16.msra.mxu0 %v626
  %1472 = vmatprep.subr.bf16.mxu0 0
  %1473 = vmatpush1.bf16.msra.mxu0 %v627
  %1474 = vmatprep.subr.bf16.mxu0 0
  %1475 = vmatpush1.bf16.msra.mxu0 0
  %1476 = vmatprep.subr.bf16.mxu0 0
  %1477 = vmatpush1.bf16.msra.mxu0 0
  %1478 = vmatprep.subr.bf16.mxu0 0
  %1479 = vmatpush1.bf16.msra.mxu0 0
  %1480 = vmatprep.subr.bf16.mxu0 0
  %1481 = vmatpush1.bf16.msra.mxu0 0
  %1482 = vmatprep.subr.bf16.mxu0 0
  %1483 = vmatpush1.bf16.msra.mxu0 0
  %1484 = vmatprep.subr.bf16.mxu0 0
  %1485 = vmatpush1.bf16.msra.mxu0 0
  %1486 = vmatprep.subr.bf16.mxu0 0
  %1487 = vmatpush1.bf16.msra.mxu0 0
  %1488 = vmatprep.subr.bf16.mxu0 0
  %1489 = vmatpush1.bf16.msra.mxu0 0
  %1490 = vmatprep.subr.bf16.mxu0 0
  %1491 = vmatpush1.bf16.msra.mxu0 0
  %1492 = vmatprep.subr.bf16.mxu0 0
  %1493 = vmatpush1.bf16.msra.mxu0 0
  %1494 = vmatprep.subr.bf16.mxu0 0
  %1495 = vmatpush1.bf16.msra.mxu0 0
  %1496 = vmatprep.subr.bf16.mxu0 0
  %1497 = vmatpush1.bf16.msra.mxu0 0
  %1498 = vmatprep.subr.bf16.mxu0 0
  %1499 = vmatpush1.bf16.msra.mxu0 0
  %1500 = vmatprep.subr.bf16.mxu0 0
  %1501 = vmatpush1.bf16.msra.mxu0 0
  %1502 = vmatprep.mubr.bf16.mxu0 0
  %1503 = vmatmul.mubr.bf16.gmra.mrb[0].mxu0 %v1468
  %v1504 = vpop.f32.mrb[0].mxu0
  %v1505 = vadd.f32 0.0, %v1504
  %v1506 = vpop.f32.mrb[0].mxu0
  %v1507 = vpop.f32.mrb[0].mxu0
  %v1508 = vpop.f32.mrb[0].mxu0
  %1509 = vdwg.mxu0
  %v1510 = vadd.f32 %v167, %v1505
  %v1511 = vxor.u32 %v1510, 2147483648
  %v1512 = vmul.f32 %v1511, 1.442695
  %v1513 = vpow.pop %v1512
  %v1514 = vadd.f32 %v1513, 1.0
  %v1515 = vrcp.pop %v1514
  %v1516 = vmul.f32 1.0, %v1515
  %1517 = vmatprep.subr.bf16.mxu0 0
  %1518 = vmatpush1.bf16.msra.mxu0 %v689
  %1519 = vmatprep.subr.bf16.mxu0 0
  %1520 = vmatpush1.bf16.msra.mxu0 %v690
  %1521 = vmatprep.subr.bf16.mxu0 0
  %1522 = vmatpush1.bf16.msra.mxu0 0
  %1523 = vmatprep.subr.bf16.mxu0 0
  %1524 = vmatpush1.bf16.msra.mxu0 0
  %1525 = vmatprep.subr.bf16.mxu0 0
  %1526 = vmatpush1.bf16.msra.mxu0 0
  %1527 = vmatprep.subr.bf16.mxu0 0
  %1528 = vmatpush1.bf16.msra.mxu0 0
  %1529 = vmatprep.subr.bf16.mxu0 0
  %1530 = vmatpush1.bf16.msra.mxu0 0
  %1531 = vmatprep.subr.bf16.mxu0 0
  %1532 = vmatpush1.bf16.msra.mxu0 0
  %1533 = vmatprep.subr.bf16.mxu0 0
  %1534 = vmatpush1.bf16.msra.mxu0 0
  %1535 = vmatprep.subr.bf16.mxu0 0
  %1536 = vmatpush1.bf16.msra.mxu0 0
  %1537 = vmatprep.subr.bf16.mxu0 0
  %1538 = vmatpush1.bf16.msra.mxu0 0
  %1539 = vmatprep.subr.bf16.mxu0 0
  %1540 = vmatpush1.bf16.msra.mxu0 0
  %1541 = vmatprep.subr.bf16.mxu0 0
  %1542 = vmatpush1.bf16.msra.mxu0 0
  %1543 = vmatprep.subr.bf16.mxu0 0
  %1544 = vmatpush1.bf16.msra.mxu0 0
  %1545 = vmatprep.subr.bf16.mxu0 0
  %1546 = vmatpush1.bf16.msra.mxu0 0
  %1547 = vmatprep.subr.bf16.mxu0 0
  %1548 = vmatpush1.bf16.msra.mxu0 0
  %1549 = vmatprep.mubr.bf16.mxu0 0
  %1550 = vmatmul.mubr.bf16.gmra.mrb[0].mxu0 %v1468
  %v1551 = vpop.f32.mrb[0].mxu0
  %v1552 = vadd.f32 0.0, %v1551
  %v1553 = vpop.f32.mrb[0].mxu0
  %v1554 = vpop.f32.mrb[0].mxu0
  %v1555 = vpop.f32.mrb[0].mxu0
  %1556 = vdwg.mxu0
  %v1557 = vadd.f32 %v305, %v1552
  %v1558 = vxor.u32 %v1557, 2147483648
  %v1559 = vmul.f32 %v1558, 1.442695
  %v1560 = vpow.pop %v1559
  %v1561 = vadd.f32 %v1560, 1.0
  %v1562 = vrcp.pop %v1561
  %v1563 = vmul.f32 1.0, %v1562
  %1564 = vmatprep.subr.bf16.mxu0 0
  %1565 = vmatpush1.bf16.msra.mxu0 %v748
  %1566 = vmatprep.subr.bf16.mxu0 0
  %1567 = vmatpush1.bf16.msra.mxu0 %v749
  %1568 = vmatprep.subr.bf16.mxu0 0
  %1569 = vmatpush1.bf16.msra.mxu0 0
  %1570 = vmatprep.subr.bf16.mxu0 0
  %1571 = vmatpush1.bf16.msra.mxu0 0
  %1572 = vmatprep.subr.bf16.mxu0 0
  %1573 = vmatpush1.bf16.msra.mxu0 0
  %1574 = vmatprep.subr.bf16.mxu0 0
  %1575 = vmatpush1.bf16.msra.mxu0 0
  %1576 = vmatprep.subr.bf16.mxu0 0
  %1577 = vmatpush1.bf16.msra.mxu0 0
  %1578 = vmatprep.subr.bf16.mxu0 0
  %1579 = vmatpush1.bf16.msra.mxu0 0
  %1580 = vmatprep.subr.bf16.mxu0 0
  %1581 = vmatpush1.bf16.msra.mxu0 0
  %1582 = vmatprep.subr.bf16.mxu0 0
  %1583 = vmatpush1.bf16.msra.mxu0 0
  %1584 = vmatprep.subr.bf16.mxu0 0
  %1585 = vmatpush1.bf16.msra.mxu0 0
  %1586 = vmatprep.subr.bf16.mxu0 0
  %1587 = vmatpush1.bf16.msra.mxu0 0
  %1588 = vmatprep.subr.bf16.mxu0 0
  %1589 = vmatpush1.bf16.msra.mxu0 0
  %1590 = vmatprep.subr.bf16.mxu0 0
  %1591 = vmatpush1.bf16.msra.mxu0 0
  %1592 = vmatprep.subr.bf16.mxu0 0
  %1593 = vmatpush1.bf16.msra.mxu0 0
  %1594 = vmatprep.subr.bf16.mxu0 0
  %1595 = vmatpush1.bf16.msra.mxu0 0
  %1596 = vmatprep.mubr.bf16.mxu0 0
  %1597 = vmatmul.mubr.bf16.gmra.mrb[0].mxu0 %v1468
  %v1598 = vpop.f32.mrb[0].mxu0
  %v1599 = vadd.f32 0.0, %v1598
  %v1600 = vpop.f32.mrb[0].mxu0
  %v1601 = vpop.f32.mrb[0].mxu0
  %v1602 = vpop.f32.mrb[0].mxu0
  %1603 = vdwg.mxu0
  %v1604 = vadd.f32 %v443, %v1599
  %v1605 = vtanh.pop %v1604
  %1606 = vmatprep.subr.bf16.mxu0 0
  %1607 = vmatpush1.bf16.msra.mxu0 %v802
  %1608 = vmatprep.subr.bf16.mxu0 0
  %1609 = vmatpush1.bf16.msra.mxu0 %v803
  %1610 = vmatprep.subr.bf16.mxu0 0
  %1611 = vmatpush1.bf16.msra.mxu0 0
  %1612 = vmatprep.subr.bf16.mxu0 0
  %1613 = vmatpush1.bf16.msra.mxu0 0
  %1614 = vmatprep.subr.bf16.mxu0 0
  %1615 = vmatpush1.bf16.msra.mxu0 0
  %1616 = vmatprep.subr.bf16.mxu0 0
  %1617 = vmatpush1.bf16.msra.mxu0 0
  %1618 = vmatprep.subr.bf16.mxu0 0
  %1619 = vmatpush1.bf16.msra.mxu0 0
  %1620 = vmatprep.subr.bf16.mxu0 0
  %1621 = vmatpush1.bf16.msra.mxu0 0
  %1622 = vmatprep.subr.bf16.mxu0 0
  %1623 = vmatpush1.bf16.msra.mxu0 0
  %1624 = vmatprep.subr.bf16.mxu0 0
  %1625 = vmatpush1.bf16.msra.mxu0 0
  %1626 = vmatprep.subr.bf16.mxu0 0
  %1627 = vmatpush1.bf16.msra.mxu0 0
  %1628 = vmatprep.subr.bf16.mxu0 0
  %1629 = vmatpush1.bf16.msra.mxu0 0
  %1630 = vmatprep.subr.bf16.mxu0 0
  %1631 = vmatpush1.bf16.msra.mxu0 0
  %1632 = vmatprep.subr.bf16.mxu0 0
  %1633 = vmatpush1.bf16.msra.mxu0 0
  %1634 = vmatprep.subr.bf16.mxu0 0
  %1635 = vmatpush1.bf16.msra.mxu0 0
  %1636 = vmatprep.subr.bf16.mxu0 0
  %1637 = vmatpush1.bf16.msra.mxu0 0
  %1638 = vmatprep.mubr.bf16.mxu0 0
  %1639 = vmatmul.mubr.bf16.gmra.mrb[0].mxu0 %v1468
  %v1640 = vpop.f32.mrb[0].mxu0
  %v1641 = vadd.f32 0.0, %v1640
  %v1642 = vpop.f32.mrb[0].mxu0
  %v1643 = vpop.f32.mrb[0].mxu0
  %v1644 = vpop.f32.mrb[0].mxu0
  %1645 = vdwg.mxu0
  %v1646 = vadd.f32 %v581, %v1641
  %v1647 = vxor.u32 %v1646, 2147483648
  %v1648 = vmul.f32 %v1647, 1.442695
  %v1649 = vpow.pop %v1648
  %v1650 = vadd.f32 %v1649, 1.0
  %v1651 = vrcp.pop %v1650
  %v1652 = vmul.f32 1.0, %v1651
  %v1653 = vmul.f32 %v1563, %v1465
  %v1654 = vmul.f32 %v1516, %v1605
  %v1655 = vadd.f32 %v1653, %v1654
  %v1656 = vtanh.pop %v1655
  %v1657 = vmul.f32 %v1652, %v1656
  %vm1658 = vcmp.gt.s32.totalorder %v614, 4
  %v1659 = vsel %vm1658, 1, 0
  %1660 = vset.pattern.permute.xlu0 0
  %1661 = vperm.xlu0 %1660, %v1659
  %v1662 = vpop.permute.xlu0 %1661
  %vm1663 = vcmp.eq.s32.totalorder %v1662, 1
  %v1664 = vsel %vm1663, %v1657, %v1464
  %v1665 = vsel %vm1663, %v1655, %v1465
  %v1666 = vpack.c.bf16 %v1664, %v1664
  %v1668 = vsel %vm630, %v1666, 0
  %1670 = vmatprep.subr.bf16.mxu0 0
  %1671 = vmatpush1.bf16.msra.mxu0 %v626
  %1672 = vmatprep.subr.bf16.mxu0 0
  %1673 = vmatpush1.bf16.msra.mxu0 %v627
  %1674 = vmatprep.subr.bf16.mxu0 0
  %1675 = vmatpush1.bf16.msra.mxu0 0
  %1676 = vmatprep.subr.bf16.mxu0 0
  %1677 = vmatpush1.bf16.msra.mxu0 0
  %1678 = vmatprep.subr.bf16.mxu0 0
  %1679 = vmatpush1.bf16.msra.mxu0 0
  %1680 = vmatprep.subr.bf16.mxu0 0
  %1681 = vmatpush1.bf16.msra.mxu0 0
  %1682 = vmatprep.subr.bf16.mxu0 0
  %1683 = vmatpush1.bf16.msra.mxu0 0
  %1684 = vmatprep.subr.bf16.mxu0 0
  %1685 = vmatpush1.bf16.msra.mxu0 0
  %1686 = vmatprep.subr.bf16.mxu0 0
  %1687 = vmatpush1.bf16.msra.mxu0 0
  %1688 = vmatprep.subr.bf16.mxu0 0
  %1689 = vmatpush1.bf16.msra.mxu0 0
  %1690 = vmatprep.subr.bf16.mxu0 0
  %1691 = vmatpush1.bf16.msra.mxu0 0
  %1692 = vmatprep.subr.bf16.mxu0 0
  %1693 = vmatpush1.bf16.msra.mxu0 0
  %1694 = vmatprep.subr.bf16.mxu0 0
  %1695 = vmatpush1.bf16.msra.mxu0 0
  %1696 = vmatprep.subr.bf16.mxu0 0
  %1697 = vmatpush1.bf16.msra.mxu0 0
  %1698 = vmatprep.subr.bf16.mxu0 0
  %1699 = vmatpush1.bf16.msra.mxu0 0
  %1700 = vmatprep.subr.bf16.mxu0 0
  %1701 = vmatpush1.bf16.msra.mxu0 0
  %1702 = vmatprep.mubr.bf16.mxu0 0
  %1703 = vmatmul.mubr.bf16.gmra.mrb[0].mxu0 %v1668
  %v1704 = vpop.f32.mrb[0].mxu0
  %v1705 = vadd.f32 0.0, %v1704
  %v1706 = vpop.f32.mrb[0].mxu0
  %v1707 = vpop.f32.mrb[0].mxu0
  %v1708 = vpop.f32.mrb[0].mxu0
  %1709 = vdwg.mxu0
  %v1710 = vadd.f32 %v170, %v1705
  %v1711 = vxor.u32 %v1710, 2147483648
  %v1712 = vmul.f32 %v1711, 1.442695
  %v1713 = vpow.pop %v1712
  %v1714 = vadd.f32 %v1713, 1.0
  %v1715 = vrcp.pop %v1714
  %v1716 = vmul.f32 1.0, %v1715
  %1717 = vmatprep.subr.bf16.mxu0 0
  %1718 = vmatpush1.bf16.msra.mxu0 %v689
  %1719 = vmatprep.subr.bf16.mxu0 0
  %1720 = vmatpush1.bf16.msra.mxu0 %v690
  %1721 = vmatprep.subr.bf16.mxu0 0
  %1722 = vmatpush1.bf16.msra.mxu0 0
  %1723 = vmatprep.subr.bf16.mxu0 0
  %1724 = vmatpush1.bf16.msra.mxu0 0
  %1725 = vmatprep.subr.bf16.mxu0 0
  %1726 = vmatpush1.bf16.msra.mxu0 0
  %1727 = vmatprep.subr.bf16.mxu0 0
  %1728 = vmatpush1.bf16.msra.mxu0 0
  %1729 = vmatprep.subr.bf16.mxu0 0
  %1730 = vmatpush1.bf16.msra.mxu0 0
  %1731 = vmatprep.subr.bf16.mxu0 0
  %1732 = vmatpush1.bf16.msra.mxu0 0
  %1733 = vmatprep.subr.bf16.mxu0 0
  %1734 = vmatpush1.bf16.msra.mxu0 0
  %1735 = vmatprep.subr.bf16.mxu0 0
  %1736 = vmatpush1.bf16.msra.mxu0 0
  %1737 = vmatprep.subr.bf16.mxu0 0
  %1738 = vmatpush1.bf16.msra.mxu0 0
  %1739 = vmatprep.subr.bf16.mxu0 0
  %1740 = vmatpush1.bf16.msra.mxu0 0
  %1741 = vmatprep.subr.bf16.mxu0 0
  %1742 = vmatpush1.bf16.msra.mxu0 0
  %1743 = vmatprep.subr.bf16.mxu0 0
  %1744 = vmatpush1.bf16.msra.mxu0 0
  %1745 = vmatprep.subr.bf16.mxu0 0
  %1746 = vmatpush1.bf16.msra.mxu0 0
  %1747 = vmatprep.subr.bf16.mxu0 0
  %1748 = vmatpush1.bf16.msra.mxu0 0
  %1749 = vmatprep.mubr.bf16.mxu0 0
  %1750 = vmatmul.mubr.bf16.gmra.mrb[0].mxu0 %v1668
  %v1751 = vpop.f32.mrb[0].mxu0
  %v1752 = vadd.f32 0.0, %v1751
  %v1753 = vpop.f32.mrb[0].mxu0
  %v1754 = vpop.f32.mrb[0].mxu0
  %v1755 = vpop.f32.mrb[0].mxu0
  %1756 = vdwg.mxu0
  %v1757 = vadd.f32 %v308, %v1752
  %v1758 = vxor.u32 %v1757, 2147483648
  %v1759 = vmul.f32 %v1758, 1.442695
  %v1760 = vpow.pop %v1759
  %v1761 = vadd.f32 %v1760, 1.0
  %v1762 = vrcp.pop %v1761
  %v1763 = vmul.f32 1.0, %v1762
  %1764 = vmatprep.subr.bf16.mxu0 0
  %1765 = vmatpush1.bf16.msra.mxu0 %v748
  %1766 = vmatprep.subr.bf16.mxu0 0
  %1767 = vmatpush1.bf16.msra.mxu0 %v749
  %1768 = vmatprep.subr.bf16.mxu0 0
  %1769 = vmatpush1.bf16.msra.mxu0 0
  %1770 = vmatprep.subr.bf16.mxu0 0
  %1771 = vmatpush1.bf16.msra.mxu0 0
  %1772 = vmatprep.subr.bf16.mxu0 0
  %1773 = vmatpush1.bf16.msra.mxu0 0
  %1774 = vmatprep.subr.bf16.mxu0 0
  %1775 = vmatpush1.bf16.msra.mxu0 0
  %1776 = vmatprep.subr.bf16.mxu0 0
  %1777 = vmatpush1.bf16.msra.mxu0 0
  %1778 = vmatprep.subr.bf16.mxu0 0
  %1779 = vmatpush1.bf16.msra.mxu0 0
  %1780 = vmatprep.subr.bf16.mxu0 0
  %1781 = vmatpush1.bf16.msra.mxu0 0
  %1782 = vmatprep.subr.bf16.mxu0 0
  %1783 = vmatpush1.bf16.msra.mxu0 0
  %1784 = vmatprep.subr.bf16.mxu0 0
  %1785 = vmatpush1.bf16.msra.mxu0 0
  %1786 = vmatprep.subr.bf16.mxu0 0
  %1787 = vmatpush1.bf16.msra.mxu0 0
  %1788 = vmatprep.subr.bf16.mxu0 0
  %1789 = vmatpush1.bf16.msra.mxu0 0
  %1790 = vmatprep.subr.bf16.mxu0 0
  %1791 = vmatpush1.bf16.msra.mxu0 0
  %1792 = vmatprep.subr.bf16.mxu0 0
  %1793 = vmatpush1.bf16.msra.mxu0 0
  %1794 = vmatprep.subr.bf16.mxu0 0
  %1795 = vmatpush1.bf16.msra.mxu0 0
  %1796 = vmatprep.mubr.bf16.mxu0 0
  %1797 = vmatmul.mubr.bf16.gmra.mrb[0].mxu0 %v1668
  %v1798 = vpop.f32.mrb[0].mxu0
  %v1799 = vadd.f32 0.0, %v1798
  %v1800 = vpop.f32.mrb[0].mxu0
  %v1801 = vpop.f32.mrb[0].mxu0
  %v1802 = vpop.f32.mrb[0].mxu0
  %1803 = vdwg.mxu0
  %v1804 = vadd.f32 %v446, %v1799
  %v1805 = vtanh.pop %v1804
  %1806 = vmatprep.subr.bf16.mxu0 0
  %1807 = vmatpush1.bf16.msra.mxu0 %v802
  %1808 = vmatprep.subr.bf16.mxu0 0
  %1809 = vmatpush1.bf16.msra.mxu0 %v803
  %1810 = vmatprep.subr.bf16.mxu0 0
  %1811 = vmatpush1.bf16.msra.mxu0 0
  %1812 = vmatprep.subr.bf16.mxu0 0
  %1813 = vmatpush1.bf16.msra.mxu0 0
  %1814 = vmatprep.subr.bf16.mxu0 0
  %1815 = vmatpush1.bf16.msra.mxu0 0
  %1816 = vmatprep.subr.bf16.mxu0 0
  %1817 = vmatpush1.bf16.msra.mxu0 0
  %1818 = vmatprep.subr.bf16.mxu0 0
  %1819 = vmatpush1.bf16.msra.mxu0 0
  %1820 = vmatprep.subr.bf16.mxu0 0
  %1821 = vmatpush1.bf16.msra.mxu0 0
  %1822 = vmatprep.subr.bf16.mxu0 0
  %1823 = vmatpush1.bf16.msra.mxu0 0
  %1824 = vmatprep.subr.bf16.mxu0 0
  %1825 = vmatpush1.bf16.msra.mxu0 0
  %1826 = vmatprep.subr.bf16.mxu0 0
  %1827 = vmatpush1.bf16.msra.mxu0 0
  %1828 = vmatprep.subr.bf16.mxu0 0
  %1829 = vmatpush1.bf16.msra.mxu0 0
  %1830 = vmatprep.subr.bf16.mxu0 0
  %1831 = vmatpush1.bf16.msra.mxu0 0
  %1832 = vmatprep.subr.bf16.mxu0 0
  %1833 = vmatpush1.bf16.msra.mxu0 0
  %1834 = vmatprep.subr.bf16.mxu0 0
  %1835 = vmatpush1.bf16.msra.mxu0 0
  %1836 = vmatprep.subr.bf16.mxu0 0
  %1837 = vmatpush1.bf16.msra.mxu0 0
  %1838 = vmatprep.mubr.bf16.mxu0 0
  %1839 = vmatmul.mubr.bf16.gmra.mrb[0].mxu0 %v1668
  %v1840 = vpop.f32.mrb[0].mxu0
  %v1841 = vadd.f32 0.0, %v1840
  %v1842 = vpop.f32.mrb[0].mxu0
  %v1843 = vpop.f32.mrb[0].mxu0
  %v1844 = vpop.f32.mrb[0].mxu0
  %1845 = vdwg.mxu0
  %v1846 = vadd.f32 %v584, %v1841
  %v1847 = vxor.u32 %v1846, 2147483648
  %v1848 = vmul.f32 %v1847, 1.442695
  %v1849 = vpow.pop %v1848
  %v1850 = vadd.f32 %v1849, 1.0
  %v1851 = vrcp.pop %v1850
  %v1852 = vmul.f32 1.0, %v1851
  %v1853 = vmul.f32 %v1763, %v1665
  %v1854 = vmul.f32 %v1716, %v1805
  %v1855 = vadd.f32 %v1853, %v1854
  %v1856 = vtanh.pop %v1855
  %v1857 = vmul.f32 %v1852, %v1856
  %vm1858 = vcmp.gt.s32.totalorder %v614, 5
  %v1859 = vsel %vm1858, 1, 0
  %1860 = vset.pattern.permute.xlu0 0
  %1861 = vperm.xlu0 %1860, %v1859
  %v1862 = vpop.permute.xlu0 %1861
  %vm1863 = vcmp.eq.s32.totalorder %v1862, 1
  %v1864 = vsel %vm1863, %v1857, %v1664
  %v1865 = vsel %vm1863, %v1855, %v1665
  %v1866 = vpack.c.bf16 %v1864, %v1864
  %v1868 = vsel %vm630, %v1866, 0
  %1870 = vmatprep.subr.bf16.mxu0 0
  %1871 = vmatpush1.bf16.msra.mxu0 %v626
  %1872 = vmatprep.subr.bf16.mxu0 0
  %1873 = vmatpush1.bf16.msra.mxu0 %v627
  %1874 = vmatprep.subr.bf16.mxu0 0
  %1875 = vmatpush1.bf16.msra.mxu0 0
  %1876 = vmatprep.subr.bf16.mxu0 0
  %1877 = vmatpush1.bf16.msra.mxu0 0
  %1878 = vmatprep.subr.bf16.mxu0 0
  %1879 = vmatpush1.bf16.msra.mxu0 0
  %1880 = vmatprep.subr.bf16.mxu0 0
  %1881 = vmatpush1.bf16.msra.mxu0 0
  %1882 = vmatprep.subr.bf16.mxu0 0
  %1883 = vmatpush1.bf16.msra.mxu0 0
  %1884 = vmatprep.subr.bf16.mxu0 0
  %1885 = vmatpush1.bf16.msra.mxu0 0
  %1886 = vmatprep.subr.bf16.mxu0 0
  %1887 = vmatpush1.bf16.msra.mxu0 0
  %1888 = vmatprep.subr.bf16.mxu0 0
  %1889 = vmatpush1.bf16.msra.mxu0 0
  %1890 = vmatprep.subr.bf16.mxu0 0
  %1891 = vmatpush1.bf16.msra.mxu0 0
  %1892 = vmatprep.subr.bf16.mxu0 0
  %1893 = vmatpush1.bf16.msra.mxu0 0
  %1894 = vmatprep.subr.bf16.mxu0 0
  %1895 = vmatpush1.bf16.msra.mxu0 0
  %1896 = vmatprep.subr.bf16.mxu0 0
  %1897 = vmatpush1.bf16.msra.mxu0 0
  %1898 = vmatprep.subr.bf16.mxu0 0
  %1899 = vmatpush1.bf16.msra.mxu0 0
  %1900 = vmatprep.subr.bf16.mxu0 0
  %1901 = vmatpush1.bf16.msra.mxu0 0
  %1902 = vmatprep.mubr.bf16.mxu0 0
  %1903 = vmatmul.mubr.bf16.gmra.mrb[0].mxu0 %v1868
  %v1904 = vpop.f32.mrb[0].mxu0
  %v1905 = vadd.f32 0.0, %v1904
  %v1906 = vpop.f32.mrb[0].mxu0
  %v1907 = vpop.f32.mrb[0].mxu0
  %v1908 = vpop.f32.mrb[0].mxu0
  %1909 = vdwg.mxu0
  %v1910 = vadd.f32 %v175, %v1905
  %v1911 = vxor.u32 %v1910, 2147483648
  %v1912 = vmul.f32 %v1911, 1.442695
  %v1913 = vpow.pop %v1912
  %v1914 = vadd.f32 %v1913, 1.0
  %v1915 = vrcp.pop %v1914
  %v1916 = vmul.f32 1.0, %v1915
  %1917 = vmatprep.subr.bf16.mxu0 0
  %1918 = vmatpush1.bf16.msra.mxu0 %v689
  %1919 = vmatprep.subr.bf16.mxu0 0
  %1920 = vmatpush1.bf16.msra.mxu0 %v690
  %1921 = vmatprep.subr.bf16.mxu0 0
  %1922 = vmatpush1.bf16.msra.mxu0 0
  %1923 = vmatprep.subr.bf16.mxu0 0
  %1924 = vmatpush1.bf16.msra.mxu0 0
  %1925 = vmatprep.subr.bf16.mxu0 0
  %1926 = vmatpush1.bf16.msra.mxu0 0
  %1927 = vmatprep.subr.bf16.mxu0 0
  %1928 = vmatpush1.bf16.msra.mxu0 0
  %1929 = vmatprep.subr.bf16.mxu0 0
  %1930 = vmatpush1.bf16.msra.mxu0 0
  %1931 = vmatprep.subr.bf16.mxu0 0
  %1932 = vmatpush1.bf16.msra.mxu0 0
  %1933 = vmatprep.subr.bf16.mxu0 0
  %1934 = vmatpush1.bf16.msra.mxu0 0
  %1935 = vmatprep.subr.bf16.mxu0 0
  %1936 = vmatpush1.bf16.msra.mxu0 0
  %1937 = vmatprep.subr.bf16.mxu0 0
  %1938 = vmatpush1.bf16.msra.mxu0 0
  %1939 = vmatprep.subr.bf16.mxu0 0
  %1940 = vmatpush1.bf16.msra.mxu0 0
  %1941 = vmatprep.subr.bf16.mxu0 0
  %1942 = vmatpush1.bf16.msra.mxu0 0
  %1943 = vmatprep.subr.bf16.mxu0 0
  %1944 = vmatpush1.bf16.msra.mxu0 0
  %1945 = vmatprep.subr.bf16.mxu0 0
  %1946 = vmatpush1.bf16.msra.mxu0 0
  %1947 = vmatprep.subr.bf16.mxu0 0
  %1948 = vmatpush1.bf16.msra.mxu0 0
  %1949 = vmatprep.mubr.bf16.mxu0 0
  %1950 = vmatmul.mubr.bf16.gmra.mrb[0].mxu0 %v1868
  %v1951 = vpop.f32.mrb[0].mxu0
  %v1952 = vadd.f32 0.0, %v1951
  %v1953 = vpop.f32.mrb[0].mxu0
  %v1954 = vpop.f32.mrb[0].mxu0
  %v1955 = vpop.f32.mrb[0].mxu0
  %1956 = vdwg.mxu0
  %v1957 = vadd.f32 %v313, %v1952
  %v1958 = vxor.u32 %v1957, 2147483648
  %v1959 = vmul.f32 %v1958, 1.442695
  %v1960 = vpow.pop %v1959
  %v1961 = vadd.f32 %v1960, 1.0
  %v1962 = vrcp.pop %v1961
  %v1963 = vmul.f32 1.0, %v1962
  %1964 = vmatprep.subr.bf16.mxu0 0
  %1965 = vmatpush1.bf16.msra.mxu0 %v748
  %1966 = vmatprep.subr.bf16.mxu0 0
  %1967 = vmatpush1.bf16.msra.mxu0 %v749
  %1968 = vmatprep.subr.bf16.mxu0 0
  %1969 = vmatpush1.bf16.msra.mxu0 0
  %1970 = vmatprep.subr.bf16.mxu0 0
  %1971 = vmatpush1.bf16.msra.mxu0 0
  %1972 = vmatprep.subr.bf16.mxu0 0
  %1973 = vmatpush1.bf16.msra.mxu0 0
  %1974 = vmatprep.subr.bf16.mxu0 0
  %1975 = vmatpush1.bf16.msra.mxu0 0
  %1976 = vmatprep.subr.bf16.mxu0 0
  %1977 = vmatpush1.bf16.msra.mxu0 0
  %1978 = vmatprep.subr.bf16.mxu0 0
  %1979 = vmatpush1.bf16.msra.mxu0 0
  %1980 = vmatprep.subr.bf16.mxu0 0
  %1981 = vmatpush1.bf16.msra.mxu0 0
  %1982 = vmatprep.subr.bf16.mxu0 0
  %1983 = vmatpush1.bf16.msra.mxu0 0
  %1984 = vmatprep.subr.bf16.mxu0 0
  %1985 = vmatpush1.bf16.msra.mxu0 0
  %1986 = vmatprep.subr.bf16.mxu0 0
  %1987 = vmatpush1.bf16.msra.mxu0 0
  %1988 = vmatprep.subr.bf16.mxu0 0
  %1989 = vmatpush1.bf16.msra.mxu0 0
  %1990 = vmatprep.subr.bf16.mxu0 0
  %1991 = vmatpush1.bf16.msra.mxu0 0
  %1992 = vmatprep.subr.bf16.mxu0 0
  %1993 = vmatpush1.bf16.msra.mxu0 0
  %1994 = vmatprep.subr.bf16.mxu0 0
  %1995 = vmatpush1.bf16.msra.mxu0 0
  %1996 = vmatprep.mubr.bf16.mxu0 0
  %1997 = vmatmul.mubr.bf16.gmra.mrb[0].mxu0 %v1868
  %v1998 = vpop.f32.mrb[0].mxu0
  %v1999 = vadd.f32 0.0, %v1998
  %v2000 = vpop.f32.mrb[0].mxu0
  %v2001 = vpop.f32.mrb[0].mxu0
  %v2002 = vpop.f32.mrb[0].mxu0
  %2003 = vdwg.mxu0
  %v2004 = vadd.f32 %v451, %v1999
  %v2005 = vtanh.pop %v2004
  %2006 = vmatprep.subr.bf16.mxu0 0
  %2007 = vmatpush1.bf16.msra.mxu0 %v802
  %2008 = vmatprep.subr.bf16.mxu0 0
  %2009 = vmatpush1.bf16.msra.mxu0 %v803
  %2010 = vmatprep.subr.bf16.mxu0 0
  %2011 = vmatpush1.bf16.msra.mxu0 0
  %2012 = vmatprep.subr.bf16.mxu0 0
  %2013 = vmatpush1.bf16.msra.mxu0 0
  %2014 = vmatprep.subr.bf16.mxu0 0
  %2015 = vmatpush1.bf16.msra.mxu0 0
  %2016 = vmatprep.subr.bf16.mxu0 0
  %2017 = vmatpush1.bf16.msra.mxu0 0
  %2018 = vmatprep.subr.bf16.mxu0 0
  %2019 = vmatpush1.bf16.msra.mxu0 0
  %2020 = vmatprep.subr.bf16.mxu0 0
  %2021 = vmatpush1.bf16.msra.mxu0 0
  %2022 = vmatprep.subr.bf16.mxu0 0
  %2023 = vmatpush1.bf16.msra.mxu0 0
  %2024 = vmatprep.subr.bf16.mxu0 0
  %2025 = vmatpush1.bf16.msra.mxu0 0
  %2026 = vmatprep.subr.bf16.mxu0 0
  %2027 = vmatpush1.bf16.msra.mxu0 0
  %2028 = vmatprep.subr.bf16.mxu0 0
  %2029 = vmatpush1.bf16.msra.mxu0 0
  %2030 = vmatprep.subr.bf16.mxu0 0
  %2031 = vmatpush1.bf16.msra.mxu0 0
  %2032 = vmatprep.subr.bf16.mxu0 0
  %2033 = vmatpush1.bf16.msra.mxu0 0
  %2034 = vmatprep.subr.bf16.mxu0 0
  %2035 = vmatpush1.bf16.msra.mxu0 0
  %2036 = vmatprep.subr.bf16.mxu0 0
  %2037 = vmatpush1.bf16.msra.mxu0 0
  %2038 = vmatprep.mubr.bf16.mxu0 0
  %2039 = vmatmul.mubr.bf16.gmra.mrb[0].mxu0 %v1868
  %v2040 = vpop.f32.mrb[0].mxu0
  %v2041 = vadd.f32 0.0, %v2040
  %v2042 = vpop.f32.mrb[0].mxu0
  %v2043 = vpop.f32.mrb[0].mxu0
  %v2044 = vpop.f32.mrb[0].mxu0
  %2045 = vdwg.mxu0
  %v2046 = vadd.f32 %v589, %v2041
  %v2047 = vxor.u32 %v2046, 2147483648
  %v2048 = vmul.f32 %v2047, 1.442695
  %v2049 = vpow.pop %v2048
  %v2050 = vadd.f32 %v2049, 1.0
  %v2051 = vrcp.pop %v2050
  %v2052 = vmul.f32 1.0, %v2051
  %v2053 = vmul.f32 %v1963, %v1865
  %v2054 = vmul.f32 %v1916, %v2005
  %v2055 = vadd.f32 %v2053, %v2054
  %v2056 = vtanh.pop %v2055
  %v2057 = vmul.f32 %v2052, %v2056
  %vm2058 = vcmp.gt.s32.totalorder %v614, 6
  %v2059 = vsel %vm2058, 1, 0
  %2060 = vset.pattern.permute.xlu0 0
  %2061 = vperm.xlu0 %2060, %v2059
  %v2062 = vpop.permute.xlu0 %2061
  %vm2063 = vcmp.eq.s32.totalorder %v2062, 1
  %v2064 = vsel %vm2063, %v2057, %v1864
  %v2065 = vsel %vm2063, %v2055, %v1865
  %v2066 = vpack.c.bf16 %v2064, %v2064
  %v2068 = vsel %vm630, %v2066, 0
  %2070 = vmatprep.subr.bf16.mxu0 0
  %2071 = vmatpush1.bf16.msra.mxu0 %v626
  %2072 = vmatprep.subr.bf16.mxu0 0
  %2073 = vmatpush1.bf16.msra.mxu0 %v627
  %2074 = vmatprep.subr.bf16.mxu0 0
  %2075 = vmatpush1.bf16.msra.mxu0 0
  %2076 = vmatprep.subr.bf16.mxu0 0
  %2077 = vmatpush1.bf16.msra.mxu0 0
  %2078 = vmatprep.subr.bf16.mxu0 0
  %2079 = vmatpush1.bf16.msra.mxu0 0
  %2080 = vmatprep.subr.bf16.mxu0 0
  %2081 = vmatpush1.bf16.msra.mxu0 0
  %2082 = vmatprep.subr.bf16.mxu0 0
  %2083 = vmatpush1.bf16.msra.mxu0 0
  %2084 = vmatprep.subr.bf16.mxu0 0
  %2085 = vmatpush1.bf16.msra.mxu0 0
  %2086 = vmatprep.subr.bf16.mxu0 0
  %2087 = vmatpush1.bf16.msra.mxu0 0
  %2088 = vmatprep.subr.bf16.mxu0 0
  %2089 = vmatpush1.bf16.msra.mxu0 0
  %2090 = vmatprep.subr.bf16.mxu0 0
  %2091 = vmatpush1.bf16.msra.mxu0 0
  %2092 = vmatprep.subr.bf16.mxu0 0
  %2093 = vmatpush1.bf16.msra.mxu0 0
  %2094 = vmatprep.subr.bf16.mxu0 0
  %2095 = vmatpush1.bf16.msra.mxu0 0
  %2096 = vmatprep.subr.bf16.mxu0 0
  %2097 = vmatpush1.bf16.msra.mxu0 0
  %2098 = vmatprep.subr.bf16.mxu0 0
  %2099 = vmatpush1.bf16.msra.mxu0 0
  %2100 = vmatprep.subr.bf16.mxu0 0
  %2101 = vmatpush1.bf16.msra.mxu0 0
  %2102 = vmatprep.mubr.bf16.mxu0 0
  %2103 = vmatmul.mubr.bf16.gmra.mrb[0].mxu0 %v2068
  %v2104 = vpop.f32.mrb[0].mxu0
  %v2105 = vadd.f32 0.0, %v2104
  %v2106 = vpop.f32.mrb[0].mxu0
  %v2107 = vpop.f32.mrb[0].mxu0
  %v2108 = vpop.f32.mrb[0].mxu0
  %2109 = vdwg.mxu0
  %v2110 = vadd.f32 %v178, %v2105
  %v2111 = vxor.u32 %v2110, 2147483648
  %v2112 = vmul.f32 %v2111, 1.442695
  %v2113 = vpow.pop %v2112
  %v2114 = vadd.f32 %v2113, 1.0
  %v2115 = vrcp.pop %v2114
  %v2116 = vmul.f32 1.0, %v2115
  %2117 = vmatprep.subr.bf16.mxu0 0
  %2118 = vmatpush1.bf16.msra.mxu0 %v689
  %2119 = vmatprep.subr.bf16.mxu0 0
  %2120 = vmatpush1.bf16.msra.mxu0 %v690
  %2121 = vmatprep.subr.bf16.mxu0 0
  %2122 = vmatpush1.bf16.msra.mxu0 0
  %2123 = vmatprep.subr.bf16.mxu0 0
  %2124 = vmatpush1.bf16.msra.mxu0 0
  %2125 = vmatprep.subr.bf16.mxu0 0
  %2126 = vmatpush1.bf16.msra.mxu0 0
  %2127 = vmatprep.subr.bf16.mxu0 0
  %2128 = vmatpush1.bf16.msra.mxu0 0
  %2129 = vmatprep.subr.bf16.mxu0 0
  %2130 = vmatpush1.bf16.msra.mxu0 0
  %2131 = vmatprep.subr.bf16.mxu0 0
  %2132 = vmatpush1.bf16.msra.mxu0 0
  %2133 = vmatprep.subr.bf16.mxu0 0
  %2134 = vmatpush1.bf16.msra.mxu0 0
  %2135 = vmatprep.subr.bf16.mxu0 0
  %2136 = vmatpush1.bf16.msra.mxu0 0
  %2137 = vmatprep.subr.bf16.mxu0 0
  %2138 = vmatpush1.bf16.msra.mxu0 0
  %2139 = vmatprep.subr.bf16.mxu0 0
  %2140 = vmatpush1.bf16.msra.mxu0 0
  %2141 = vmatprep.subr.bf16.mxu0 0
  %2142 = vmatpush1.bf16.msra.mxu0 0
  %2143 = vmatprep.subr.bf16.mxu0 0
  %2144 = vmatpush1.bf16.msra.mxu0 0
  %2145 = vmatprep.subr.bf16.mxu0 0
  %2146 = vmatpush1.bf16.msra.mxu0 0
  %2147 = vmatprep.subr.bf16.mxu0 0
  %2148 = vmatpush1.bf16.msra.mxu0 0
  %2149 = vmatprep.mubr.bf16.mxu0 0
  %2150 = vmatmul.mubr.bf16.gmra.mrb[0].mxu0 %v2068
  %v2151 = vpop.f32.mrb[0].mxu0
  %v2152 = vadd.f32 0.0, %v2151
  %v2153 = vpop.f32.mrb[0].mxu0
  %v2154 = vpop.f32.mrb[0].mxu0
  %v2155 = vpop.f32.mrb[0].mxu0
  %2156 = vdwg.mxu0
  %v2157 = vadd.f32 %v316, %v2152
  %v2158 = vxor.u32 %v2157, 2147483648
  %v2159 = vmul.f32 %v2158, 1.442695
  %v2160 = vpow.pop %v2159
  %v2161 = vadd.f32 %v2160, 1.0
  %v2162 = vrcp.pop %v2161
  %v2163 = vmul.f32 1.0, %v2162
  %2164 = vmatprep.subr.bf16.mxu0 0
  %2165 = vmatpush1.bf16.msra.mxu0 %v748
  %2166 = vmatprep.subr.bf16.mxu0 0
  %2167 = vmatpush1.bf16.msra.mxu0 %v749
  %2168 = vmatprep.subr.bf16.mxu0 0
  %2169 = vmatpush1.bf16.msra.mxu0 0
  %2170 = vmatprep.subr.bf16.mxu0 0
  %2171 = vmatpush1.bf16.msra.mxu0 0
  %2172 = vmatprep.subr.bf16.mxu0 0
  %2173 = vmatpush1.bf16.msra.mxu0 0
  %2174 = vmatprep.subr.bf16.mxu0 0
  %2175 = vmatpush1.bf16.msra.mxu0 0
  %2176 = vmatprep.subr.bf16.mxu0 0
  %2177 = vmatpush1.bf16.msra.mxu0 0
  %2178 = vmatprep.subr.bf16.mxu0 0
  %2179 = vmatpush1.bf16.msra.mxu0 0
  %2180 = vmatprep.subr.bf16.mxu0 0
  %2181 = vmatpush1.bf16.msra.mxu0 0
  %2182 = vmatprep.subr.bf16.mxu0 0
  %2183 = vmatpush1.bf16.msra.mxu0 0
  %2184 = vmatprep.subr.bf16.mxu0 0
  %2185 = vmatpush1.bf16.msra.mxu0 0
  %2186 = vmatprep.subr.bf16.mxu0 0
  %2187 = vmatpush1.bf16.msra.mxu0 0
  %2188 = vmatprep.subr.bf16.mxu0 0
  %2189 = vmatpush1.bf16.msra.mxu0 0
  %2190 = vmatprep.subr.bf16.mxu0 0
  %2191 = vmatpush1.bf16.msra.mxu0 0
  %2192 = vmatprep.subr.bf16.mxu0 0
  %2193 = vmatpush1.bf16.msra.mxu0 0
  %2194 = vmatprep.subr.bf16.mxu0 0
  %2195 = vmatpush1.bf16.msra.mxu0 0
  %2196 = vmatprep.mubr.bf16.mxu0 0
  %2197 = vmatmul.mubr.bf16.gmra.mrb[0].mxu0 %v2068
  %v2198 = vpop.f32.mrb[0].mxu0
  %v2199 = vadd.f32 0.0, %v2198
  %v2200 = vpop.f32.mrb[0].mxu0
  %v2201 = vpop.f32.mrb[0].mxu0
  %v2202 = vpop.f32.mrb[0].mxu0
  %2203 = vdwg.mxu0
  %v2204 = vadd.f32 %v454, %v2199
  %v2205 = vtanh.pop %v2204
  %2206 = vmatprep.subr.bf16.mxu0 0
  %2207 = vmatpush1.bf16.msra.mxu0 %v802
  %2208 = vmatprep.subr.bf16.mxu0 0
  %2209 = vmatpush1.bf16.msra.mxu0 %v803
  %2210 = vmatprep.subr.bf16.mxu0 0
  %2211 = vmatpush1.bf16.msra.mxu0 0
  %2212 = vmatprep.subr.bf16.mxu0 0
  %2213 = vmatpush1.bf16.msra.mxu0 0
  %2214 = vmatprep.subr.bf16.mxu0 0
  %2215 = vmatpush1.bf16.msra.mxu0 0
  %2216 = vmatprep.subr.bf16.mxu0 0
  %2217 = vmatpush1.bf16.msra.mxu0 0
  %2218 = vmatprep.subr.bf16.mxu0 0
  %2219 = vmatpush1.bf16.msra.mxu0 0
  %2220 = vmatprep.subr.bf16.mxu0 0
  %2221 = vmatpush1.bf16.msra.mxu0 0
  %2222 = vmatprep.subr.bf16.mxu0 0
  %2223 = vmatpush1.bf16.msra.mxu0 0
  %2224 = vmatprep.subr.bf16.mxu0 0
  %2225 = vmatpush1.bf16.msra.mxu0 0
  %2226 = vmatprep.subr.bf16.mxu0 0
  %2227 = vmatpush1.bf16.msra.mxu0 0
  %2228 = vmatprep.subr.bf16.mxu0 0
  %2229 = vmatpush1.bf16.msra.mxu0 0
  %2230 = vmatprep.subr.bf16.mxu0 0
  %2231 = vmatpush1.bf16.msra.mxu0 0
  %2232 = vmatprep.subr.bf16.mxu0 0
  %2233 = vmatpush1.bf16.msra.mxu0 0
  %2234 = vmatprep.subr.bf16.mxu0 0
  %2235 = vmatpush1.bf16.msra.mxu0 0
  %2236 = vmatprep.subr.bf16.mxu0 0
  %2237 = vmatpush1.bf16.msra.mxu0 0
  %2238 = vmatprep.mubr.bf16.mxu0 0
  %2239 = vmatmul.mubr.bf16.gmra.mrb[0].mxu0 %v2068
  %v2240 = vpop.f32.mrb[0].mxu0
  %v2241 = vadd.f32 0.0, %v2240
  %v2242 = vpop.f32.mrb[0].mxu0
  %v2243 = vpop.f32.mrb[0].mxu0
  %v2244 = vpop.f32.mrb[0].mxu0
  %2245 = vdwg.mxu0
  %v2246 = vadd.f32 %v592, %v2241
  %v2247 = vxor.u32 %v2246, 2147483648
  %v2248 = vmul.f32 %v2247, 1.442695
  %v2249 = vpow.pop %v2248
  %v2250 = vadd.f32 %v2249, 1.0
  %v2251 = vrcp.pop %v2250
  %v2252 = vmul.f32 1.0, %v2251
  %v2253 = vmul.f32 %v2163, %v2065
  %v2254 = vmul.f32 %v2116, %v2205
  %v2255 = vadd.f32 %v2253, %v2254
  %v2256 = vtanh.pop %v2255
  %v2257 = vmul.f32 %v2252, %v2256
  %vm2258 = vcmp.gt.s32.totalorder %v614, 7
  %v2259 = vsel %vm2258, 1, 0
  %2260 = vset.pattern.permute.xlu0 0
  %2261 = vperm.xlu0 %2260, %v2259
  %v2262 = vpop.permute.xlu0 %2261
  %vm2263 = vcmp.eq.s32.totalorder %v2262, 1
  %v2264 = vsel %vm2263, %v2257, %v2064
  %v2265 = vpack.c.bf16 %v2264, %v2264
  %v2266 = vld [vmem:[%s7] sm:$0xf]
  %v2267 = vld [vmem:[%s7 + $0x4] sm:$0xf]
  %v2268 = vld [vmem:[%s7 + $0x8] sm:$0xf]
  %v2269 = vld [vmem:[%s7 + $0xc] sm:$0xf]
  %v2270 = vld [vmem:[%s8] sm:$0x1]
  %v2272 = vlaneseq
  %v2273 = vshrl.u32 %v2272, 7
  %v2274 = vsub.s32 0, %v2273
  %v2275 = vrot.slane %v2270, %v2274
  %v2281 = vunpack.c.l.b16 %v2266
  %v2282 = vunpack.c.l.b16 %v2267
  %v2283 = vunpack.c.l.b16 %v2268
  %v2284 = vunpack.c.l.b16 %v2269
  %v2285 = vpack.c.b16 %v2282, %v2281
  %v2286 = vpack.c.b16 %v2284, %v2283
  %v2290 = vsel %vm630, %v2265, 0
  %2292 = vmatprep.subr.bf16.mxu0 0
  %2293 = vmatpush1.bf16.msra.mxu0 %v2285
  %2294 = vmatprep.subr.bf16.mxu0 0
  %2295 = vmatpush1.bf16.msra.mxu0 %v2286
  %2296 = vmatprep.subr.bf16.mxu0 0
  %2297 = vmatpush1.bf16.msra.mxu0 0
  %2298 = vmatprep.subr.bf16.mxu0 0
  %2299 = vmatpush1.bf16.msra.mxu0 0
  %2300 = vmatprep.subr.bf16.mxu0 0
  %2301 = vmatpush1.bf16.msra.mxu0 0
  %2302 = vmatprep.subr.bf16.mxu0 0
  %2303 = vmatpush1.bf16.msra.mxu0 0
  %2304 = vmatprep.subr.bf16.mxu0 0
  %2305 = vmatpush1.bf16.msra.mxu0 0
  %2306 = vmatprep.subr.bf16.mxu0 0
  %2307 = vmatpush1.bf16.msra.mxu0 0
  %2308 = vmatprep.subr.bf16.mxu0 0
  %2309 = vmatpush1.bf16.msra.mxu0 0
  %2310 = vmatprep.subr.bf16.mxu0 0
  %2311 = vmatpush1.bf16.msra.mxu0 0
  %2312 = vmatprep.subr.bf16.mxu0 0
  %2313 = vmatpush1.bf16.msra.mxu0 0
  %2314 = vmatprep.subr.bf16.mxu0 0
  %2315 = vmatpush1.bf16.msra.mxu0 0
  %2316 = vmatprep.subr.bf16.mxu0 0
  %2317 = vmatpush1.bf16.msra.mxu0 0
  %2318 = vmatprep.subr.bf16.mxu0 0
  %2319 = vmatpush1.bf16.msra.mxu0 0
  %2320 = vmatprep.subr.bf16.mxu0 0
  %2321 = vmatpush1.bf16.msra.mxu0 0
  %2322 = vmatprep.subr.bf16.mxu0 0
  %2323 = vmatpush1.bf16.msra.mxu0 0
  %2324 = vmatprep.mubr.bf16.mxu0 0
  %2325 = vmatmul.mubr.bf16.gmra.mrb[0].mxu0 %v2290
  %v2326 = vpop.f32.mrb[0].mxu0
  %v2327 = vadd.f32 %v2275, %v2326
  %v2328 = vpop.f32.mrb[0].mxu0
  %v2329 = vpop.f32.mrb[0].mxu0
  %v2330 = vpop.f32.mrb[0].mxu0
  %2331 = vdwg.mxu0
  %2332 = vmax.xlane.f32.xlu0 %v2327
  %v2333 = vpop.xlane.xlu0 %2332
  %v2334 = vsub.f32 %v2327, %v2333
  %v2335 = vmul.f32 %v2334, 1.442695
  %v2336 = vpow.pop %v2335
  %2337 = vadd.xlane.f32.xlu0 %v2336
  %v2338 = vpop.xlane.xlu0 %2337
  %v2339 = vlog2.pop %v2338
  %v2340 = vmul.f32 %v2339, 0.6931472
  %v2341 = vadd.f32 %v2333, %v2340
  %v2342 = vsub.f32 %v2327, %v2341
  %2343 = vst [vmem:[%s9] sm:$0xff] %v2342
  // Predicated region
  $region38: #{basic_lstm_forward.1} parent=0 // pred_check
    _
  $region39: #{basic_lstm_forward.1} parent=0 // pred_check_branch
    %2345 = sbr.rel (0) target = $region41
  $region40: #{basic_lstm_forward.1} parent=0 // pred_region
    _
  $region41: #{basic_lstm_forward.1} parent=0 // pred_fallthru
    _
  // Predicated region
  $region42: #{basic_lstm_forward.1} parent=0 // pred_check
    _
  $region43: #{basic_lstm_forward.1} parent=0 // pred_check_branch
    %2347 = sbr.rel (0) target = $region45
  $region44: #{basic_lstm_forward.1} parent=0 // pred_region
    _
  $region45: #{basic_lstm_forward.1} parent=0 // pred_fallthru
    _

</llo_original>
